<compile_context>
chip_gen: v5e
topology: v5e:2x2
jax: 0.10.0
libtpu: 0.0.40
codegen_flags: <defaults>
</compile_context>

<pallas_src>
import math
import functools

import jax
import jax.numpy as jnp
import numpy as np
from jax.experimental import pallas as pl
from jax.experimental.pallas import tpu as pltpu


# Set True on v6e/v7x to feed the MXU bf16 operands (f32 accumulation).  Left
# False here so the f32 reference check at rtol=1e-4 stays tight.
USE_BF16_MATMUL = False


# ----------------------------------------------------------------------------
# small helpers for tile-size selection
# ----------------------------------------------------------------------------
def _pick_tile(dim, preferred):
    """Largest preferred tile that divides `dim`; else the full dim (always legal)."""
    for t in preferred:
        if t <= dim and dim % t == 0:
            return t
    return dim


def _pick_divisor(n, cap):
    """Largest power-of-two <= cap that divides n (>=1)."""
    for t in (512, 256, 128, 64, 32, 16, 8, 4, 2, 1):
        if t <= cap and t <= n and n % t == 0:
            return t
    return 1


# ----------------------------------------------------------------------------
# Kernel 1: hoisted, tiled MXU matmul   U[g] = X2d @ W[g]
#   X2d: (M, K) = (L*B, n_in)     W: (k, n_in, n_out)     U: (k, M, n_out)
# ----------------------------------------------------------------------------
def _u_matmul_kernel(x_ref, w_ref, u_ref, acc_ref):
    @pl.when(pl.program_id(3) == 0)
    def _():
        acc_ref[...] = jnp.zeros_like(acc_ref)

    acc_ref[...] += jnp.dot(x_ref[...], w_ref[0],
                            preferred_element_type=jnp.float32)

    @pl.when(pl.program_id(3) == pl.num_programs(3) - 1)
    def _():
        u_ref[0] = acc_ref[...].astype(u_ref.dtype)


def _u_matmul(x2d, weight):
    M, K = x2d.shape
    G, _, N = weight.shape

    if USE_BF16_MATMUL:
        x2d = x2d.astype(jnp.bfloat16)
        weight = weight.astype(jnp.bfloat16)

    tm = _pick_tile(M, (256, 128))
    tn = _pick_tile(N, (512, 256, 128))
    tk = _pick_tile(K, (512, 256, 128))

    return pl.pallas_call(
        _u_matmul_kernel,
        out_shape=jax.ShapeDtypeStruct((G, M, N), jnp.float32),
        grid_spec=pltpu.PrefetchScalarGridSpec(
            num_scalar_prefetch=0,
            grid=(G, M // tm, N // tn, K // tk),
            in_specs=[
                pl.BlockSpec((tm, tk), lambda g, i, j, kk: (i, kk)),
                pl.BlockSpec((1, tk, tn), lambda g, i, j, kk: (g, kk, j)),
            ],
            out_specs=pl.BlockSpec((1, tm, tn), lambda g, i, j, kk: (g, i, j)),
            scratch_shapes=[pltpu.VMEM((tm, tn), jnp.float32)],
        ),
        compiler_params=pltpu.CompilerParams(
            dimension_semantics=("parallel", "parallel", "parallel", "arbitrary")),
    )(x2d, weight)


# ----------------------------------------------------------------------------
# Kernel 2: streaming elementwise SRU recurrence.
#   grid = (n_out // TN_H  ["parallel"],  L // T_BLOCK  ["arbitrary"])
#   U: (k, L, B, n_out), gates on the leading axis -> static, free gate views.
#   c output block has a constant time index => VMEM-resident carried state.
# ----------------------------------------------------------------------------
def _sru_recurrence_kernel(u_ref, wc_ref, b_ref, c0_ref, *rest,
                           k, scale_x, t_block, unroll):
    if k == 3:
        x_ref, h_ref, c_ref = rest            # skip term = x * scale_x
    else:
        x_ref = None                          # skip term = U gate 3
        h_ref, c_ref = rest

    t_blk = pl.program_id(1)

    @pl.when(t_blk == 0)
    def _():
        c_ref[...] = c0_ref[...]

    # hoisted (1, TN_H) parameter rows; broadcast against (B, TN_H)
    fw = wc_ref[0:1, :]
    rw = wc_ref[1:2, :]
    fb = b_ref[0:1, :]
    rb = b_ref[1:2, :]

    def step(t, c_prev):
        u0 = u_ref[0, t]                      # (B, TN_H)
        u1 = u_ref[1, t]
        u2 = u_ref[2, t]
        f_t = jax.nn.sigmoid(u1 + c_prev * fw + fb)
        r_t = jax.nn.sigmoid(u2 + c_prev * rw + rb)
        c_t = u0 + (c_prev - u0) * f_t
        # activation_type == 0 -> g(c_t) = c_t
        if k == 4:
            xp = u_ref[3, t]
        else:
            xp = x_ref[t] * scale_x
        h_ref[t] = ((c_t - xp) * r_t + xp).astype(h_ref.dtype)
        return c_t

    c_ref[...] = jax.lax.fori_loop(0, t_block, step, c_ref[...], unroll=unroll)


def _sru_recurrence(u, x, weight_c, bias, c0, *, n_out, k, scale_x):
    _, L, B, _ = u.shape

    # hidden-dim tiling: lane-dense (multiple of 128) when n_out allows; also
    # provides a "parallel" axis for megacore (v7x: 2 TensorCores).
    tn_h = _pick_tile(n_out, (512, 256, 128))

    # time blocking: amortize per-grid-step overhead, keep the streamed U block
    # comfortably inside the double-buffered VMEM budget.
    budget_bytes = 4 * 1024 * 1024
    t_cap = max(1, budget_bytes // max(1, k * B * tn_h * 4))
    t_block = _pick_divisor(L, min(256, t_cap))
    unroll = min(t_block, 8)                  # t_block is a power of two

    in_specs = [
        pl.BlockSpec((k, t_block, B, tn_h), lambda h, t: (0, t, 0, h)),   # U gates
        pl.BlockSpec((2, tn_h), lambda h, t: (0, h)),                     # weight_c
        pl.BlockSpec((2, tn_h), lambda h, t: (0, h)),                     # bias
        pl.BlockSpec((B, tn_h), lambda h, t: (0, h)),                     # c0
    ]
    args = [u, weight_c, bias, c0]
    if k == 3:                                # need x for the identity skip term
        in_specs.append(pl.BlockSpec((t_block, B, tn_h), lambda h, t: (t, 0, h)))
        args.append(x)

    kernel = functools.partial(_sru_recurrence_kernel, k=k, scale_x=scale_x,
                               t_block=t_block, unroll=unroll)

    h, c = pl.pallas_call(
        kernel,
        out_shape=(jax.ShapeDtypeStruct((L, B, n_out), jnp.float32),
                   jax.ShapeDtypeStruct((B, n_out), jnp.float32)),
        grid_spec=pltpu.PrefetchScalarGridSpec(
            num_scalar_prefetch=0,
            grid=(n_out // tn_h, L // t_block),
            in_specs=in_specs,
            out_specs=[
                pl.BlockSpec((t_block, B, tn_h), lambda h, t: (t, 0, h)),  # h
                pl.BlockSpec((B, tn_h), lambda h, t: (0, h)),              # c (carried)
            ],
        ),
        compiler_params=pltpu.CompilerParams(
            dimension_semantics=("parallel", "arbitrary")),
    )(*args)
    return h, c


# ----------------------------------------------------------------------------
# One SRU cell (one layer)
# ----------------------------------------------------------------------------
def sru_cell_forward(x, weight, weight_c, bias, c0, *, n_out, k, scale_x):
    L, B, n_in = x.shape
    x2d = x.reshape(L * B, n_in)
    u = _u_matmul(x2d, weight)                # (k, L*B, n_out), gates separated
    u = u.reshape(k, L, B, n_out)             # free (contiguous) reshape
    return _sru_recurrence(u, x, weight_c, bias, c0,
                           n_out=n_out, k=k, scale_x=scale_x)


# ----------------------------------------------------------------------------
# Parameter init (deterministic; mirrors SRUCell.reset_parameters shapes/scales).
# Weight generated as (n_in, k, n_out) and stored gate-major as (k, n_in, n_out).
# ----------------------------------------------------------------------------
def init_sru_params(key, input_size, hidden_size, num_layers,
                    highway_bias=0.0, rescale=True):
    params = []
    scale_val = math.sqrt(1.0 + math.exp(highway_bias) * 2.0) if rescale else 1.0
    n_in = input_size
    for _ in range(num_layers):
        n_out = hidden_size
        k = 4 if n_in != n_out else 3                       # has_skip_term=True
        key, k1, k2 = jax.random.split(key, 3)
        val_range = math.sqrt(3.0 / n_in)
        w = jax.random.uniform(k1, (n_in, k, n_out), jnp.float32,
                               minval=-val_range, maxval=val_range)
        w = w.at[:, 1, :].multiply(math.sqrt(0.5))          # forget-gate columns
        w = w.at[:, 2, :].multiply(math.sqrt(0.5))          # reset-gate columns
        if k == 4 and rescale:
            w = w.at[:, 3, :].multiply(scale_val)           # skip-term columns
        w = jnp.transpose(w, (1, 0, 2))                     # -> (k, n_in, n_out)

        wc = jax.random.uniform(k2, (2, n_out), jnp.float32,
                                minval=-math.sqrt(3.0),
                                maxval=math.sqrt(3.0)) * math.sqrt(0.5)
        b = jnp.zeros((2, n_out), jnp.float32)
        b = b.at[1, :].set(highway_bias)

        params.append(dict(weight=w, weight_c=wc, bias=b,
                           k=k, n_in=n_in, n_out=n_out, scale_x=scale_val))
        n_in = n_out
    return params


def sru_forward(params, x, c0=None):
    """Full SRU stack. x: (L, B, input_size) -> (h: (L,B,n_out), c: (depth,B,n_out))."""
    L, B, _ = x.shape
    prevx = x
    lstc = []
    for i, p in enumerate(params):
        c0_i = (c0[i] if c0 is not None
                else jnp.zeros((B, p["n_out"]), jnp.float32))
        h, c = sru_cell_forward(prevx, p["weight"], p["weight_c"], p["bias"], c0_i,
                                n_out=p["n_out"], k=p["k"], scale_x=p["scale_x"])
        prevx = h
        lstc.append(c)
    return prevx, jnp.stack(lstc)


# ----------------------------------------------------------------------------
# Pure-JAX reference (mirrors SRU_Compute_CPU) for correctness checking.
# ----------------------------------------------------------------------------
def _sru_cell_ref(x, weight, weight_c, bias, c0, n_out, k, scale_x):
    u = jnp.einsum("lbi,gio->lgbo", x, weight)              # (L, k, B, n_out)
    fw, rw = weight_c[0], weight_c[1]
    fb, rb = bias[0], bias[1]

    def step(c_prev, inp):
        u_t, x_t = inp
        f = jax.nn.sigmoid(u_t[1] + c_prev * fw + fb)
        r = jax.nn.sigmoid(u_t[2] + c_prev * rw + rb)
        c_t = u_t[0] + (c_prev - u_t[0]) * f
        xp = u_t[3] if k == 4 else x_t * scale_x
        h_t = (c_t - xp) * r + xp
        return c_t, h_t

    c_last, h = jax.lax.scan(step, c0, (u, x))
    return h, c_last


def sru_forward_ref(params, x):
    L, B, _ = x.shape
    prevx = x
    lstc = []
    for p in params:
        c0 = jnp.zeros((B, p["n_out"]), jnp.float32)
        h, c = _sru_cell_ref(prevx, p["weight"], p["weight_c"], p["bias"], c0,
                             p["n_out"], p["k"], p["scale_x"])
        prevx = h
        lstc.append(c)
    return prevx, jnp.stack(lstc)


# ----------------------------------------------------------------------------
if __name__ == "__main__":
    L, B = 8, 2
    input_size, hidden_size, num_layers = 16, 32, 2

    key = jax.random.PRNGKey(0)
    key, kx = jax.random.split(key)
    x = jax.random.normal(kx, (L, B, input_size), dtype=jnp.float32)

    params = init_sru_params(key, input_size, hidden_size, num_layers)

    fwd = jax.jit(lambda xx: sru_forward(params, xx))
    h, c = fwd(x)
    h = jax.block_until_ready(h)
    c = jax.block_until_ready(c)

    h_ref, c_ref = sru_forward_ref(params, x)
    np.testing.assert_allclose(np.asarray(h), np.asarray(h_ref), rtol=1e-4, atol=1e-4)
    np.testing.assert_allclose(np.asarray(c), np.asarray(c_ref), rtol=1e-4, atol=1e-4)

    assert h.shape == (L, B, hidden_size)
    assert c.shape == (num_layers, B, hidden_size)
    print("KERNEL_OK")
</pallas_src>

<mosaic_0001>
module attributes {stable_mosaic.version = 11 : i64} {
  func.func @_u_matmul_kernel(%arg0: i32, %arg1: i32, %arg2: i32, %arg3: i32, %arg4: memref<16x16xf32, #tpu.memory_space<vmem>>, %arg5: memref<1x16x32xf32, #tpu.memory_space<vmem>>, %arg6: memref<1x16x32xf32, #tpu.memory_space<vmem>>, %arg7: memref<16x32xf32, #tpu.memory_space<vmem>>) attributes {dimension_semantics = [#tpu.dimension_semantics<parallel>, #tpu.dimension_semantics<parallel>, #tpu.dimension_semantics<parallel>, #tpu.dimension_semantics<arbitrary>], iteration_bounds = array<i64: 4, 1, 1, 1>, scalar_prefetch = 0 : i64, scratch_operands = 1 : i64, tpu.core_type = #tpu.core_type<tc>, window_params = [{transform_indices = @transform_0, window_bounds = array<i64: 16, 16>}, {transform_indices = @transform_1, window_bounds = array<i64: 1, 16, 32>}, {transform_indices = @transform_2, window_bounds = array<i64: 1, 16, 32>}]} {
    %c0_i32 = arith.constant 0 : i32
    %0 = arith.cmpi eq, %arg3, %c0_i32 : i32
    %1 = arith.extui %0 : i1 to i32
    %c0_i32_0 = arith.constant 0 : i32
    %2 = arith.cmpi ne, %1, %c0_i32_0 : i32
    scf.if %2 {
      %cst_11 = arith.constant 0.000000e+00 : f32
      %13 = vector.broadcast %cst_11 : f32 to vector<16x32xf32>
      %c0_12 = arith.constant 0 : index
      %c0_13 = arith.constant 0 : index
      %14 = vector.load %arg7[%c0_12, %c0_13] : memref<16x32xf32, #tpu.memory_space<vmem>>, vector<16x32xf32>
      tpu.vector_store %arg7[%c0_12, %c0_13], %13 {strides = array<i32>} : memref<16x32xf32, #tpu.memory_space<vmem>>, vector<16x32xf32>,
    } else {
    }
    %c0 = arith.constant 0 : index
    %c0_1 = arith.constant 0 : index
    %3 = vector.load %arg7[%c0, %c0_1] : memref<16x32xf32, #tpu.memory_space<vmem>>, vector<16x32xf32>
    %c0_2 = arith.constant 0 : index
    %c0_3 = arith.constant 0 : index
    %4 = vector.load %arg4[%c0_2, %c0_3] : memref<16x16xf32, #tpu.memory_space<vmem>>, vector<16x16xf32>
    %c0_4 = arith.constant 0 : index
    %c0_5 = arith.constant 0 : index
    %c0_6 = arith.constant 0 : index
    %5 = vector.load %arg5[%c0_4, %c0_5, %c0_6] : memref<1x16x32xf32, #tpu.memory_space<vmem>>, vector<1x16x32xf32>
    %6 = vector.shape_cast %5 : vector<1x16x32xf32> to vector<16x32xf32>
    %cst = arith.constant dense<0.000000e+00> : vector<16x32xf32>
    %7 = tpu.matmul %4, %6, %cst {dimension_numbers = #tpu.dot_dimension_numbers<[1], [0], [0], [1], [0, 0, 1, 1], [], []>} : vector<16x16xf32>, vector<16x32xf32>, vector<16x32xf32> -> vector<16x32xf32>
    %8 = arith.addf %3, %7 : vector<16x32xf32>
    %c0_7 = arith.constant 0 : index
    %c0_8 = arith.constant 0 : index
    %9 = vector.load %arg7[%c0_7, %c0_8] : memref<16x32xf32, #tpu.memory_space<vmem>>, vector<16x32xf32>
    tpu.vector_store %arg7[%c0_7, %c0_8], %8 {strides = array<i32>} : memref<16x32xf32, #tpu.memory_space<vmem>>, vector<16x32xf32>,
    %c0_i32_9 = arith.constant 0 : i32
    %10 = arith.cmpi eq, %arg3, %c0_i32_9 : i32
    %11 = arith.extui %10 : i1 to i32
    %c0_i32_10 = arith.constant 0 : i32
    %12 = arith.cmpi ne, %11, %c0_i32_10 : i32
    scf.if %12 {
      %c0_11 = arith.constant 0 : index
      %c0_12 = arith.constant 0 : index
      %13 = vector.load %arg7[%c0_11, %c0_12] : memref<16x32xf32, #tpu.memory_space<vmem>>, vector<16x32xf32>
      %c0_13 = arith.constant 0 : index
      %c0_14 = arith.constant 0 : index
      %c0_15 = arith.constant 0 : index
      %14 = vector.load %arg6[%c0_13, %c0_14, %c0_15] : memref<1x16x32xf32, #tpu.memory_space<vmem>>, vector<1x16x32xf32>
      %15 = vector.shape_cast %14 : vector<1x16x32xf32> to vector<16x32xf32>
      %16 = vector.shape_cast %13 : vector<16x32xf32> to vector<1x16x32xf32>
      tpu.vector_store %arg6[%c0_13, %c0_14, %c0_15], %16 {strides = array<i32>} : memref<1x16x32xf32, #tpu.memory_space<vmem>>, vector<1x16x32xf32>,
    } else {
    }
    return
  }
  func.func @transform_0(%arg0: i32, %arg1: i32, %arg2: i32, %arg3: i32) -> (i32, i32) {
    %c0_i32 = arith.constant 0 : i32
    return %arg1, %arg3 : i32, i32
  }
  func.func @transform_1(%arg0: i32, %arg1: i32, %arg2: i32, %arg3: i32) -> (i32, i32, i32) {
    %c0_i32 = arith.constant 0 : i32
    return %arg0, %arg3, %arg2 : i32, i32, i32
  }
  func.func @transform_2(%arg0: i32, %arg1: i32, %arg2: i32, %arg3: i32) -> (i32, i32, i32) {
    %c0_i32 = arith.constant 0 : i32
    return %arg0, %arg1, %arg2 : i32, i32, i32
  }
}

module attributes {stable_mosaic.version = 11 : i64} {
  func.func @_u_matmul_kernel(%arg0: i32, %arg1: i32, %arg2: i32, %arg3: i32, %arg4: memref<16x32xf32, #tpu.memory_space<vmem>>, %arg5: memref<1x32x32xf32, #tpu.memory_space<vmem>>, %arg6: memref<1x16x32xf32, #tpu.memory_space<vmem>>, %arg7: memref<16x32xf32, #tpu.memory_space<vmem>>) attributes {dimension_semantics = [#tpu.dimension_semantics<parallel>, #tpu.dimension_semantics<parallel>, #tpu.dimension_semantics<parallel>, #tpu.dimension_semantics<arbitrary>], iteration_bounds = array<i64: 3, 1, 1, 1>, scalar_prefetch = 0 : i64, scratch_operands = 1 : i64, tpu.core_type = #tpu.core_type<tc>, window_params = [{transform_indices = @transform_0, window_bounds = array<i64: 16, 32>}, {transform_indices = @transform_1, window_bounds = array<i64: 1, 32, 32>}, {transform_indices = @transform_2, window_bounds = array<i64: 1, 16, 32>}]} {
    %c0_i32 = arith.constant 0 : i32
    %0 = arith.cmpi eq, %arg3, %c0_i32 : i32
    %1 = arith.extui %0 : i1 to i32
    %c0_i32_0 = arith.constant 0 : i32
    %2 = arith.cmpi ne, %1, %c0_i32_0 : i32
    scf.if %2 {
      %cst_11 = arith.constant 0.000000e+00 : f32
      %13 = vector.broadcast %cst_11 : f32 to vector<16x32xf32>
      %c0_12 = arith.constant 0 : index
      %c0_13 = arith.constant 0 : index
      %14 = vector.load %arg7[%c0_12, %c0_13] : memref<16x32xf32, #tpu.memory_space<vmem>>, vector<16x32xf32>
      tpu.vector_store %arg7[%c0_12, %c0_13], %13 {strides = array<i32>} : memref<16x32xf32, #tpu.memory_space<vmem>>, vector<16x32xf32>,
    } else {
    }
    %c0 = arith.constant 0 : index
    %c0_1 = arith.constant 0 : index
    %3 = vector.load %arg7[%c0, %c0_1] : memref<16x32xf32, #tpu.memory_space<vmem>>, vector<16x32xf32>
    %c0_2 = arith.constant 0 : index
    %c0_3 = arith.constant 0 : index
    %4 = vector.load %arg4[%c0_2, %c0_3] : memref<16x32xf32, #tpu.memory_space<vmem>>, vector<16x32xf32>
    %c0_4 = arith.constant 0 : index
    %c0_5 = arith.constant 0 : index
    %c0_6 = arith.constant 0 : index
    %5 = vector.load %arg5[%c0_4, %c0_5, %c0_6] : memref<1x32x32xf32, #tpu.memory_space<vmem>>, vector<1x32x32xf32>
    %6 = vector.shape_cast %5 : vector<1x32x32xf32> to vector<32x32xf32>
    %cst = arith.constant dense<0.000000e+00> : vector<16x32xf32>
    %7 = tpu.matmul %4, %6, %cst {dimension_numbers = #tpu.dot_dimension_numbers<[1], [0], [0], [1], [0, 0, 1, 1], [], []>} : vector<16x32xf32>, vector<32x32xf32>, vector<16x32xf32> -> vector<16x32xf32>
    %8 = arith.addf %3, %7 : vector<16x32xf32>
    %c0_7 = arith.constant 0 : index
    %c0_8 = arith.constant 0 : index
    %9 = vector.load %arg7[%c0_7, %c0_8] : memref<16x32xf32, #tpu.memory_space<vmem>>, vector<16x32xf32>
    tpu.vector_store %arg7[%c0_7, %c0_8], %8 {strides = array<i32>} : memref<16x32xf32, #tpu.memory_space<vmem>>, vector<16x32xf32>,
    %c0_i32_9 = arith.constant 0 : i32
    %10 = arith.cmpi eq, %arg3, %c0_i32_9 : i32
    %11 = arith.extui %10 : i1 to i32
    %c0_i32_10 = arith.constant 0 : i32
    %12 = arith.cmpi ne, %11, %c0_i32_10 : i32
    scf.if %12 {
      %c0_11 = arith.constant 0 : index
      %c0_12 = arith.constant 0 : index
      %13 = vector.load %arg7[%c0_11, %c0_12] : memref<16x32xf32, #tpu.memory_space<vmem>>, vector<16x32xf32>
      %c0_13 = arith.constant 0 : index
      %c0_14 = arith.constant 0 : index
      %c0_15 = arith.constant 0 : index
      %14 = vector.load %arg6[%c0_13, %c0_14, %c0_15] : memref<1x16x32xf32, #tpu.memory_space<vmem>>, vector<1x16x32xf32>
      %15 = vector.shape_cast %14 : vector<1x16x32xf32> to vector<16x32xf32>
      %16 = vector.shape_cast %13 : vector<16x32xf32> to vector<1x16x32xf32>
      tpu.vector_store %arg6[%c0_13, %c0_14, %c0_15], %16 {strides = array<i32>} : memref<1x16x32xf32, #tpu.memory_space<vmem>>, vector<1x16x32xf32>,
    } else {
    }
    return
  }
  func.func @transform_0(%arg0: i32, %arg1: i32, %arg2: i32, %arg3: i32) -> (i32, i32) {
    %c0_i32 = arith.constant 0 : i32
    return %arg1, %arg3 : i32, i32
  }
  func.func @transform_1(%arg0: i32, %arg1: i32, %arg2: i32, %arg3: i32) -> (i32, i32, i32) {
    %c0_i32 = arith.constant 0 : i32
    return %arg0, %arg3, %arg2 : i32, i32, i32
  }
  func.func @transform_2(%arg0: i32, %arg1: i32, %arg2: i32, %arg3: i32) -> (i32, i32, i32) {
    %c0_i32 = arith.constant 0 : i32
    return %arg0, %arg1, %arg2 : i32, i32, i32
  }
}

module attributes {stable_mosaic.version = 11 : i64} {
  func.func @_sru_recurrence_kernel(%arg0: i32, %arg1: i32, %arg2: memref<4x8x2x32xf32, #tpu.memory_space<vmem>>, %arg3: memref<2x32xf32, #tpu.memory_space<vmem>>, %arg4: memref<2x32xf32, #tpu.memory_space<vmem>>, %arg5: memref<2x32xf32, #tpu.memory_space<vmem>>, %arg6: memref<8x2x32xf32, #tpu.memory_space<vmem>>, %arg7: memref<2x32xf32, #tpu.memory_space<vmem>>) attributes {dimension_semantics = [#tpu.dimension_semantics<parallel>, #tpu.dimension_semantics<arbitrary>], iteration_bounds = array<i64: 1, 1>, scalar_prefetch = 0 : i64, scratch_operands = 0 : i64, tpu.core_type = #tpu.core_type<tc>, window_params = [{transform_indices = @transform_0, window_bounds = array<i64: 4, 8, 2, 32>}, {transform_indices = @transform_1, window_bounds = array<i64: 2, 32>}, {transform_indices = @transform_2, window_bounds = array<i64: 2, 32>}, {transform_indices = @transform_3, window_bounds = array<i64: 2, 32>}, {transform_indices = @transform_4, window_bounds = array<i64: 8, 2, 32>}, {transform_indices = @transform_5, window_bounds = array<i64: 2, 32>}]} {
    %c0_i32 = arith.constant 0 : i32
    %0 = arith.cmpi eq, %arg1, %c0_i32 : i32
    %1 = arith.extui %0 : i1 to i32
    %c0_i32_0 = arith.constant 0 : i32
    %2 = arith.cmpi ne, %1, %c0_i32_0 : i32
    scf.if %2 {
      %c0_137 = arith.constant 0 : index
      %c0_138 = arith.constant 0 : index
      %345 = vector.load %arg5[%c0_137, %c0_138] : memref<2x32xf32, #tpu.memory_space<vmem>>, vector<2x32xf32>
      %c0_139 = arith.constant 0 : index
      %c0_140 = arith.constant 0 : index
      %346 = vector.load %arg7[%c0_139, %c0_140] : memref<2x32xf32, #tpu.memory_space<vmem>>, vector<2x32xf32>
      tpu.vector_store %arg7[%c0_139, %c0_140], %345 {strides = array<i32>} : memref<2x32xf32, #tpu.memory_space<vmem>>, vector<2x32xf32>,
    } else {
    }
    %c0 = arith.constant 0 : index
    %c0_1 = arith.constant 0 : index
    %3 = vector.load %arg3[%c0, %c0_1] : memref<2x32xf32, #tpu.memory_space<vmem>>, vector<1x32xf32>
    %c1 = arith.constant 1 : index
    %c0_2 = arith.constant 0 : index
    %4 = vector.load %arg3[%c1, %c0_2] : memref<2x32xf32, #tpu.memory_space<vmem>>, vector<1x32xf32>
    %c0_3 = arith.constant 0 : index
    %c0_4 = arith.constant 0 : index
    %5 = vector.load %arg4[%c0_3, %c0_4] : memref<2x32xf32, #tpu.memory_space<vmem>>, vector<1x32xf32>
    %c1_5 = arith.constant 1 : index
    %c0_6 = arith.constant 0 : index
    %6 = vector.load %arg4[%c1_5, %c0_6] : memref<2x32xf32, #tpu.memory_space<vmem>>, vector<1x32xf32>
    %c0_7 = arith.constant 0 : index
    %c0_8 = arith.constant 0 : index
    %7 = vector.load %arg7[%c0_7, %c0_8] : memref<2x32xf32, #tpu.memory_space<vmem>>, vector<2x32xf32>
    %c0_i32_9 = arith.constant 0 : i32
    %c0_10 = arith.constant 0 : index
    %8 = arith.index_cast %c0_i32_9 : i32 to index
    %c0_11 = arith.constant 0 : index
    %c0_12 = arith.constant 0 : index
    %9 = vector.load %arg2[%c0_10, %8, %c0_11, %c0_12] : memref<4x8x2x32xf32, #tpu.memory_space<vmem>>, vector<1x1x2x32xf32>
    %10 = vector.shape_cast %9 : vector<1x1x2x32xf32> to vector<2x32xf32>
    %c1_13 = arith.constant 1 : index
    %11 = arith.index_cast %c0_i32_9 : i32 to index
    %c0_14 = arith.constant 0 : index
    %c0_15 = arith.constant 0 : index
    %12 = vector.load %arg2[%c1_13, %11, %c0_14, %c0_15] : memref<4x8x2x32xf32, #tpu.memory_space<vmem>>, vector<1x1x2x32xf32>
    %13 = vector.shape_cast %12 : vector<1x1x2x32xf32> to vector<2x32xf32>
    %c2 = arith.constant 2 : index
    %14 = arith.index_cast %c0_i32_9 : i32 to index
    %c0_16 = arith.constant 0 : index
    %c0_17 = arith.constant 0 : index
    %15 = vector.load %arg2[%c2, %14, %c0_16, %c0_17] : memref<4x8x2x32xf32, #tpu.memory_space<vmem>>, vector<1x1x2x32xf32>
    %16 = vector.shape_cast %15 : vector<1x1x2x32xf32> to vector<2x32xf32>
    %17 = vector.broadcast %3 : vector<1x32xf32> to vector<2x32xf32>
    %18 = arith.mulf %7, %17 : vector<2x32xf32>
    %19 = arith.addf %13, %18 : vector<2x32xf32>
    %20 = vector.broadcast %5 : vector<1x32xf32> to vector<2x32xf32>
    %21 = arith.addf %19, %20 : vector<2x32xf32>
    %22 = arith.negf %21 : vector<2x32xf32>
    %23 = math.exp %22 : vector<2x32xf32>
    %cst = arith.constant 1.000000e+00 : f32
    %24 = vector.broadcast %cst : f32 to vector<2x32xf32>
    %25 = arith.addf %24, %23 : vector<2x32xf32>
    %26 = arith.divf %24, %25 : vector<2x32xf32>
    %27 = vector.broadcast %4 : vector<1x32xf32> to vector<2x32xf32>
    %28 = arith.mulf %7, %27 : vector<2x32xf32>
    %29 = arith.addf %16, %28 : vector<2x32xf32>
    %30 = vector.broadcast %6 : vector<1x32xf32> to vector<2x32xf32>
    %31 = arith.addf %29, %30 : vector<2x32xf32>
    %32 = arith.negf %31 : vector<2x32xf32>
    %33 = math.exp %32 : vector<2x32xf32>
    %cst_18 = arith.constant 1.000000e+00 : f32
    %34 = vector.broadcast %cst_18 : f32 to vector<2x32xf32>
    %35 = arith.addf %34, %33 : vector<2x32xf32>
    %36 = arith.divf %34, %35 : vector<2x32xf32>
    %37 = arith.subf %7, %10 : vector<2x32xf32>
    %38 = arith.mulf %37, %26 : vector<2x32xf32>
    %39 = arith.addf %10, %38 : vector<2x32xf32>
    %c3 = arith.constant 3 : index
    %40 = arith.index_cast %c0_i32_9 : i32 to index
    %c0_19 = arith.constant 0 : index
    %c0_20 = arith.constant 0 : index
    %41 = vector.load %arg2[%c3, %40, %c0_19, %c0_20] : memref<4x8x2x32xf32, #tpu.memory_space<vmem>>, vector<1x1x2x32xf32>
    %42 = vector.shape_cast %41 : vector<1x1x2x32xf32> to vector<2x32xf32>
    %43 = arith.subf %39, %42 : vector<2x32xf32>
    %44 = arith.mulf %43, %36 : vector<2x32xf32>
    %45 = arith.addf %44, %42 : vector<2x32xf32>
    %46 = arith.index_cast %c0_i32_9 : i32 to index
    %c0_21 = arith.constant 0 : index
    %c0_22 = arith.constant 0 : index
    %47 = vector.load %arg6[%46, %c0_21, %c0_22] : memref<8x2x32xf32, #tpu.memory_space<vmem>>, vector<1x2x32xf32>
    %48 = vector.shape_cast %47 : vector<1x2x32xf32> to vector<2x32xf32>
    %49 = vector.shape_cast %45 : vector<2x32xf32> to vector<1x2x32xf32>
    tpu.vector_store %arg6[%46, %c0_21, %c0_22], %49 {strides = array<i32>} : memref<8x2x32xf32, #tpu.memory_space<vmem>>, vector<1x2x32xf32>,
    %c1_i32 = arith.constant 1 : i32
    %c0_23 = arith.constant 0 : index
    %50 = arith.index_cast %c1_i32 : i32 to index
    %c0_24 = arith.constant 0 : index
    %c0_25 = arith.constant 0 : index
    %51 = vector.load %arg2[%c0_23, %50, %c0_24, %c0_25] : memref<4x8x2x32xf32, #tpu.memory_space<vmem>>, vector<1x1x2x32xf32>
    %52 = vector.shape_cast %51 : vector<1x1x2x32xf32> to vector<2x32xf32>
    %c1_26 = arith.constant 1 : index
    %53 = arith.index_cast %c1_i32 : i32 to index
    %c0_27 = arith.constant 0 : index
    %c0_28 = arith.constant 0 : index
    %54 = vector.load %arg2[%c1_26, %53, %c0_27, %c0_28] : memref<4x8x2x32xf32, #tpu.memory_space<vmem>>, vector<1x1x2x32xf32>
    %55 = vector.shape_cast %54 : vector<1x1x2x32xf32> to vector<2x32xf32>
    %c2_29 = arith.constant 2 : index
    %56 = arith.index_cast %c1_i32 : i32 to index
    %c0_30 = arith.constant 0 : index
    %c0_31 = arith.constant 0 : index
    %57 = vector.load %arg2[%c2_29, %56, %c0_30, %c0_31] : memref<4x8x2x32xf32, #tpu.memory_space<vmem>>, vector<1x1x2x32xf32>
    %58 = vector.shape_cast %57 : vector<1x1x2x32xf32> to vector<2x32xf32>
    %59 = vector.broadcast %3 : vector<1x32xf32> to vector<2x32xf32>
    %60 = arith.mulf %39, %59 : vector<2x32xf32>
    %61 = arith.addf %55, %60 : vector<2x32xf32>
    %62 = vector.broadcast %5 : vector<1x32xf32> to vector<2x32xf32>
    %63 = arith.addf %61, %62 : vector<2x32xf32>
    %64 = arith.negf %63 : vector<2x32xf32>
    %65 = math.exp %64 : vector<2x32xf32>
    %cst_32 = arith.constant 1.000000e+00 : f32
    %66 = vector.broadcast %cst_32 : f32 to vector<2x32xf32>
    %67 = arith.addf %66, %65 : vector<2x32xf32>
    %68 = arith.divf %66, %67 : vector<2x32xf32>
    %69 = vector.broadcast %4 : vector<1x32xf32> to vector<2x32xf32>
    %70 = arith.mulf %39, %69 : vector<2x32xf32>
    %71 = arith.addf %58, %70 : vector<2x32xf32>
    %72 = vector.broadcast %6 : vector<1x32xf32> to vector<2x32xf32>
    %73 = arith.addf %71, %72 : vector<2x32xf32>
    %74 = arith.negf %73 : vector<2x32xf32>
    %75 = math.exp %74 : vector<2x32xf32>
    %cst_33 = arith.constant 1.000000e+00 : f32
    %76 = vector.broadcast %cst_33 : f32 to vector<2x32xf32>
    %77 = arith.addf %76, %75 : vector<2x32xf32>
    %78 = arith.divf %76, %77 : vector<2x32xf32>
    %79 = arith.subf %39, %52 : vector<2x32xf32>
    %80 = arith.mulf %79, %68 : vector<2x32xf32>
    %81 = arith.addf %52, %80 : vector<2x32xf32>
    %c3_34 = arith.constant 3 : index
    %82 = arith.index_cast %c1_i32 : i32 to index
    %c0_35 = arith.constant 0 : index
    %c0_36 = arith.constant 0 : index
    %83 = vector.load %arg2[%c3_34, %82, %c0_35, %c0_36] : memref<4x8x2x32xf32, #tpu.memory_space<vmem>>, vector<1x1x2x32xf32>
    %84 = vector.shape_cast %83 : vector<1x1x2x32xf32> to vector<2x32xf32>
    %85 = arith.subf %81, %84 : vector<2x32xf32>
    %86 = arith.mulf %85, %78 : vector<2x32xf32>
    %87 = arith.addf %86, %84 : vector<2x32xf32>
    %88 = arith.index_cast %c1_i32 : i32 to index
    %c0_37 = arith.constant 0 : index
    %c0_38 = arith.constant 0 : index
    %89 = vector.load %arg6[%88, %c0_37, %c0_38] : memref<8x2x32xf32, #tpu.memory_space<vmem>>, vector<1x2x32xf32>
    %90 = vector.shape_cast %89 : vector<1x2x32xf32> to vector<2x32xf32>
    %91 = vector.shape_cast %87 : vector<2x32xf32> to vector<1x2x32xf32>
    tpu.vector_store %arg6[%88, %c0_37, %c0_38], %91 {strides = array<i32>} : memref<8x2x32xf32, #tpu.memory_space<vmem>>, vector<1x2x32xf32>,
    %c2_i32 = arith.constant 2 : i32
    %c0_39 = arith.constant 0 : index
    %92 = arith.index_cast %c2_i32 : i32 to index
    %c0_40 = arith.constant 0 : index
    %c0_41 = arith.constant 0 : index
    %93 = vector.load %arg2[%c0_39, %92, %c0_40, %c0_41] : memref<4x8x2x32xf32, #tpu.memory_space<vmem>>, vector<1x1x2x32xf32>
    %94 = vector.shape_cast %93 : vector<1x1x2x32xf32> to vector<2x32xf32>
    %c1_42 = arith.constant 1 : index
    %95 = arith.index_cast %c2_i32 : i32 to index
    %c0_43 = arith.constant 0 : index
    %c0_44 = arith.constant 0 : index
    %96 = vector.load %arg2[%c1_42, %95, %c0_43, %c0_44] : memref<4x8x2x32xf32, #tpu.memory_space<vmem>>, vector<1x1x2x32xf32>
    %97 = vector.shape_cast %96 : vector<1x1x2x32xf32> to vector<2x32xf32>
    %c2_45 = arith.constant 2 : index
    %98 = arith.index_cast %c2_i32 : i32 to index
    %c0_46 = arith.constant 0 : index
    %c0_47 = arith.constant 0 : index
    %99 = vector.load %arg2[%c2_45, %98, %c0_46, %c0_47] : memref<4x8x2x32xf32, #tpu.memory_space<vmem>>, vector<1x1x2x32xf32>
    %100 = vector.shape_cast %99 : vector<1x1x2x32xf32> to vector<2x32xf32>
    %101 = vector.broadcast %3 : vector<1x32xf32> to vector<2x32xf32>
    %102 = arith.mulf %81, %101 : vector<2x32xf32>
    %103 = arith.addf %97, %102 : vector<2x32xf32>
    %104 = vector.broadcast %5 : vector<1x32xf32> to vector<2x32xf32>
    %105 = arith.addf %103, %104 : vector<2x32xf32>
    %106 = arith.negf %105 : vector<2x32xf32>
    %107 = math.exp %106 : vector<2x32xf32>
    %cst_48 = arith.constant 1.000000e+00 : f32
    %108 = vector.broadcast %cst_48 : f32 to vector<2x32xf32>
    %109 = arith.addf %108, %107 : vector<2x32xf32>
    %110 = arith.divf %108, %109 : vector<2x32xf32>
    %111 = vector.broadcast %4 : vector<1x32xf32> to vector<2x32xf32>
    %112 = arith.mulf %81, %111 : vector<2x32xf32>
    %113 = arith.addf %100, %112 : vector<2x32xf32>
    %114 = vector.broadcast %6 : vector<1x32xf32> to vector<2x32xf32>
    %115 = arith.addf %113, %114 : vector<2x32xf32>
    %116 = arith.negf %115 : vector<2x32xf32>
    %117 = math.exp %116 : vector<2x32xf32>
    %cst_49 = arith.constant 1.000000e+00 : f32
    %118 = vector.broadcast %cst_49 : f32 to vector<2x32xf32>
    %119 = arith.addf %118, %117 : vector<2x32xf32>
    %120 = arith.divf %118, %119 : vector<2x32xf32>
    %121 = arith.subf %81, %94 : vector<2x32xf32>
    %122 = arith.mulf %121, %110 : vector<2x32xf32>
    %123 = arith.addf %94, %122 : vector<2x32xf32>
    %c3_50 = arith.constant 3 : index
    %124 = arith.index_cast %c2_i32 : i32 to index
    %c0_51 = arith.constant 0 : index
    %c0_52 = arith.constant 0 : index
    %125 = vector.load %arg2[%c3_50, %124, %c0_51, %c0_52] : memref<4x8x2x32xf32, #tpu.memory_space<vmem>>, vector<1x1x2x32xf32>
    %126 = vector.shape_cast %125 : vector<1x1x2x32xf32> to vector<2x32xf32>
    %127 = arith.subf %123, %126 : vector<2x32xf32>
    %128 = arith.mulf %127, %120 : vector<2x32xf32>
    %129 = arith.addf %128, %126 : vector<2x32xf32>
    %130 = arith.index_cast %c2_i32 : i32 to index
    %c0_53 = arith.constant 0 : index
    %c0_54 = arith.constant 0 : index
    %131 = vector.load %arg6[%130, %c0_53, %c0_54] : memref<8x2x32xf32, #tpu.memory_space<vmem>>, vector<1x2x32xf32>
    %132 = vector.shape_cast %131 : vector<1x2x32xf32> to vector<2x32xf32>
    %133 = vector.shape_cast %129 : vector<2x32xf32> to vector<1x2x32xf32>
    tpu.vector_store %arg6[%130, %c0_53, %c0_54], %133 {strides = array<i32>} : memref<8x2x32xf32, #tpu.memory_space<vmem>>, vector<1x2x32xf32>,
    %c3_i32 = arith.constant 3 : i32
    %c0_55 = arith.constant 0 : index
    %134 = arith.index_cast %c3_i32 : i32 to index
    %c0_56 = arith.constant 0 : index
    %c0_57 = arith.constant 0 : index
    %135 = vector.load %arg2[%c0_55, %134, %c0_56, %c0_57] : memref<4x8x2x32xf32, #tpu.memory_space<vmem>>, vector<1x1x2x32xf32>
    %136 = vector.shape_cast %135 : vector<1x1x2x32xf32> to vector<2x32xf32>
    %c1_58 = arith.constant 1 : index
    %137 = arith.index_cast %c3_i32 : i32 to index
    %c0_59 = arith.constant 0 : index
    %c0_60 = arith.constant 0 : index
    %138 = vector.load %arg2[%c1_58, %137, %c0_59, %c0_60] : memref<4x8x2x32xf32, #tpu.memory_space<vmem>>, vector<1x1x2x32xf32>
    %139 = vector.shape_cast %138 : vector<1x1x2x32xf32> to vector<2x32xf32>
    %c2_61 = arith.constant 2 : index
    %140 = arith.index_cast %c3_i32 : i32 to index
    %c0_62 = arith.constant 0 : index
    %c0_63 = arith.constant 0 : index
    %141 = vector.load %arg2[%c2_61, %140, %c0_62, %c0_63] : memref<4x8x2x32xf32, #tpu.memory_space<vmem>>, vector<1x1x2x32xf32>
    %142 = vector.shape_cast %141 : vector<1x1x2x32xf32> to vector<2x32xf32>
    %143 = vector.broadcast %3 : vector<1x32xf32> to vector<2x32xf32>
    %144 = arith.mulf %123, %143 : vector<2x32xf32>
    %145 = arith.addf %139, %144 : vector<2x32xf32>
    %146 = vector.broadcast %5 : vector<1x32xf32> to vector<2x32xf32>
    %147 = arith.addf %145, %146 : vector<2x32xf32>
    %148 = arith.negf %147 : vector<2x32xf32>
    %149 = math.exp %148 : vector<2x32xf32>
    %cst_64 = arith.constant 1.000000e+00 : f32
    %150 = vector.broadcast %cst_64 : f32 to vector<2x32xf32>
    %151 = arith.addf %150, %149 : vector<2x32xf32>
    %152 = arith.divf %150, %151 : vector<2x32xf32>
    %153 = vector.broadcast %4 : vector<1x32xf32> to vector<2x32xf32>
    %154 = arith.mulf %123, %153 : vector<2x32xf32>
    %155 = arith.addf %142, %154 : vector<2x32xf32>
    %156 = vector.broadcast %6 : vector<1x32xf32> to vector<2x32xf32>
    %157 = arith.addf %155, %156 : vector<2x32xf32>
    %158 = arith.negf %157 : vector<2x32xf32>
    %159 = math.exp %158 : vector<2x32xf32>
    %cst_65 = arith.constant 1.000000e+00 : f32
    %160 = vector.broadcast %cst_65 : f32 to vector<2x32xf32>
    %161 = arith.addf %160, %159 : vector<2x32xf32>
    %162 = arith.divf %160, %161 : vector<2x32xf32>
    %163 = arith.subf %123, %136 : vector<2x32xf32>
    %164 = arith.mulf %163, %152 : vector<2x32xf32>
    %165 = arith.addf %136, %164 : vector<2x32xf32>
    %c3_66 = arith.constant 3 : index
    %166 = arith.index_cast %c3_i32 : i32 to index
    %c0_67 = arith.constant 0 : index
    %c0_68 = arith.constant 0 : index
    %167 = vector.load %arg2[%c3_66, %166, %c0_67, %c0_68] : memref<4x8x2x32xf32, #tpu.memory_space<vmem>>, vector<1x1x2x32xf32>
    %168 = vector.shape_cast %167 : vector<1x1x2x32xf32> to vector<2x32xf32>
    %169 = arith.subf %165, %168 : vector<2x32xf32>
    %170 = arith.mulf %169, %162 : vector<2x32xf32>
    %171 = arith.addf %170, %168 : vector<2x32xf32>
    %172 = arith.index_cast %c3_i32 : i32 to index
    %c0_69 = arith.constant 0 : index
    %c0_70 = arith.constant 0 : index
    %173 = vector.load %arg6[%172, %c0_69, %c0_70] : memref<8x2x32xf32, #tpu.memory_space<vmem>>, vector<1x2x32xf32>
    %174 = vector.shape_cast %173 : vector<1x2x32xf32> to vector<2x32xf32>
    %175 = vector.shape_cast %171 : vector<2x32xf32> to vector<1x2x32xf32>
    tpu.vector_store %arg6[%172, %c0_69, %c0_70], %175 {strides = array<i32>} : memref<8x2x32xf32, #tpu.memory_space<vmem>>, vector<1x2x32xf32>,
    %c4_i32 = arith.constant 4 : i32
    %c0_71 = arith.constant 0 : index
    %176 = arith.index_cast %c4_i32 : i32 to index
    %c0_72 = arith.constant 0 : index
    %c0_73 = arith.constant 0 : index
    %177 = vector.load %arg2[%c0_71, %176, %c0_72, %c0_73] : memref<4x8x2x32xf32, #tpu.memory_space<vmem>>, vector<1x1x2x32xf32>
    %178 = vector.shape_cast %177 : vector<1x1x2x32xf32> to vector<2x32xf32>
    %c1_74 = arith.constant 1 : index
    %179 = arith.index_cast %c4_i32 : i32 to index
    %c0_75 = arith.constant 0 : index
    %c0_76 = arith.constant 0 : index
    %180 = vector.load %arg2[%c1_74, %179, %c0_75, %c0_76] : memref<4x8x2x32xf32, #tpu.memory_space<vmem>>, vector<1x1x2x32xf32>
    %181 = vector.shape_cast %180 : vector<1x1x2x32xf32> to vector<2x32xf32>
    %c2_77 = arith.constant 2 : index
    %182 = arith.index_cast %c4_i32 : i32 to index
    %c0_78 = arith.constant 0 : index
    %c0_79 = arith.constant 0 : index
    %183 = vector.load %arg2[%c2_77, %182, %c0_78, %c0_79] : memref<4x8x2x32xf32, #tpu.memory_space<vmem>>, vector<1x1x2x32xf32>
    %184 = vector.shape_cast %183 : vector<1x1x2x32xf32> to vector<2x32xf32>
    %185 = vector.broadcast %3 : vector<1x32xf32> to vector<2x32xf32>
    %186 = arith.mulf %165, %185 : vector<2x32xf32>
    %187 = arith.addf %181, %186 : vector<2x32xf32>
    %188 = vector.broadcast %5 : vector<1x32xf32> to vector<2x32xf32>
    %189 = arith.addf %187, %188 : vector<2x32xf32>
    %190 = arith.negf %189 : vector<2x32xf32>
    %191 = math.exp %190 : vector<2x32xf32>
    %cst_80 = arith.constant 1.000000e+00 : f32
    %192 = vector.broadcast %cst_80 : f32 to vector<2x32xf32>
    %193 = arith.addf %192, %191 : vector<2x32xf32>
    %194 = arith.divf %192, %193 : vector<2x32xf32>
    %195 = vector.broadcast %4 : vector<1x32xf32> to vector<2x32xf32>
    %196 = arith.mulf %165, %195 : vector<2x32xf32>
    %197 = arith.addf %184, %196 : vector<2x32xf32>
    %198 = vector.broadcast %6 : vector<1x32xf32> to vector<2x32xf32>
    %199 = arith.addf %197, %198 : vector<2x32xf32>
    %200 = arith.negf %199 : vector<2x32xf32>
    %201 = math.exp %200 : vector<2x32xf32>
    %cst_81 = arith.constant 1.000000e+00 : f32
    %202 = vector.broadcast %cst_81 : f32 to vector<2x32xf32>
    %203 = arith.addf %202, %201 : vector<2x32xf32>
    %204 = arith.divf %202, %203 : vector<2x32xf32>
    %205 = arith.subf %165, %178 : vector<2x32xf32>
    %206 = arith.mulf %205, %194 : vector<2x32xf32>
    %207 = arith.addf %178, %206 : vector<2x32xf32>
    %c3_82 = arith.constant 3 : index
    %208 = arith.index_cast %c4_i32 : i32 to index
    %c0_83 = arith.constant 0 : index
    %c0_84 = arith.constant 0 : index
    %209 = vector.load %arg2[%c3_82, %208, %c0_83, %c0_84] : memref<4x8x2x32xf32, #tpu.memory_space<vmem>>, vector<1x1x2x32xf32>
    %210 = vector.shape_cast %209 : vector<1x1x2x32xf32> to vector<2x32xf32>
    %211 = arith.subf %207, %210 : vector<2x32xf32>
    %212 = arith.mulf %211, %204 : vector<2x32xf32>
    %213 = arith.addf %212, %210 : vector<2x32xf32>
    %214 = arith.index_cast %c4_i32 : i32 to index
    %c0_85 = arith.constant 0 : index
    %c0_86 = arith.constant 0 : index
    %215 = vector.load %arg6[%214, %c0_85, %c0_86] : memref<8x2x32xf32, #tpu.memory_space<vmem>>, vector<1x2x32xf32>
    %216 = vector.shape_cast %215 : vector<1x2x32xf32> to vector<2x32xf32>
    %217 = vector.shape_cast %213 : vector<2x32xf32> to vector<1x2x32xf32>
    tpu.vector_store %arg6[%214, %c0_85, %c0_86], %217 {strides = array<i32>} : memref<8x2x32xf32, #tpu.memory_space<vmem>>, vector<1x2x32xf32>,
    %c5_i32 = arith.constant 5 : i32
    %c0_87 = arith.constant 0 : index
    %218 = arith.index_cast %c5_i32 : i32 to index
    %c0_88 = arith.constant 0 : index
    %c0_89 = arith.constant 0 : index
    %219 = vector.load %arg2[%c0_87, %218, %c0_88, %c0_89] : memref<4x8x2x32xf32, #tpu.memory_space<vmem>>, vector<1x1x2x32xf32>
    %220 = vector.shape_cast %219 : vector<1x1x2x32xf32> to vector<2x32xf32>
    %c1_90 = arith.constant 1 : index
    %221 = arith.index_cast %c5_i32 : i32 to index
    %c0_91 = arith.constant 0 : index
    %c0_92 = arith.constant 0 : index
    %222 = vector.load %arg2[%c1_90, %221, %c0_91, %c0_92] : memref<4x8x2x32xf32, #tpu.memory_space<vmem>>, vector<1x1x2x32xf32>
    %223 = vector.shape_cast %222 : vector<1x1x2x32xf32> to vector<2x32xf32>
    %c2_93 = arith.constant 2 : index
    %224 = arith.index_cast %c5_i32 : i32 to index
    %c0_94 = arith.constant 0 : index
    %c0_95 = arith.constant 0 : index
    %225 = vector.load %arg2[%c2_93, %224, %c0_94, %c0_95] : memref<4x8x2x32xf32, #tpu.memory_space<vmem>>, vector<1x1x2x32xf32>
    %226 = vector.shape_cast %225 : vector<1x1x2x32xf32> to vector<2x32xf32>
    %227 = vector.broadcast %3 : vector<1x32xf32> to vector<2x32xf32>
    %228 = arith.mulf %207, %227 : vector<2x32xf32>
    %229 = arith.addf %223, %228 : vector<2x32xf32>
    %230 = vector.broadcast %5 : vector<1x32xf32> to vector<2x32xf32>
    %231 = arith.addf %229, %230 : vector<2x32xf32>
    %232 = arith.negf %231 : vector<2x32xf32>
    %233 = math.exp %232 : vector<2x32xf32>
    %cst_96 = arith.constant 1.000000e+00 : f32
    %234 = vector.broadcast %cst_96 : f32 to vector<2x32xf32>
    %235 = arith.addf %234, %233 : vector<2x32xf32>
    %236 = arith.divf %234, %235 : vector<2x32xf32>
    %237 = vector.broadcast %4 : vector<1x32xf32> to vector<2x32xf32>
    %238 = arith.mulf %207, %237 : vector<2x32xf32>
    %239 = arith.addf %226, %238 : vector<2x32xf32>
    %240 = vector.broadcast %6 : vector<1x32xf32> to vector<2x32xf32>
    %241 = arith.addf %239, %240 : vector<2x32xf32>
    %242 = arith.negf %241 : vector<2x32xf32>
    %243 = math.exp %242 : vector<2x32xf32>
    %cst_97 = arith.constant 1.000000e+00 : f32
    %244 = vector.broadcast %cst_97 : f32 to vector<2x32xf32>
    %245 = arith.addf %244, %243 : vector<2x32xf32>
    %246 = arith.divf %244, %245 : vector<2x32xf32>
    %247 = arith.subf %207, %220 : vector<2x32xf32>
    %248 = arith.mulf %247, %236 : vector<2x32xf32>
    %249 = arith.addf %220, %248 : vector<2x32xf32>
    %c3_98 = arith.constant 3 : index
    %250 = arith.index_cast %c5_i32 : i32 to index
    %c0_99 = arith.constant 0 : index
    %c0_100 = arith.constant 0 : index
    %251 = vector.load %arg2[%c3_98, %250, %c0_99, %c0_100] : memref<4x8x2x32xf32, #tpu.memory_space<vmem>>, vector<1x1x2x32xf32>
    %252 = vector.shape_cast %251 : vector<1x1x2x32xf32> to vector<2x32xf32>
    %253 = arith.subf %249, %252 : vector<2x32xf32>
    %254 = arith.mulf %253, %246 : vector<2x32xf32>
    %255 = arith.addf %254, %252 : vector<2x32xf32>
    %256 = arith.index_cast %c5_i32 : i32 to index
    %c0_101 = arith.constant 0 : index
    %c0_102 = arith.constant 0 : index
    %257 = vector.load %arg6[%256, %c0_101, %c0_102] : memref<8x2x32xf32, #tpu.memory_space<vmem>>, vector<1x2x32xf32>
    %258 = vector.shape_cast %257 : vector<1x2x32xf32> to vector<2x32xf32>
    %259 = vector.shape_cast %255 : vector<2x32xf32> to vector<1x2x32xf32>
    tpu.vector_store %arg6[%256, %c0_101, %c0_102], %259 {strides = array<i32>} : memref<8x2x32xf32, #tpu.memory_space<vmem>>, vector<1x2x32xf32>,
    %c6_i32 = arith.constant 6 : i32
    %c0_103 = arith.constant 0 : index
    %260 = arith.index_cast %c6_i32 : i32 to index
    %c0_104 = arith.constant 0 : index
    %c0_105 = arith.constant 0 : index
    %261 = vector.load %arg2[%c0_103, %260, %c0_104, %c0_105] : memref<4x8x2x32xf32, #tpu.memory_space<vmem>>, vector<1x1x2x32xf32>
    %262 = vector.shape_cast %261 : vector<1x1x2x32xf32> to vector<2x32xf32>
    %c1_106 = arith.constant 1 : index
    %263 = arith.index_cast %c6_i32 : i32 to index
    %c0_107 = arith.constant 0 : index
    %c0_108 = arith.constant 0 : index
    %264 = vector.load %arg2[%c1_106, %263, %c0_107, %c0_108] : memref<4x8x2x32xf32, #tpu.memory_space<vmem>>, vector<1x1x2x32xf32>
    %265 = vector.shape_cast %264 : vector<1x1x2x32xf32> to vector<2x32xf32>
    %c2_109 = arith.constant 2 : index
    %266 = arith.index_cast %c6_i32 : i32 to index
    %c0_110 = arith.constant 0 : index
    %c0_111 = arith.constant 0 : index
    %267 = vector.load %arg2[%c2_109, %266, %c0_110, %c0_111] : memref<4x8x2x32xf32, #tpu.memory_space<vmem>>, vector<1x1x2x32xf32>
    %268 = vector.shape_cast %267 : vector<1x1x2x32xf32> to vector<2x32xf32>
    %269 = vector.broadcast %3 : vector<1x32xf32> to vector<2x32xf32>
    %270 = arith.mulf %249, %269 : vector<2x32xf32>
    %271 = arith.addf %265, %270 : vector<2x32xf32>
    %272 = vector.broadcast %5 : vector<1x32xf32> to vector<2x32xf32>
    %273 = arith.addf %271, %272 : vector<2x32xf32>
    %274 = arith.negf %273 : vector<2x32xf32>
    %275 = math.exp %274 : vector<2x32xf32>
    %cst_112 = arith.constant 1.000000e+00 : f32
    %276 = vector.broadcast %cst_112 : f32 to vector<2x32xf32>
    %277 = arith.addf %276, %275 : vector<2x32xf32>
    %278 = arith.divf %276, %277 : vector<2x32xf32>
    %279 = vector.broadcast %4 : vector<1x32xf32> to vector<2x32xf32>
    %280 = arith.mulf %249, %279 : vector<2x32xf32>
    %281 = arith.addf %268, %280 : vector<2x32xf32>
    %282 = vector.broadcast %6 : vector<1x32xf32> to vector<2x32xf32>
    %283 = arith.addf %281, %282 : vector<2x32xf32>
    %284 = arith.negf %283 : vector<2x32xf32>
    %285 = math.exp %284 : vector<2x32xf32>
    %cst_113 = arith.constant 1.000000e+00 : f32
    %286 = vector.broadcast %cst_113 : f32 to vector<2x32xf32>
    %287 = arith.addf %286, %285 : vector<2x32xf32>
    %288 = arith.divf %286, %287 : vector<2x32xf32>
    %289 = arith.subf %249, %262 : vector<2x32xf32>
    %290 = arith.mulf %289, %278 : vector<2x32xf32>
    %291 = arith.addf %262, %290 : vector<2x32xf32>
    %c3_114 = arith.constant 3 : index
    %292 = arith.index_cast %c6_i32 : i32 to index
    %c0_115 = arith.constant 0 : index
    %c0_116 = arith.constant 0 : index
    %293 = vector.load %arg2[%c3_114, %292, %c0_115, %c0_116] : memref<4x8x2x32xf32, #tpu.memory_space<vmem>>, vector<1x1x2x32xf32>
    %294 = vector.shape_cast %293 : vector<1x1x2x32xf32> to vector<2x32xf32>
    %295 = arith.subf %291, %294 : vector<2x32xf32>
    %296 = arith.mulf %295, %288 : vector<2x32xf32>
    %297 = arith.addf %296, %294 : vector<2x32xf32>
    %298 = arith.index_cast %c6_i32 : i32 to index
    %c0_117 = arith.constant 0 : index
    %c0_118 = arith.constant 0 : index
    %299 = vector.load %arg6[%298, %c0_117, %c0_118] : memref<8x2x32xf32, #tpu.memory_space<vmem>>, vector<1x2x32xf32>
    %300 = vector.shape_cast %299 : vector<1x2x32xf32> to vector<2x32xf32>
    %301 = vector.shape_cast %297 : vector<2x32xf32> to vector<1x2x32xf32>
    tpu.vector_store %arg6[%298, %c0_117, %c0_118], %301 {strides = array<i32>} : memref<8x2x32xf32, #tpu.memory_space<vmem>>, vector<1x2x32xf32>,
    %c7_i32 = arith.constant 7 : i32
    %c0_119 = arith.constant 0 : index
    %302 = arith.index_cast %c7_i32 : i32 to index
    %c0_120 = arith.constant 0 : index
    %c0_121 = arith.constant 0 : index
    %303 = vector.load %arg2[%c0_119, %302, %c0_120, %c0_121] : memref<4x8x2x32xf32, #tpu.memory_space<vmem>>, vector<1x1x2x32xf32>
    %304 = vector.shape_cast %303 : vector<1x1x2x32xf32> to vector<2x32xf32>
    %c1_122 = arith.constant 1 : index
    %305 = arith.index_cast %c7_i32 : i32 to index
    %c0_123 = arith.constant 0 : index
    %c0_124 = arith.constant 0 : index
    %306 = vector.load %arg2[%c1_122, %305, %c0_123, %c0_124] : memref<4x8x2x32xf32, #tpu.memory_space<vmem>>, vector<1x1x2x32xf32>
    %307 = vector.shape_cast %306 : vector<1x1x2x32xf32> to vector<2x32xf32>
    %c2_125 = arith.constant 2 : index
    %308 = arith.index_cast %c7_i32 : i32 to index
    %c0_126 = arith.constant 0 : index
    %c0_127 = arith.constant 0 : index
    %309 = vector.load %arg2[%c2_125, %308, %c0_126, %c0_127] : memref<4x8x2x32xf32, #tpu.memory_space<vmem>>, vector<1x1x2x32xf32>
    %310 = vector.shape_cast %309 : vector<1x1x2x32xf32> to vector<2x32xf32>
    %311 = vector.broadcast %3 : vector<1x32xf32> to vector<2x32xf32>
    %312 = arith.mulf %291, %311 : vector<2x32xf32>
    %313 = arith.addf %307, %312 : vector<2x32xf32>
    %314 = vector.broadcast %5 : vector<1x32xf32> to vector<2x32xf32>
    %315 = arith.addf %313, %314 : vector<2x32xf32>
    %316 = arith.negf %315 : vector<2x32xf32>
    %317 = math.exp %316 : vector<2x32xf32>
    %cst_128 = arith.constant 1.000000e+00 : f32
    %318 = vector.broadcast %cst_128 : f32 to vector<2x32xf32>
    %319 = arith.addf %318, %317 : vector<2x32xf32>
    %320 = arith.divf %318, %319 : vector<2x32xf32>
    %321 = vector.broadcast %4 : vector<1x32xf32> to vector<2x32xf32>
    %322 = arith.mulf %291, %321 : vector<2x32xf32>
    %323 = arith.addf %310, %322 : vector<2x32xf32>
    %324 = vector.broadcast %6 : vector<1x32xf32> to vector<2x32xf32>
    %325 = arith.addf %323, %324 : vector<2x32xf32>
    %326 = arith.negf %325 : vector<2x32xf32>
    %327 = math.exp %326 : vector<2x32xf32>
    %cst_129 = arith.constant 1.000000e+00 : f32
    %328 = vector.broadcast %cst_129 : f32 to vector<2x32xf32>
    %329 = arith.addf %328, %327 : vector<2x32xf32>
    %330 = arith.divf %328, %329 : vector<2x32xf32>
    %331 = arith.subf %291, %304 : vector<2x32xf32>
    %332 = arith.mulf %331, %320 : vector<2x32xf32>
    %333 = arith.addf %304, %332 : vector<2x32xf32>
    %c3_130 = arith.constant 3 : index
    %334 = arith.index_cast %c7_i32 : i32 to index
    %c0_131 = arith.constant 0 : index
    %c0_132 = arith.constant 0 : index
    %335 = vector.load %arg2[%c3_130, %334, %c0_131, %c0_132] : memref<4x8x2x32xf32, #tpu.memory_space<vmem>>, vector<1x1x2x32xf32>
    %336 = vector.shape_cast %335 : vector<1x1x2x32xf32> to vector<2x32xf32>
    %337 = arith.subf %333, %336 : vector<2x32xf32>
    %338 = arith.mulf %337, %330 : vector<2x32xf32>
    %339 = arith.addf %338, %336 : vector<2x32xf32>
    %340 = arith.index_cast %c7_i32 : i32 to index
    %c0_133 = arith.constant 0 : index
    %c0_134 = arith.constant 0 : index
    %341 = vector.load %arg6[%340, %c0_133, %c0_134] : memref<8x2x32xf32, #tpu.memory_space<vmem>>, vector<1x2x32xf32>
    %342 = vector.shape_cast %341 : vector<1x2x32xf32> to vector<2x32xf32>
    %343 = vector.shape_cast %339 : vector<2x32xf32> to vector<1x2x32xf32>
    tpu.vector_store %arg6[%340, %c0_133, %c0_134], %343 {strides = array<i32>} : memref<8x2x32xf32, #tpu.memory_space<vmem>>, vector<1x2x32xf32>,
    %c8_i32 = arith.constant 8 : i32
    %c0_135 = arith.constant 0 : index
    %c0_136 = arith.constant 0 : index
    %344 = vector.load %arg7[%c0_135, %c0_136] : memref<2x32xf32, #tpu.memory_space<vmem>>, vector<2x32xf32>
    tpu.vector_store %arg7[%c0_135, %c0_136], %333 {strides = array<i32>} : memref<2x32xf32, #tpu.memory_space<vmem>>, vector<2x32xf32>,
    return
  }
  func.func @transform_0(%arg0: i32, %arg1: i32) -> (i32, i32, i32, i32) {
    %c0_i32 = arith.constant 0 : i32
    %c0_i32_0 = arith.constant 0 : i32
    %c0_i32_1 = arith.constant 0 : i32
    return %c0_i32, %arg1, %c0_i32_0, %arg0 : i32, i32, i32, i32
  }
  func.func @transform_1(%arg0: i32, %arg1: i32) -> (i32, i32) {
    %c0_i32 = arith.constant 0 : i32
    %c0_i32_0 = arith.constant 0 : i32
    return %c0_i32, %arg0 : i32, i32
  }
  func.func @transform_2(%arg0: i32, %arg1: i32) -> (i32, i32) {
    %c0_i32 = arith.constant 0 : i32
    %c0_i32_0 = arith.constant 0 : i32
    return %c0_i32, %arg0 : i32, i32
  }
  func.func @transform_3(%arg0: i32, %arg1: i32) -> (i32, i32) {
    %c0_i32 = arith.constant 0 : i32
    %c0_i32_0 = arith.constant 0 : i32
    return %c0_i32, %arg0 : i32, i32
  }
  func.func @transform_4(%arg0: i32, %arg1: i32) -> (i32, i32, i32) {
    %c0_i32 = arith.constant 0 : i32
    %c0_i32_0 = arith.constant 0 : i32
    return %arg1, %c0_i32, %arg0 : i32, i32, i32
  }
  func.func @transform_5(%arg0: i32, %arg1: i32) -> (i32, i32) {
    %c0_i32 = arith.constant 0 : i32
    %c0_i32_0 = arith.constant 0 : i32
    return %c0_i32, %arg0 : i32, i32
  }
}

module attributes {stable_mosaic.version = 11 : i64} {
  func.func @_sru_recurrence_kernel(%arg0: i32, %arg1: i32, %arg2: memref<3x8x2x32xf32, #tpu.memory_space<vmem>>, %arg3: memref<2x32xf32, #tpu.memory_space<vmem>>, %arg4: memref<2x32xf32, #tpu.memory_space<vmem>>, %arg5: memref<2x32xf32, #tpu.memory_space<vmem>>, %arg6: memref<8x2x32xf32, #tpu.memory_space<vmem>>, %arg7: memref<8x2x32xf32, #tpu.memory_space<vmem>>, %arg8: memref<2x32xf32, #tpu.memory_space<vmem>>) attributes {dimension_semantics = [#tpu.dimension_semantics<parallel>, #tpu.dimension_semantics<arbitrary>], iteration_bounds = array<i64: 1, 1>, scalar_prefetch = 0 : i64, scratch_operands = 0 : i64, tpu.core_type = #tpu.core_type<tc>, window_params = [{transform_indices = @transform_0, window_bounds = array<i64: 3, 8, 2, 32>}, {transform_indices = @transform_1, window_bounds = array<i64: 2, 32>}, {transform_indices = @transform_2, window_bounds = array<i64: 2, 32>}, {transform_indices = @transform_3, window_bounds = array<i64: 2, 32>}, {transform_indices = @transform_4, window_bounds = array<i64: 8, 2, 32>}, {transform_indices = @transform_5, window_bounds = array<i64: 8, 2, 32>}, {transform_indices = @transform_6, window_bounds = array<i64: 2, 32>}]} {
    %c0_i32 = arith.constant 0 : i32
    %0 = arith.cmpi eq, %arg1, %c0_i32 : i32
    %1 = arith.extui %0 : i1 to i32
    %c0_i32_0 = arith.constant 0 : i32
    %2 = arith.cmpi ne, %1, %c0_i32_0 : i32
    scf.if %2 {
      %c0_138 = arith.constant 0 : index
      %c0_139 = arith.constant 0 : index
      %361 = vector.load %arg5[%c0_138, %c0_139] : memref<2x32xf32, #tpu.memory_space<vmem>>, vector<2x32xf32>
      %c0_140 = arith.constant 0 : index
      %c0_141 = arith.constant 0 : index
      %362 = vector.load %arg8[%c0_140, %c0_141] : memref<2x32xf32, #tpu.memory_space<vmem>>, vector<2x32xf32>
      tpu.vector_store %arg8[%c0_140, %c0_141], %361 {strides = array<i32>} : memref<2x32xf32, #tpu.memory_space<vmem>>, vector<2x32xf32>,
    } else {
    }
    %c0 = arith.constant 0 : index
    %c0_1 = arith.constant 0 : index
    %3 = vector.load %arg3[%c0, %c0_1] : memref<2x32xf32, #tpu.memory_space<vmem>>, vector<1x32xf32>
    %c1 = arith.constant 1 : index
    %c0_2 = arith.constant 0 : index
    %4 = vector.load %arg3[%c1, %c0_2] : memref<2x32xf32, #tpu.memory_space<vmem>>, vector<1x32xf32>
    %c0_3 = arith.constant 0 : index
    %c0_4 = arith.constant 0 : index
    %5 = vector.load %arg4[%c0_3, %c0_4] : memref<2x32xf32, #tpu.memory_space<vmem>>, vector<1x32xf32>
    %c1_5 = arith.constant 1 : index
    %c0_6 = arith.constant 0 : index
    %6 = vector.load %arg4[%c1_5, %c0_6] : memref<2x32xf32, #tpu.memory_space<vmem>>, vector<1x32xf32>
    %c0_7 = arith.constant 0 : index
    %c0_8 = arith.constant 0 : index
    %7 = vector.load %arg8[%c0_7, %c0_8] : memref<2x32xf32, #tpu.memory_space<vmem>>, vector<2x32xf32>
    %c0_i32_9 = arith.constant 0 : i32
    %c0_10 = arith.constant 0 : index
    %8 = arith.index_cast %c0_i32_9 : i32 to index
    %c0_11 = arith.constant 0 : index
    %c0_12 = arith.constant 0 : index
    %9 = vector.load %arg2[%c0_10, %8, %c0_11, %c0_12] : memref<3x8x2x32xf32, #tpu.memory_space<vmem>>, vector<1x1x2x32xf32>
    %10 = vector.shape_cast %9 : vector<1x1x2x32xf32> to vector<2x32xf32>
    %c1_13 = arith.constant 1 : index
    %11 = arith.index_cast %c0_i32_9 : i32 to index
    %c0_14 = arith.constant 0 : index
    %c0_15 = arith.constant 0 : index
    %12 = vector.load %arg2[%c1_13, %11, %c0_14, %c0_15] : memref<3x8x2x32xf32, #tpu.memory_space<vmem>>, vector<1x1x2x32xf32>
    %13 = vector.shape_cast %12 : vector<1x1x2x32xf32> to vector<2x32xf32>
    %c2 = arith.constant 2 : index
    %14 = arith.index_cast %c0_i32_9 : i32 to index
    %c0_16 = arith.constant 0 : index
    %c0_17 = arith.constant 0 : index
    %15 = vector.load %arg2[%c2, %14, %c0_16, %c0_17] : memref<3x8x2x32xf32, #tpu.memory_space<vmem>>, vector<1x1x2x32xf32>
    %16 = vector.shape_cast %15 : vector<1x1x2x32xf32> to vector<2x32xf32>
    %17 = vector.broadcast %3 : vector<1x32xf32> to vector<2x32xf32>
    %18 = arith.mulf %7, %17 : vector<2x32xf32>
    %19 = arith.addf %13, %18 : vector<2x32xf32>
    %20 = vector.broadcast %5 : vector<1x32xf32> to vector<2x32xf32>
    %21 = arith.addf %19, %20 : vector<2x32xf32>
    %22 = arith.negf %21 : vector<2x32xf32>
    %23 = math.exp %22 : vector<2x32xf32>
    %cst = arith.constant 1.000000e+00 : f32
    %24 = vector.broadcast %cst : f32 to vector<2x32xf32>
    %25 = arith.addf %24, %23 : vector<2x32xf32>
    %26 = arith.divf %24, %25 : vector<2x32xf32>
    %27 = vector.broadcast %4 : vector<1x32xf32> to vector<2x32xf32>
    %28 = arith.mulf %7, %27 : vector<2x32xf32>
    %29 = arith.addf %16, %28 : vector<2x32xf32>
    %30 = vector.broadcast %6 : vector<1x32xf32> to vector<2x32xf32>
    %31 = arith.addf %29, %30 : vector<2x32xf32>
    %32 = arith.negf %31 : vector<2x32xf32>
    %33 = math.exp %32 : vector<2x32xf32>
    %cst_18 = arith.constant 1.000000e+00 : f32
    %34 = vector.broadcast %cst_18 : f32 to vector<2x32xf32>
    %35 = arith.addf %34, %33 : vector<2x32xf32>
    %36 = arith.divf %34, %35 : vector<2x32xf32>
    %37 = arith.subf %7, %10 : vector<2x32xf32>
    %38 = arith.mulf %37, %26 : vector<2x32xf32>
    %39 = arith.addf %10, %38 : vector<2x32xf32>
    %40 = arith.index_cast %c0_i32_9 : i32 to index
    %c0_19 = arith.constant 0 : index
    %c0_20 = arith.constant 0 : index
    %41 = vector.load %arg6[%40, %c0_19, %c0_20] : memref<8x2x32xf32, #tpu.memory_space<vmem>>, vector<1x2x32xf32>
    %42 = vector.shape_cast %41 : vector<1x2x32xf32> to vector<2x32xf32>
    %cst_21 = arith.constant 1.73205078 : f32
    %43 = vector.broadcast %cst_21 : f32 to vector<2x32xf32>
    %44 = arith.mulf %42, %43 : vector<2x32xf32>
    %45 = arith.subf %39, %44 : vector<2x32xf32>
    %46 = arith.mulf %45, %36 : vector<2x32xf32>
    %47 = arith.addf %46, %44 : vector<2x32xf32>
    %48 = arith.index_cast %c0_i32_9 : i32 to index
    %c0_22 = arith.constant 0 : index
    %c0_23 = arith.constant 0 : index
    %49 = vector.load %arg7[%48, %c0_22, %c0_23] : memref<8x2x32xf32, #tpu.memory_space<vmem>>, vector<1x2x32xf32>
    %50 = vector.shape_cast %49 : vector<1x2x32xf32> to vector<2x32xf32>
    %51 = vector.shape_cast %47 : vector<2x32xf32> to vector<1x2x32xf32>
    tpu.vector_store %arg7[%48, %c0_22, %c0_23], %51 {strides = array<i32>} : memref<8x2x32xf32, #tpu.memory_space<vmem>>, vector<1x2x32xf32>,
    %c1_i32 = arith.constant 1 : i32
    %c0_24 = arith.constant 0 : index
    %52 = arith.index_cast %c1_i32 : i32 to index
    %c0_25 = arith.constant 0 : index
    %c0_26 = arith.constant 0 : index
    %53 = vector.load %arg2[%c0_24, %52, %c0_25, %c0_26] : memref<3x8x2x32xf32, #tpu.memory_space<vmem>>, vector<1x1x2x32xf32>
    %54 = vector.shape_cast %53 : vector<1x1x2x32xf32> to vector<2x32xf32>
    %c1_27 = arith.constant 1 : index
    %55 = arith.index_cast %c1_i32 : i32 to index
    %c0_28 = arith.constant 0 : index
    %c0_29 = arith.constant 0 : index
    %56 = vector.load %arg2[%c1_27, %55, %c0_28, %c0_29] : memref<3x8x2x32xf32, #tpu.memory_space<vmem>>, vector<1x1x2x32xf32>
    %57 = vector.shape_cast %56 : vector<1x1x2x32xf32> to vector<2x32xf32>
    %c2_30 = arith.constant 2 : index
    %58 = arith.index_cast %c1_i32 : i32 to index
    %c0_31 = arith.constant 0 : index
    %c0_32 = arith.constant 0 : index
    %59 = vector.load %arg2[%c2_30, %58, %c0_31, %c0_32] : memref<3x8x2x32xf32, #tpu.memory_space<vmem>>, vector<1x1x2x32xf32>
    %60 = vector.shape_cast %59 : vector<1x1x2x32xf32> to vector<2x32xf32>
    %61 = vector.broadcast %3 : vector<1x32xf32> to vector<2x32xf32>
    %62 = arith.mulf %39, %61 : vector<2x32xf32>
    %63 = arith.addf %57, %62 : vector<2x32xf32>
    %64 = vector.broadcast %5 : vector<1x32xf32> to vector<2x32xf32>
    %65 = arith.addf %63, %64 : vector<2x32xf32>
    %66 = arith.negf %65 : vector<2x32xf32>
    %67 = math.exp %66 : vector<2x32xf32>
    %cst_33 = arith.constant 1.000000e+00 : f32
    %68 = vector.broadcast %cst_33 : f32 to vector<2x32xf32>
    %69 = arith.addf %68, %67 : vector<2x32xf32>
    %70 = arith.divf %68, %69 : vector<2x32xf32>
    %71 = vector.broadcast %4 : vector<1x32xf32> to vector<2x32xf32>
    %72 = arith.mulf %39, %71 : vector<2x32xf32>
    %73 = arith.addf %60, %72 : vector<2x32xf32>
    %74 = vector.broadcast %6 : vector<1x32xf32> to vector<2x32xf32>
    %75 = arith.addf %73, %74 : vector<2x32xf32>
    %76 = arith.negf %75 : vector<2x32xf32>
    %77 = math.exp %76 : vector<2x32xf32>
    %cst_34 = arith.constant 1.000000e+00 : f32
    %78 = vector.broadcast %cst_34 : f32 to vector<2x32xf32>
    %79 = arith.addf %78, %77 : vector<2x32xf32>
    %80 = arith.divf %78, %79 : vector<2x32xf32>
    %81 = arith.subf %39, %54 : vector<2x32xf32>
    %82 = arith.mulf %81, %70 : vector<2x32xf32>
    %83 = arith.addf %54, %82 : vector<2x32xf32>
    %84 = arith.index_cast %c1_i32 : i32 to index
    %c0_35 = arith.constant 0 : index
    %c0_36 = arith.constant 0 : index
    %85 = vector.load %arg6[%84, %c0_35, %c0_36] : memref<8x2x32xf32, #tpu.memory_space<vmem>>, vector<1x2x32xf32>
    %86 = vector.shape_cast %85 : vector<1x2x32xf32> to vector<2x32xf32>
    %cst_37 = arith.constant 1.73205078 : f32
    %87 = vector.broadcast %cst_37 : f32 to vector<2x32xf32>
    %88 = arith.mulf %86, %87 : vector<2x32xf32>
    %89 = arith.subf %83, %88 : vector<2x32xf32>
    %90 = arith.mulf %89, %80 : vector<2x32xf32>
    %91 = arith.addf %90, %88 : vector<2x32xf32>
    %92 = arith.index_cast %c1_i32 : i32 to index
    %c0_38 = arith.constant 0 : index
    %c0_39 = arith.constant 0 : index
    %93 = vector.load %arg7[%92, %c0_38, %c0_39] : memref<8x2x32xf32, #tpu.memory_space<vmem>>, vector<1x2x32xf32>
    %94 = vector.shape_cast %93 : vector<1x2x32xf32> to vector<2x32xf32>
    %95 = vector.shape_cast %91 : vector<2x32xf32> to vector<1x2x32xf32>
    tpu.vector_store %arg7[%92, %c0_38, %c0_39], %95 {strides = array<i32>} : memref<8x2x32xf32, #tpu.memory_space<vmem>>, vector<1x2x32xf32>,
    %c2_i32 = arith.constant 2 : i32
    %c0_40 = arith.constant 0 : index
    %96 = arith.index_cast %c2_i32 : i32 to index
    %c0_41 = arith.constant 0 : index
    %c0_42 = arith.constant 0 : index
    %97 = vector.load %arg2[%c0_40, %96, %c0_41, %c0_42] : memref<3x8x2x32xf32, #tpu.memory_space<vmem>>, vector<1x1x2x32xf32>
    %98 = vector.shape_cast %97 : vector<1x1x2x32xf32> to vector<2x32xf32>
    %c1_43 = arith.constant 1 : index
    %99 = arith.index_cast %c2_i32 : i32 to index
    %c0_44 = arith.constant 0 : index
    %c0_45 = arith.constant 0 : index
    %100 = vector.load %arg2[%c1_43, %99, %c0_44, %c0_45] : memref<3x8x2x32xf32, #tpu.memory_space<vmem>>, vector<1x1x2x32xf32>
    %101 = vector.shape_cast %100 : vector<1x1x2x32xf32> to vector<2x32xf32>
    %c2_46 = arith.constant 2 : index
    %102 = arith.index_cast %c2_i32 : i32 to index
    %c0_47 = arith.constant 0 : index
    %c0_48 = arith.constant 0 : index
    %103 = vector.load %arg2[%c2_46, %102, %c0_47, %c0_48] : memref<3x8x2x32xf32, #tpu.memory_space<vmem>>, vector<1x1x2x32xf32>
    %104 = vector.shape_cast %103 : vector<1x1x2x32xf32> to vector<2x32xf32>
    %105 = vector.broadcast %3 : vector<1x32xf32> to vector<2x32xf32>
    %106 = arith.mulf %83, %105 : vector<2x32xf32>
    %107 = arith.addf %101, %106 : vector<2x32xf32>
    %108 = vector.broadcast %5 : vector<1x32xf32> to vector<2x32xf32>
    %109 = arith.addf %107, %108 : vector<2x32xf32>
    %110 = arith.negf %109 : vector<2x32xf32>
    %111 = math.exp %110 : vector<2x32xf32>
    %cst_49 = arith.constant 1.000000e+00 : f32
    %112 = vector.broadcast %cst_49 : f32 to vector<2x32xf32>
    %113 = arith.addf %112, %111 : vector<2x32xf32>
    %114 = arith.divf %112, %113 : vector<2x32xf32>
    %115 = vector.broadcast %4 : vector<1x32xf32> to vector<2x32xf32>
    %116 = arith.mulf %83, %115 : vector<2x32xf32>
    %117 = arith.addf %104, %116 : vector<2x32xf32>
    %118 = vector.broadcast %6 : vector<1x32xf32> to vector<2x32xf32>
    %119 = arith.addf %117, %118 : vector<2x32xf32>
    %120 = arith.negf %119 : vector<2x32xf32>
    %121 = math.exp %120 : vector<2x32xf32>
    %cst_50 = arith.constant 1.000000e+00 : f32
    %122 = vector.broadcast %cst_50 : f32 to vector<2x32xf32>
    %123 = arith.addf %122, %121 : vector<2x32xf32>
    %124 = arith.divf %122, %123 : vector<2x32xf32>
    %125 = arith.subf %83, %98 : vector<2x32xf32>
    %126 = arith.mulf %125, %114 : vector<2x32xf32>
    %127 = arith.addf %98, %126 : vector<2x32xf32>
    %128 = arith.index_cast %c2_i32 : i32 to index
    %c0_51 = arith.constant 0 : index
    %c0_52 = arith.constant 0 : index
    %129 = vector.load %arg6[%128, %c0_51, %c0_52] : memref<8x2x32xf32, #tpu.memory_space<vmem>>, vector<1x2x32xf32>
    %130 = vector.shape_cast %129 : vector<1x2x32xf32> to vector<2x32xf32>
    %cst_53 = arith.constant 1.73205078 : f32
    %131 = vector.broadcast %cst_53 : f32 to vector<2x32xf32>
    %132 = arith.mulf %130, %131 : vector<2x32xf32>
    %133 = arith.subf %127, %132 : vector<2x32xf32>
    %134 = arith.mulf %133, %124 : vector<2x32xf32>
    %135 = arith.addf %134, %132 : vector<2x32xf32>
    %136 = arith.index_cast %c2_i32 : i32 to index
    %c0_54 = arith.constant 0 : index
    %c0_55 = arith.constant 0 : index
    %137 = vector.load %arg7[%136, %c0_54, %c0_55] : memref<8x2x32xf32, #tpu.memory_space<vmem>>, vector<1x2x32xf32>
    %138 = vector.shape_cast %137 : vector<1x2x32xf32> to vector<2x32xf32>
    %139 = vector.shape_cast %135 : vector<2x32xf32> to vector<1x2x32xf32>
    tpu.vector_store %arg7[%136, %c0_54, %c0_55], %139 {strides = array<i32>} : memref<8x2x32xf32, #tpu.memory_space<vmem>>, vector<1x2x32xf32>,
    %c3_i32 = arith.constant 3 : i32
    %c0_56 = arith.constant 0 : index
    %140 = arith.index_cast %c3_i32 : i32 to index
    %c0_57 = arith.constant 0 : index
    %c0_58 = arith.constant 0 : index
    %141 = vector.load %arg2[%c0_56, %140, %c0_57, %c0_58] : memref<3x8x2x32xf32, #tpu.memory_space<vmem>>, vector<1x1x2x32xf32>
    %142 = vector.shape_cast %141 : vector<1x1x2x32xf32> to vector<2x32xf32>
    %c1_59 = arith.constant 1 : index
    %143 = arith.index_cast %c3_i32 : i32 to index
    %c0_60 = arith.constant 0 : index
    %c0_61 = arith.constant 0 : index
    %144 = vector.load %arg2[%c1_59, %143, %c0_60, %c0_61] : memref<3x8x2x32xf32, #tpu.memory_space<vmem>>, vector<1x1x2x32xf32>
    %145 = vector.shape_cast %144 : vector<1x1x2x32xf32> to vector<2x32xf32>
    %c2_62 = arith.constant 2 : index
    %146 = arith.index_cast %c3_i32 : i32 to index
    %c0_63 = arith.constant 0 : index
    %c0_64 = arith.constant 0 : index
    %147 = vector.load %arg2[%c2_62, %146, %c0_63, %c0_64] : memref<3x8x2x32xf32, #tpu.memory_space<vmem>>, vector<1x1x2x32xf32>
    %148 = vector.shape_cast %147 : vector<1x1x2x32xf32> to vector<2x32xf32>
    %149 = vector.broadcast %3 : vector<1x32xf32> to vector<2x32xf32>
    %150 = arith.mulf %127, %149 : vector<2x32xf32>
    %151 = arith.addf %145, %150 : vector<2x32xf32>
    %152 = vector.broadcast %5 : vector<1x32xf32> to vector<2x32xf32>
    %153 = arith.addf %151, %152 : vector<2x32xf32>
    %154 = arith.negf %153 : vector<2x32xf32>
    %155 = math.exp %154 : vector<2x32xf32>
    %cst_65 = arith.constant 1.000000e+00 : f32
    %156 = vector.broadcast %cst_65 : f32 to vector<2x32xf32>
    %157 = arith.addf %156, %155 : vector<2x32xf32>
    %158 = arith.divf %156, %157 : vector<2x32xf32>
    %159 = vector.broadcast %4 : vector<1x32xf32> to vector<2x32xf32>
    %160 = arith.mulf %127, %159 : vector<2x32xf32>
    %161 = arith.addf %148, %160 : vector<2x32xf32>
    %162 = vector.broadcast %6 : vector<1x32xf32> to vector<2x32xf32>
    %163 = arith.addf %161, %162 : vector<2x32xf32>
    %164 = arith.negf %163 : vector<2x32xf32>
    %165 = math.exp %164 : vector<2x32xf32>
    %cst_66 = arith.constant 1.000000e+00 : f32
    %166 = vector.broadcast %cst_66 : f32 to vector<2x32xf32>
    %167 = arith.addf %166, %165 : vector<2x32xf32>
    %168 = arith.divf %166, %167 : vector<2x32xf32>
    %169 = arith.subf %127, %142 : vector<2x32xf32>
    %170 = arith.mulf %169, %158 : vector<2x32xf32>
    %171 = arith.addf %142, %170 : vector<2x32xf32>
    %172 = arith.index_cast %c3_i32 : i32 to index
    %c0_67 = arith.constant 0 : index
    %c0_68 = arith.constant 0 : index
    %173 = vector.load %arg6[%172, %c0_67, %c0_68] : memref<8x2x32xf32, #tpu.memory_space<vmem>>, vector<1x2x32xf32>
    %174 = vector.shape_cast %173 : vector<1x2x32xf32> to vector<2x32xf32>
    %cst_69 = arith.constant 1.73205078 : f32
    %175 = vector.broadcast %cst_69 : f32 to vector<2x32xf32>
    %176 = arith.mulf %174, %175 : vector<2x32xf32>
    %177 = arith.subf %171, %176 : vector<2x32xf32>
    %178 = arith.mulf %177, %168 : vector<2x32xf32>
    %179 = arith.addf %178, %176 : vector<2x32xf32>
    %180 = arith.index_cast %c3_i32 : i32 to index
    %c0_70 = arith.constant 0 : index
    %c0_71 = arith.constant 0 : index
    %181 = vector.load %arg7[%180, %c0_70, %c0_71] : memref<8x2x32xf32, #tpu.memory_space<vmem>>, vector<1x2x32xf32>
    %182 = vector.shape_cast %181 : vector<1x2x32xf32> to vector<2x32xf32>
    %183 = vector.shape_cast %179 : vector<2x32xf32> to vector<1x2x32xf32>
    tpu.vector_store %arg7[%180, %c0_70, %c0_71], %183 {strides = array<i32>} : memref<8x2x32xf32, #tpu.memory_space<vmem>>, vector<1x2x32xf32>,
    %c4_i32 = arith.constant 4 : i32
    %c0_72 = arith.constant 0 : index
    %184 = arith.index_cast %c4_i32 : i32 to index
    %c0_73 = arith.constant 0 : index
    %c0_74 = arith.constant 0 : index
    %185 = vector.load %arg2[%c0_72, %184, %c0_73, %c0_74] : memref<3x8x2x32xf32, #tpu.memory_space<vmem>>, vector<1x1x2x32xf32>
    %186 = vector.shape_cast %185 : vector<1x1x2x32xf32> to vector<2x32xf32>
    %c1_75 = arith.constant 1 : index
    %187 = arith.index_cast %c4_i32 : i32 to index
    %c0_76 = arith.constant 0 : index
    %c0_77 = arith.constant 0 : index
    %188 = vector.load %arg2[%c1_75, %187, %c0_76, %c0_77] : memref<3x8x2x32xf32, #tpu.memory_space<vmem>>, vector<1x1x2x32xf32>
    %189 = vector.shape_cast %188 : vector<1x1x2x32xf32> to vector<2x32xf32>
    %c2_78 = arith.constant 2 : index
    %190 = arith.index_cast %c4_i32 : i32 to index
    %c0_79 = arith.constant 0 : index
    %c0_80 = arith.constant 0 : index
    %191 = vector.load %arg2[%c2_78, %190, %c0_79, %c0_80] : memref<3x8x2x32xf32, #tpu.memory_space<vmem>>, vector<1x1x2x32xf32>
    %192 = vector.shape_cast %191 : vector<1x1x2x32xf32> to vector<2x32xf32>
    %193 = vector.broadcast %3 : vector<1x32xf32> to vector<2x32xf32>
    %194 = arith.mulf %171, %193 : vector<2x32xf32>
    %195 = arith.addf %189, %194 : vector<2x32xf32>
    %196 = vector.broadcast %5 : vector<1x32xf32> to vector<2x32xf32>
    %197 = arith.addf %195, %196 : vector<2x32xf32>
    %198 = arith.negf %197 : vector<2x32xf32>
    %199 = math.exp %198 : vector<2x32xf32>
    %cst_81 = arith.constant 1.000000e+00 : f32
    %200 = vector.broadcast %cst_81 : f32 to vector<2x32xf32>
    %201 = arith.addf %200, %199 : vector<2x32xf32>
    %202 = arith.divf %200, %201 : vector<2x32xf32>
    %203 = vector.broadcast %4 : vector<1x32xf32> to vector<2x32xf32>
    %204 = arith.mulf %171, %203 : vector<2x32xf32>
    %205 = arith.addf %192, %204 : vector<2x32xf32>
    %206 = vector.broadcast %6 : vector<1x32xf32> to vector<2x32xf32>
    %207 = arith.addf %205, %206 : vector<2x32xf32>
    %208 = arith.negf %207 : vector<2x32xf32>
    %209 = math.exp %208 : vector<2x32xf32>
    %cst_82 = arith.constant 1.000000e+00 : f32
    %210 = vector.broadcast %cst_82 : f32 to vector<2x32xf32>
    %211 = arith.addf %210, %209 : vector<2x32xf32>
    %212 = arith.divf %210, %211 : vector<2x32xf32>
    %213 = arith.subf %171, %186 : vector<2x32xf32>
    %214 = arith.mulf %213, %202 : vector<2x32xf32>
    %215 = arith.addf %186, %214 : vector<2x32xf32>
    %216 = arith.index_cast %c4_i32 : i32 to index
    %c0_83 = arith.constant 0 : index
    %c0_84 = arith.constant 0 : index
    %217 = vector.load %arg6[%216, %c0_83, %c0_84] : memref<8x2x32xf32, #tpu.memory_space<vmem>>, vector<1x2x32xf32>
    %218 = vector.shape_cast %217 : vector<1x2x32xf32> to vector<2x32xf32>
    %cst_85 = arith.constant 1.73205078 : f32
    %219 = vector.broadcast %cst_85 : f32 to vector<2x32xf32>
    %220 = arith.mulf %218, %219 : vector<2x32xf32>
    %221 = arith.subf %215, %220 : vector<2x32xf32>
    %222 = arith.mulf %221, %212 : vector<2x32xf32>
    %223 = arith.addf %222, %220 : vector<2x32xf32>
    %224 = arith.index_cast %c4_i32 : i32 to index
    %c0_86 = arith.constant 0 : index
    %c0_87 = arith.constant 0 : index
    %225 = vector.load %arg7[%224, %c0_86, %c0_87] : memref<8x2x32xf32, #tpu.memory_space<vmem>>, vector<1x2x32xf32>
    %226 = vector.shape_cast %225 : vector<1x2x32xf32> to vector<2x32xf32>
    %227 = vector.shape_cast %223 : vector<2x32xf32> to vector<1x2x32xf32>
    tpu.vector_store %arg7[%224, %c0_86, %c0_87], %227 {strides = array<i32>} : memref<8x2x32xf32, #tpu.memory_space<vmem>>, vector<1x2x32xf32>,
    %c5_i32 = arith.constant 5 : i32
    %c0_88 = arith.constant 0 : index
    %228 = arith.index_cast %c5_i32 : i32 to index
    %c0_89 = arith.constant 0 : index
    %c0_90 = arith.constant 0 : index
    %229 = vector.load %arg2[%c0_88, %228, %c0_89, %c0_90] : memref<3x8x2x32xf32, #tpu.memory_space<vmem>>, vector<1x1x2x32xf32>
    %230 = vector.shape_cast %229 : vector<1x1x2x32xf32> to vector<2x32xf32>
    %c1_91 = arith.constant 1 : index
    %231 = arith.index_cast %c5_i32 : i32 to index
    %c0_92 = arith.constant 0 : index
    %c0_93 = arith.constant 0 : index
    %232 = vector.load %arg2[%c1_91, %231, %c0_92, %c0_93] : memref<3x8x2x32xf32, #tpu.memory_space<vmem>>, vector<1x1x2x32xf32>
    %233 = vector.shape_cast %232 : vector<1x1x2x32xf32> to vector<2x32xf32>
    %c2_94 = arith.constant 2 : index
    %234 = arith.index_cast %c5_i32 : i32 to index
    %c0_95 = arith.constant 0 : index
    %c0_96 = arith.constant 0 : index
    %235 = vector.load %arg2[%c2_94, %234, %c0_95, %c0_96] : memref<3x8x2x32xf32, #tpu.memory_space<vmem>>, vector<1x1x2x32xf32>
    %236 = vector.shape_cast %235 : vector<1x1x2x32xf32> to vector<2x32xf32>
    %237 = vector.broadcast %3 : vector<1x32xf32> to vector<2x32xf32>
    %238 = arith.mulf %215, %237 : vector<2x32xf32>
    %239 = arith.addf %233, %238 : vector<2x32xf32>
    %240 = vector.broadcast %5 : vector<1x32xf32> to vector<2x32xf32>
    %241 = arith.addf %239, %240 : vector<2x32xf32>
    %242 = arith.negf %241 : vector<2x32xf32>
    %243 = math.exp %242 : vector<2x32xf32>
    %cst_97 = arith.constant 1.000000e+00 : f32
    %244 = vector.broadcast %cst_97 : f32 to vector<2x32xf32>
    %245 = arith.addf %244, %243 : vector<2x32xf32>
    %246 = arith.divf %244, %245 : vector<2x32xf32>
    %247 = vector.broadcast %4 : vector<1x32xf32> to vector<2x32xf32>
    %248 = arith.mulf %215, %247 : vector<2x32xf32>
    %249 = arith.addf %236, %248 : vector<2x32xf32>
    %250 = vector.broadcast %6 : vector<1x32xf32> to vector<2x32xf32>
    %251 = arith.addf %249, %250 : vector<2x32xf32>
    %252 = arith.negf %251 : vector<2x32xf32>
    %253 = math.exp %252 : vector<2x32xf32>
    %cst_98 = arith.constant 1.000000e+00 : f32
    %254 = vector.broadcast %cst_98 : f32 to vector<2x32xf32>
    %255 = arith.addf %254, %253 : vector<2x32xf32>
    %256 = arith.divf %254, %255 : vector<2x32xf32>
    %257 = arith.subf %215, %230 : vector<2x32xf32>
    %258 = arith.mulf %257, %246 : vector<2x32xf32>
    %259 = arith.addf %230, %258 : vector<2x32xf32>
    %260 = arith.index_cast %c5_i32 : i32 to index
    %c0_99 = arith.constant 0 : index
    %c0_100 = arith.constant 0 : index
    %261 = vector.load %arg6[%260, %c0_99, %c0_100] : memref<8x2x32xf32, #tpu.memory_space<vmem>>, vector<1x2x32xf32>
    %262 = vector.shape_cast %261 : vector<1x2x32xf32> to vector<2x32xf32>
    %cst_101 = arith.constant 1.73205078 : f32
    %263 = vector.broadcast %cst_101 : f32 to vector<2x32xf32>
    %264 = arith.mulf %262, %263 : vector<2x32xf32>
    %265 = arith.subf %259, %264 : vector<2x32xf32>
    %266 = arith.mulf %265, %256 : vector<2x32xf32>
    %267 = arith.addf %266, %264 : vector<2x32xf32>
    %268 = arith.index_cast %c5_i32 : i32 to index
    %c0_102 = arith.constant 0 : index
    %c0_103 = arith.constant 0 : index
    %269 = vector.load %arg7[%268, %c0_102, %c0_103] : memref<8x2x32xf32, #tpu.memory_space<vmem>>, vector<1x2x32xf32>
    %270 = vector.shape_cast %269 : vector<1x2x32xf32> to vector<2x32xf32>
    %271 = vector.shape_cast %267 : vector<2x32xf32> to vector<1x2x32xf32>
    tpu.vector_store %arg7[%268, %c0_102, %c0_103], %271 {strides = array<i32>} : memref<8x2x32xf32, #tpu.memory_space<vmem>>, vector<1x2x32xf32>,
    %c6_i32 = arith.constant 6 : i32
    %c0_104 = arith.constant 0 : index
    %272 = arith.index_cast %c6_i32 : i32 to index
    %c0_105 = arith.constant 0 : index
    %c0_106 = arith.constant 0 : index
    %273 = vector.load %arg2[%c0_104, %272, %c0_105, %c0_106] : memref<3x8x2x32xf32, #tpu.memory_space<vmem>>, vector<1x1x2x32xf32>
    %274 = vector.shape_cast %273 : vector<1x1x2x32xf32> to vector<2x32xf32>
    %c1_107 = arith.constant 1 : index
    %275 = arith.index_cast %c6_i32 : i32 to index
    %c0_108 = arith.constant 0 : index
    %c0_109 = arith.constant 0 : index
    %276 = vector.load %arg2[%c1_107, %275, %c0_108, %c0_109] : memref<3x8x2x32xf32, #tpu.memory_space<vmem>>, vector<1x1x2x32xf32>
    %277 = vector.shape_cast %276 : vector<1x1x2x32xf32> to vector<2x32xf32>
    %c2_110 = arith.constant 2 : index
    %278 = arith.index_cast %c6_i32 : i32 to index
    %c0_111 = arith.constant 0 : index
    %c0_112 = arith.constant 0 : index
    %279 = vector.load %arg2[%c2_110, %278, %c0_111, %c0_112] : memref<3x8x2x32xf32, #tpu.memory_space<vmem>>, vector<1x1x2x32xf32>
    %280 = vector.shape_cast %279 : vector<1x1x2x32xf32> to vector<2x32xf32>
    %281 = vector.broadcast %3 : vector<1x32xf32> to vector<2x32xf32>
    %282 = arith.mulf %259, %281 : vector<2x32xf32>
    %283 = arith.addf %277, %282 : vector<2x32xf32>
    %284 = vector.broadcast %5 : vector<1x32xf32> to vector<2x32xf32>
    %285 = arith.addf %283, %284 : vector<2x32xf32>
    %286 = arith.negf %285 : vector<2x32xf32>
    %287 = math.exp %286 : vector<2x32xf32>
    %cst_113 = arith.constant 1.000000e+00 : f32
    %288 = vector.broadcast %cst_113 : f32 to vector<2x32xf32>
    %289 = arith.addf %288, %287 : vector<2x32xf32>
    %290 = arith.divf %288, %289 : vector<2x32xf32>
    %291 = vector.broadcast %4 : vector<1x32xf32> to vector<2x32xf32>
    %292 = arith.mulf %259, %291 : vector<2x32xf32>
    %293 = arith.addf %280, %292 : vector<2x32xf32>
    %294 = vector.broadcast %6 : vector<1x32xf32> to vector<2x32xf32>
    %295 = arith.addf %293, %294 : vector<2x32xf32>
    %296 = arith.negf %295 : vector<2x32xf32>
    %297 = math.exp %296 : vector<2x32xf32>
    %cst_114 = arith.constant 1.000000e+00 : f32
    %298 = vector.broadcast %cst_114 : f32 to vector<2x32xf32>
    %299 = arith.addf %298, %297 : vector<2x32xf32>
    %300 = arith.divf %298, %299 : vector<2x32xf32>
    %301 = arith.subf %259, %274 : vector<2x32xf32>
    %302 = arith.mulf %301, %290 : vector<2x32xf32>
    %303 = arith.addf %274, %302 : vector<2x32xf32>
    %304 = arith.index_cast %c6_i32 : i32 to index
    %c0_115 = arith.constant 0 : index
    %c0_116 = arith.constant 0 : index
    %305 = vector.load %arg6[%304, %c0_115, %c0_116] : memref<8x2x32xf32, #tpu.memory_space<vmem>>, vector<1x2x32xf32>
    %306 = vector.shape_cast %305 : vector<1x2x32xf32> to vector<2x32xf32>
    %cst_117 = arith.constant 1.73205078 : f32
    %307 = vector.broadcast %cst_117 : f32 to vector<2x32xf32>
    %308 = arith.mulf %306, %307 : vector<2x32xf32>
    %309 = arith.subf %303, %308 : vector<2x32xf32>
    %310 = arith.mulf %309, %300 : vector<2x32xf32>
    %311 = arith.addf %310, %308 : vector<2x32xf32>
    %312 = arith.index_cast %c6_i32 : i32 to index
    %c0_118 = arith.constant 0 : index
    %c0_119 = arith.constant 0 : index
    %313 = vector.load %arg7[%312, %c0_118, %c0_119] : memref<8x2x32xf32, #tpu.memory_space<vmem>>, vector<1x2x32xf32>
    %314 = vector.shape_cast %313 : vector<1x2x32xf32> to vector<2x32xf32>
    %315 = vector.shape_cast %311 : vector<2x32xf32> to vector<1x2x32xf32>
    tpu.vector_store %arg7[%312, %c0_118, %c0_119], %315 {strides = array<i32>} : memref<8x2x32xf32, #tpu.memory_space<vmem>>, vector<1x2x32xf32>,
    %c7_i32 = arith.constant 7 : i32
    %c0_120 = arith.constant 0 : index
    %316 = arith.index_cast %c7_i32 : i32 to index
    %c0_121 = arith.constant 0 : index
    %c0_122 = arith.constant 0 : index
    %317 = vector.load %arg2[%c0_120, %316, %c0_121, %c0_122] : memref<3x8x2x32xf32, #tpu.memory_space<vmem>>, vector<1x1x2x32xf32>
    %318 = vector.shape_cast %317 : vector<1x1x2x32xf32> to vector<2x32xf32>
    %c1_123 = arith.constant 1 : index
    %319 = arith.index_cast %c7_i32 : i32 to index
    %c0_124 = arith.constant 0 : index
    %c0_125 = arith.constant 0 : index
    %320 = vector.load %arg2[%c1_123, %319, %c0_124, %c0_125] : memref<3x8x2x32xf32, #tpu.memory_space<vmem>>, vector<1x1x2x32xf32>
    %321 = vector.shape_cast %320 : vector<1x1x2x32xf32> to vector<2x32xf32>
    %c2_126 = arith.constant 2 : index
    %322 = arith.index_cast %c7_i32 : i32 to index
    %c0_127 = arith.constant 0 : index
    %c0_128 = arith.constant 0 : index
    %323 = vector.load %arg2[%c2_126, %322, %c0_127, %c0_128] : memref<3x8x2x32xf32, #tpu.memory_space<vmem>>, vector<1x1x2x32xf32>
    %324 = vector.shape_cast %323 : vector<1x1x2x32xf32> to vector<2x32xf32>
    %325 = vector.broadcast %3 : vector<1x32xf32> to vector<2x32xf32>
    %326 = arith.mulf %303, %325 : vector<2x32xf32>
    %327 = arith.addf %321, %326 : vector<2x32xf32>
    %328 = vector.broadcast %5 : vector<1x32xf32> to vector<2x32xf32>
    %329 = arith.addf %327, %328 : vector<2x32xf32>
    %330 = arith.negf %329 : vector<2x32xf32>
    %331 = math.exp %330 : vector<2x32xf32>
    %cst_129 = arith.constant 1.000000e+00 : f32
    %332 = vector.broadcast %cst_129 : f32 to vector<2x32xf32>
    %333 = arith.addf %332, %331 : vector<2x32xf32>
    %334 = arith.divf %332, %333 : vector<2x32xf32>
    %335 = vector.broadcast %4 : vector<1x32xf32> to vector<2x32xf32>
    %336 = arith.mulf %303, %335 : vector<2x32xf32>
    %337 = arith.addf %324, %336 : vector<2x32xf32>
    %338 = vector.broadcast %6 : vector<1x32xf32> to vector<2x32xf32>
    %339 = arith.addf %337, %338 : vector<2x32xf32>
    %340 = arith.negf %339 : vector<2x32xf32>
    %341 = math.exp %340 : vector<2x32xf32>
    %cst_130 = arith.constant 1.000000e+00 : f32
    %342 = vector.broadcast %cst_130 : f32 to vector<2x32xf32>
    %343 = arith.addf %342, %341 : vector<2x32xf32>
    %344 = arith.divf %342, %343 : vector<2x32xf32>
    %345 = arith.subf %303, %318 : vector<2x32xf32>
    %346 = arith.mulf %345, %334 : vector<2x32xf32>
    %347 = arith.addf %318, %346 : vector<2x32xf32>
    %348 = arith.index_cast %c7_i32 : i32 to index
    %c0_131 = arith.constant 0 : index
    %c0_132 = arith.constant 0 : index
    %349 = vector.load %arg6[%348, %c0_131, %c0_132] : memref<8x2x32xf32, #tpu.memory_space<vmem>>, vector<1x2x32xf32>
    %350 = vector.shape_cast %349 : vector<1x2x32xf32> to vector<2x32xf32>
    %cst_133 = arith.constant 1.73205078 : f32
    %351 = vector.broadcast %cst_133 : f32 to vector<2x32xf32>
    %352 = arith.mulf %350, %351 : vector<2x32xf32>
    %353 = arith.subf %347, %352 : vector<2x32xf32>
    %354 = arith.mulf %353, %344 : vector<2x32xf32>
    %355 = arith.addf %354, %352 : vector<2x32xf32>
    %356 = arith.index_cast %c7_i32 : i32 to index
    %c0_134 = arith.constant 0 : index
    %c0_135 = arith.constant 0 : index
    %357 = vector.load %arg7[%356, %c0_134, %c0_135] : memref<8x2x32xf32, #tpu.memory_space<vmem>>, vector<1x2x32xf32>
    %358 = vector.shape_cast %357 : vector<1x2x32xf32> to vector<2x32xf32>
    %359 = vector.shape_cast %355 : vector<2x32xf32> to vector<1x2x32xf32>
    tpu.vector_store %arg7[%356, %c0_134, %c0_135], %359 {strides = array<i32>} : memref<8x2x32xf32, #tpu.memory_space<vmem>>, vector<1x2x32xf32>,
    %c8_i32 = arith.constant 8 : i32
    %c0_136 = arith.constant 0 : index
    %c0_137 = arith.constant 0 : index
    %360 = vector.load %arg8[%c0_136, %c0_137] : memref<2x32xf32, #tpu.memory_space<vmem>>, vector<2x32xf32>
    tpu.vector_store %arg8[%c0_136, %c0_137], %347 {strides = array<i32>} : memref<2x32xf32, #tpu.memory_space<vmem>>, vector<2x32xf32>,
    return
  }
  func.func @transform_0(%arg0: i32, %arg1: i32) -> (i32, i32, i32, i32) {
    %c0_i32 = arith.constant 0 : i32
    %c0_i32_0 = arith.constant 0 : i32
    %c0_i32_1 = arith.constant 0 : i32
    return %c0_i32, %arg1, %c0_i32_0, %arg0 : i32, i32, i32, i32
  }
  func.func @transform_1(%arg0: i32, %arg1: i32) -> (i32, i32) {
    %c0_i32 = arith.constant 0 : i32
    %c0_i32_0 = arith.constant 0 : i32
    return %c0_i32, %arg0 : i32, i32
  }
  func.func @transform_2(%arg0: i32, %arg1: i32) -> (i32, i32) {
    %c0_i32 = arith.constant 0 : i32
    %c0_i32_0 = arith.constant 0 : i32
    return %c0_i32, %arg0 : i32, i32
  }
  func.func @transform_3(%arg0: i32, %arg1: i32) -> (i32, i32) {
    %c0_i32 = arith.constant 0 : i32
    %c0_i32_0 = arith.constant 0 : i32
    return %c0_i32, %arg0 : i32, i32
  }
  func.func @transform_4(%arg0: i32, %arg1: i32) -> (i32, i32, i32) {
    %c0_i32 = arith.constant 0 : i32
    %c0_i32_0 = arith.constant 0 : i32
    return %arg1, %c0_i32, %arg0 : i32, i32, i32
  }
  func.func @transform_5(%arg0: i32, %arg1: i32) -> (i32, i32, i32) {
    %c0_i32 = arith.constant 0 : i32
    %c0_i32_0 = arith.constant 0 : i32
    return %arg1, %c0_i32, %arg0 : i32, i32, i32
  }
  func.func @transform_6(%arg0: i32, %arg1: i32) -> (i32, i32) {
    %c0_i32 = arith.constant 0 : i32
    %c0_i32_0 = arith.constant 0 : i32
    return %c0_i32, %arg0 : i32, i32
  }
}

</mosaic_0001>

<llo_original>
// kernel: _lambda_.6
$region0: #{_lambda_.6}
  #allocation0 [shape = 'u32[]', space=smem, size = 0x4, offset = 0x4, fixed_abs, tag = 'smem constant byte address 0x4 - core index']
  #allocation1 [shape = 'u32[72,128]{1,0:T(1,128)}', space=vmem, size = 0x9000, scoped, tag = 'internal scratch']
  #allocation2 [shape = 'f32[16,32]{1,0:T(8,128)}', space=vmem, size = 0x2000, scoped, tag = 'scratch operand']
  %s0 = inlined_call_operand.vmem [shape: f32[16,32], index: 0, kind: input, shape index: {}]
  %s1 = inlined_call_operand.hbm [shape: f32[3,32,32], index: 1, kind: input, shape index: {}]
  %s2 = inlined_call_operand.vmem [shape: f32[3,16,32], index: 2, kind: output, shape index: {}]
  %s3 = sld [smem:[#allocation0]]
  $region53: #{_lambda_.6} parent=0
    _
  %s5 = ssub.s32 1, %s3
  %s6 = scalar_select 0, %s5, %s3
  $region1: #{_lambda_.6} parent=0
    #allocation3 [shape = 'u8[32768]{0}', space=vmem, size = 0x8000, scoped, tag = 'input window, operand 1']
    #allocation4 [shape = 's32[2]{0}', space=sflag, size = 0x8, scoped, tag = 'scoped memory for _lambda_.6']
    %7 = vsyncpa [#allocation4], 0
    %s8 = scalar_lea.sflag [#allocation4], 1
    %9 = vsyncpa %s8, 0
    loop: start=0, step=1, limit=5
    $region2: #{_lambda_.6} parent=1 // loop_pre_header
      _
    $region3: #{_lambda_.6} parent=1 // loop_header
      %s11 = sphi 0, %s15
      %p12 = scmp.ge.s32.totalorder %s11, 5
      %s18 = sphi 0, %s44
      %s19 = sphi 0, %s40
      %s20 = sphi 0, %s36
      %s21 = sphi 0, %s32
      %s22 = sphi 0, %s18
      %s23 = sphi 0, %s19
      %s24 = sphi 0, %s20
      %s25 = sphi 0, %s21
      %s26 = sphi 0, %s22
      %s27 = sphi 0, %s23
      %s28 = sphi 0, %s24
      %s29 = sphi 0, %s25
      %s49 = sphi 0, %s51
      %s52 = sphi 0, %s49
      %s53 = sphi 0, %s52
      %s69 = sphi 0, %s53
      %s79 = sphi 0, %s81
      %s82 = sphi 0, %s79
      %s83 = sphi 0, %s82
      %s99 = sphi 0, %s83
      %s109 = sphi 0, %s111
      %s112 = sphi 0, %s109
      %s113 = sphi 0, %s112
      %s129 = sphi 0, %s113
    $region4: #{_lambda_.6} parent=1 // loop_header_branch
      %14 = sbr.rel (%p12) target = $region8
    $region5: #{_lambda_.6} parent=1 // loop_body
      %s16 = ssub.s32 %s11, 1
      %s17 = ssub.s32 %s11, 2
      %s30 = sadd.s32 1, %s21
      %p31 = scmp.ge.s32.totalorder %s30, 1
      %s32 = scalar_select %p31, 0, %s30
      %s33 = sadd.s32 1, %s20
      %s34 = scalar_select %p31, %s33, %s20
      %p35 = scmp.ge.s32.totalorder %s34, 1
      %s36 = scalar_select %p35, 0, %s34
      %s37 = sadd.s32 1, %s19
      %s38 = scalar_select %p35, %s37, %s19
      %p39 = scmp.ge.s32.totalorder %s38, 1
      %s40 = scalar_select %p39, 0, %s38
      %s41 = sadd.s32 1, %s18
      %s42 = scalar_select %p39, %s41, %s18
      %p43 = scmp.ge.s32.totalorder %s42, 3
      %s44 = scalar_select %p43, 0, %s42
      %s45 = ssub.s32 %s19, %s40
      %s46 = ssub.s32 %s21, %s32
      %s47 = sor.u32 %s45, %s46
      %p48 = scmp.eq.s32.totalorder %s47, 0
      %s50 = sadd.s32 %s49, 1
      %s51 = scalar_select %p48, %s49, %s50
      %p54 = pneg %p48
      %p55 = scmp.eq.s32.totalorder %s11, 2
      %p56 = por %p54, %p55
      %p57 = scmp.ne.s32.totalorder %s49, %s52
      %p58 = scmp.eq.s32.totalorder %s11, 0
      %p59 = por %p57, %p58
      %p60 = scmp.ne.s32.totalorder %s49, %s52
      %p61 = scmp.eq.s32.totalorder %s16, 2
      %p62 = por %p60, %p61
      %p63 = scmp.ne.s32.totalorder %s52, %s53
      %p64 = scmp.eq.s32.totalorder %s16, 0
      %p65 = por %p63, %p64
      %p66 = scmp.ne.s32.totalorder %s52, %s53
      %p67 = scmp.eq.s32.totalorder %s17, 2
      %p68 = por %p66, %p67
      %p70 = scmp.ne.s32.totalorder %s53, %s69
      %p71 = scmp.eq.s32.totalorder %s17, 0
      %p72 = por %p70, %p71
      %s73 = ssub.s32 %s18, %s44
      %s74 = ssub.s32 %s21, %s32
      %s75 = sor.u32 %s73, %s74
      %s76 = ssub.s32 %s20, %s36
      %s77 = sor.u32 %s75, %s76
      %p78 = scmp.eq.s32.totalorder %s77, 0
      %s80 = sadd.s32 %s79, 1
      %s81 = scalar_select %p78, %s79, %s80
      %p84 = pneg %p78
      %p85 = scmp.eq.s32.totalorder %s11, 2
      %p86 = por %p84, %p85
      %p87 = scmp.ne.s32.totalorder %s79, %s82
      %p88 = scmp.eq.s32.totalorder %s11, 0
      %p89 = por %p87, %p88
      %p90 = scmp.ne.s32.totalorder %s79, %s82
      %p91 = scmp.eq.s32.totalorder %s16, 2
      %p92 = por %p90, %p91
      %p93 = scmp.ne.s32.totalorder %s82, %s83
      %p94 = scmp.eq.s32.totalorder %s16, 0
      %p95 = por %p93, %p94
      %p96 = scmp.ne.s32.totalorder %s82, %s83
      %p97 = scmp.eq.s32.totalorder %s17, 2
      %p98 = por %p96, %p97
      %p100 = scmp.ne.s32.totalorder %s83, %s99
      %p101 = scmp.eq.s32.totalorder %s17, 0
      %p102 = por %p100, %p101
      %s103 = ssub.s32 %s18, %s44
      %s104 = ssub.s32 %s19, %s40
      %s105 = sor.u32 %s103, %s104
      %s106 = ssub.s32 %s20, %s36
      %s107 = sor.u32 %s105, %s106
      %p108 = scmp.eq.s32.totalorder %s107, 0
      %s110 = sadd.s32 %s109, 1
      %s111 = scalar_select %p108, %s109, %s110
      %p114 = pneg %p108
      %p115 = scmp.eq.s32.totalorder %s11, 2
      %p116 = por %p114, %p115
      %p117 = scmp.ne.s32.totalorder %s109, %s112
      %p118 = scmp.eq.s32.totalorder %s11, 0
      %p119 = por %p117, %p118
      %p120 = scmp.ne.s32.totalorder %s109, %s112
      %p121 = scmp.eq.s32.totalorder %s16, 2
      %p122 = por %p120, %p121
      %p123 = scmp.ne.s32.totalorder %s112, %s113
      %p124 = scmp.eq.s32.totalorder %s16, 0
      %p125 = por %p123, %p124
      %p126 = scmp.ne.s32.totalorder %s112, %s113
      %p127 = scmp.eq.s32.totalorder %s17, 2
      %p128 = por %p126, %p127
      %p130 = scmp.ne.s32.totalorder %s113, %s129
      %p131 = scmp.eq.s32.totalorder %s17, 0
      %p132 = por %p130, %p131
      %p133 = scmp.le.s32.totalorder 1, %s11
      %p134 = scmp.lt.s32.totalorder %s11, 4
      %p135 = pnand %p133, %p134
      %p136 = pneg %p135
      // Predicated region
      $region9: #{_lambda_.6} parent=5 // pred_check
        _
      $region10: #{_lambda_.6} parent=5 // pred_check_branch
        %138 = sbr.rel (%p135) target = $region12
      $region11: #{_lambda_.6} parent=5 // pred_region
        %s139 = ssub.s32 %s11, 1
        // Predicated region
        $region13: #{_lambda_.6} parent=11 // pred_check
          %p140 = pneg %p65
        $region14: #{_lambda_.6} parent=11 // pred_check_branch
          %142 = sbr.rel (%p140) target = $region16
        $region15: #{_lambda_.6} parent=11 // pred_region
          %s143 = smul.u32 2, %s23
          %p144 = scmp.lt.s32.totalorder %s143, 1
          %s145 = scalar_select %p144, %s143, 1
          %p146 = scmp.lt.s32.totalorder %s25, 0
          %s147 = scalar_select %p146, %s25, 0
          %s148 = sadd.s32 %s147, %s145
          %s149 = smul.addr %s148, 8
          %s150 = scalar_lea.vmem %s0, %s149
          %s151 = smul.u32 2, %s23
        $region16: #{_lambda_.6} parent=11 // pred_fallthru
          _
      $region12: #{_lambda_.6} parent=5 // pred_fallthru
        _
      %p152 = scmp.lt.s32.totalorder %s11, 3
      // Predicated region
      $region17: #{_lambda_.6} parent=5 // pred_check
        %p153 = pneg %p152
      $region18: #{_lambda_.6} parent=5 // pred_check_branch
        %155 = sbr.rel (%p153) target = $region20
      $region19: #{_lambda_.6} parent=5 // pred_region
        // Predicated region
        $region21: #{_lambda_.6} parent=19 // pred_check
          %p156 = pneg %p89
        $region22: #{_lambda_.6} parent=19 // pred_check_branch
          %158 = sbr.rel (%p156) target = $region24
        $region23: #{_lambda_.6} parent=19 // pred_region
          %s159 = sand.u32 %s79, 1
          %s160 = scalar_lea.sflag [#allocation4], %s159
          %s161 = sand.u32 %s79, 1
          %s162 = smul.addr %s161, 32
          %s163 = scalar_lea.vmem [#allocation3], %s162
          %s164 = smul.u32 4, %s21
          %166 = vsyncadd %s160, 0
          %s167 = sadd.s32 %s20, %s164
          %s168 = smul.addr %s18, 4
          %s169 = sadd.s32 %s167, %s168
          %s170 = smul.addr %s169, 8
          %s171 = scalar_lea.hbm %s1, %s170
          %s172 = sshll.u32 %s171, 4
          %s173 = int_to_ptr.hbm [resolvable:$true] %s172
          %s174 = sshll.u32 %s163, 4
          %s175 = int_to_ptr.vmem [resolvable:$true] %s174
          %180 = dma.hbm_to_vmem [thread:$0]  %s173, 512, %s175, %s160, 128, 128, 8
        $region24: #{_lambda_.6} parent=19 // pred_fallthru
          _
      $region20: #{_lambda_.6} parent=5 // pred_fallthru
        _
      %p181 = scmp.le.s32.totalorder 1, %s11
      %p182 = scmp.lt.s32.totalorder %s11, 4
      %p183 = pnand %p181, %p182
      %p184 = pneg %p183
      // Predicated region
      $region25: #{_lambda_.6} parent=5 // pred_check
        _
      $region26: #{_lambda_.6} parent=5 // pred_check_branch
        %186 = sbr.rel (%p183) target = $region28
      $region27: #{_lambda_.6} parent=5 // pred_region
        %s187 = ssub.s32 %s11, 1
        %s188 = sand.u32 %s82, 1
        %s189 = scalar_lea.sflag [#allocation4], %s188
        %s190 = sand.u32 %s82, 1
        %s191 = smul.addr %s190, 32
        %s192 = scalar_lea.vmem [#allocation3], %s191
        // Predicated region
        $region29: #{_lambda_.6} parent=27 // pred_check
          %p193 = pneg %p95
        $region30: #{_lambda_.6} parent=27 // pred_check_branch
          %195 = sbr.rel (%p193) target = $region32
        $region31: #{_lambda_.6} parent=27 // pred_region
          %197 = dma.done %s189, 512
        $region32: #{_lambda_.6} parent=27 // pred_fallthru
          _
        %s198 = smul.u32 2, %s23
        %p199 = scmp.lt.s32.totalorder %s198, 1
        %s200 = scalar_select %p199, %s198, 1
        %p201 = scmp.lt.s32.totalorder %s25, 0
        %s202 = scalar_select %p201, %s25, 0
        %s203 = sadd.s32 %s202, %s200
        %s204 = smul.addr %s203, 8
        %s205 = scalar_lea.vmem %s0, %s204
        %p206 = pneg %p65
        %p207 = pneg %p62
        %s208 = sand.u32 %s82, 1
        %s209 = scalar_lea.sflag [#allocation4], %s208
        %s210 = sand.u32 %s82, 1
        %s211 = smul.addr %s210, 32
        %s212 = scalar_lea.vmem [#allocation3], %s211
        %p213 = pneg %p95
        %p214 = pneg %p92
        %p215 = pneg %p125
        %p216 = pneg %p122
        %s217 = smul.u32 2, %s23
        %p218 = scmp.lt.s32.totalorder %s22, 2
        %s219 = scalar_select %p218, %s22, 2
        %p220 = scmp.lt.s32.totalorder %s217, 1
        %s221 = scalar_select %p220, %s217, 1
        %p222 = scmp.lt.s32.totalorder %s24, 0
        %s223 = scalar_select %p222, %s24, 0
        %s224 = sadd.s32 %s223, %s221
        %s225 = smul.addr %s219, 2
        %s226 = sadd.s32 %s224, %s225
        %s227 = smul.addr %s226, 8
        %s228 = scalar_lea.vmem %s2, %s227
        %s229 = smul.u32 2, %s23
        %p230 = scmp.lt.s32.totalorder %s229, 1
        %s231 = scalar_select %p230, %s229, 1
        %p232 = scmp.lt.s32.totalorder %s25, 0
        %s233 = scalar_select %p232, %s25, 0
        %s234 = sadd.s32 %s233, %s231
        %s235 = smul.addr %s234, 8
        %s236 = scalar_lea.vmem %s0, %s235
        %s237 = smul.u32 2, %s23
        %s238 = smul.u32 4, %s25
        %s239 = smul.u32 2, %s23
        %p240 = scmp.lt.s32.totalorder %s22, 2
        %s241 = scalar_select %p240, %s22, 2
        %p242 = scmp.lt.s32.totalorder %s239, 1
        %s243 = scalar_select %p242, %s239, 1
        %p244 = scmp.lt.s32.totalorder %s24, 0
        %s245 = scalar_select %p244, %s24, 0
        %s246 = sadd.s32 %s245, %s243
        %s247 = smul.addr %s241, 2
        %s248 = sadd.s32 %s246, %s247
        %s249 = smul.addr %s248, 8
        %s250 = scalar_lea.vmem %s2, %s249
        %s251 = smul.u32 2, %s23
        %p252 = scmp.eq.s32.totalorder %s25, 0
        // Predicated region
        $region33: #{_lambda_.6} parent=27 // pred_check
          %p253 = pneg %p252
        $region34: #{_lambda_.6} parent=27 // pred_check_branch
          %255 = sbr.rel (%p253) target = $region36
        $region35: #{_lambda_.6} parent=27 // pred_region
          %vm256 = vcmask 261120
          %257 = vst.msk [vmem:[#allocation2] sm:$0xff] %vm256, 0.0
          %258 = vst.msk [vmem:[#allocation2 + $0x8] sm:$0xff] %vm256, 0.0
        $region36: #{_lambda_.6} parent=27 // pred_fallthru
          _
        %v259 = vld [vmem:[#allocation2] sm:$0xff]
        %v260 = vld [vmem:[#allocation2 + $0x8] sm:$0xff]
        %v261 = vld [vmem:[%s236] sm:$0xff]
        %v262 = vld [vmem:[%s236 + $0x8] sm:$0xff]
        %v263 = vld [vmem:[%s192] sm:$0xff]
        %v264 = vld [vmem:[%s192 + $0x8] sm:$0xff]
        %v265 = vld [vmem:[%s192 + $0x10] sm:$0xff]
        %v266 = vld [vmem:[%s192 + $0x18] sm:$0xff]
        %vm267 = vcmask 261120
        %v269 = vsel %vm267, %v261, 0
        %v272 = vsel %vm267, %v262, 0
        %274 = vmatpush.msra.mxu0 0.0
        %275 = vmatpush.msra.mxu0 0.0
        %276 = vmatpush.msra.mxu0 0.0
        %277 = vmatpush.msra.mxu0 0.0
        %278 = vmatpush.msra.mxu0 0.0
        %279 = vmatpush.msra.mxu0 0.0
        %280 = vmatpush.msra.mxu0 0.0
        %281 = vmatpush.msra.mxu0 0.0
        %282 = vmatpush.msra.mxu0 0.0
        %283 = vmatpush.msra.mxu0 0.0
        %284 = vmatpush.msra.mxu0 0.0
        %285 = vmatpush.msra.mxu0 0.0
        %286 = vmatpush.msra.mxu0 %v266
        %287 = vmatpush.msra.mxu0 %v265
        %288 = vmatpush.msra.mxu0 %v264
        %289 = vmatpush.msra.mxu0 %v263
        %290 = vmatmul.f32.gmra.mxu0 %v269
        %v291 = vpop.f32.mrf.mxu0
        %v292 = vadd.f32 0.0, %v291
        %293 = vmatmul.f32.gmra.mxu0 %v272
        %v294 = vpop.f32.mrf.mxu0
        %v295 = vadd.f32 0.0, %v294
        %296 = vdwg.mxu0
        %v297 = vadd.f32 %v259, %v292
        %v298 = vadd.f32 %v260, %v295
        %299 = vst.msk [vmem:[#allocation2] sm:$0xff] %vm267, %v297
        %300 = vst.msk [vmem:[#allocation2 + $0x8] sm:$0xff] %vm267, %v298
        // Predicated region
        $region37: #{_lambda_.6} parent=27 // pred_check
          %p301 = pneg %p252
        $region38: #{_lambda_.6} parent=27 // pred_check_branch
          %303 = sbr.rel (%p301) target = $region40
        $region39: #{_lambda_.6} parent=27 // pred_region
          %v304 = vld [vmem:[#allocation2] sm:$0xff]
          %v305 = vld [vmem:[#allocation2 + $0x8] sm:$0xff]
          %306 = vst.msk [vmem:[%s250] sm:$0xff] %vm267, %v304
          %307 = vst.msk [vmem:[%s250 + $0x8] sm:$0xff] %vm267, %v305
        $region40: #{_lambda_.6} parent=27 // pred_fallthru
          _
        %s308 = smul.u32 2, %s23
        %p309 = scmp.lt.s32.totalorder %s22, 2
        %s310 = scalar_select %p309, %s22, 2
        %p311 = scmp.lt.s32.totalorder %s308, 1
        %s312 = scalar_select %p311, %s308, 1
        %p313 = scmp.lt.s32.totalorder %s24, 0
        %s314 = scalar_select %p313, %s24, 0
        %s315 = sadd.s32 %s314, %s312
        %s316 = smul.addr %s310, 2
        %s317 = sadd.s32 %s315, %s316
        %s318 = smul.addr %s317, 8
        %s319 = scalar_lea.vmem %s2, %s318
        // Predicated region
        $region41: #{_lambda_.6} parent=27 // pred_check
          %p320 = pneg %p122
        $region42: #{_lambda_.6} parent=27 // pred_check_branch
          %322 = sbr.rel (%p320) target = $region44
        $region43: #{_lambda_.6} parent=27 // pred_region
          %s323 = smul.u32 2, %s23
        $region44: #{_lambda_.6} parent=27 // pred_fallthru
          _
      $region28: #{_lambda_.6} parent=5 // pred_fallthru
        _
      %p324 = scmp.le.s32.totalorder 2, %s11
      // Predicated region
      $region45: #{_lambda_.6} parent=5 // pred_check
        %p325 = pneg %p324
      $region46: #{_lambda_.6} parent=5 // pred_check_branch
        %327 = sbr.rel (%p325) target = $region48
      $region47: #{_lambda_.6} parent=5 // pred_region
        %s328 = ssub.s32 %s11, 2
        // Predicated region
        $region49: #{_lambda_.6} parent=47 // pred_check
          %p329 = pneg %p128
        $region50: #{_lambda_.6} parent=47 // pred_check_branch
          %331 = sbr.rel (%p329) target = $region52
        $region51: #{_lambda_.6} parent=47 // pred_region
          %s332 = smul.u32 2, %s27
          %p333 = scmp.lt.s32.totalorder %s26, 2
          %s334 = scalar_select %p333, %s26, 2
          %p335 = scmp.lt.s32.totalorder %s332, 1
          %s336 = scalar_select %p335, %s332, 1
          %p337 = scmp.lt.s32.totalorder %s28, 0
          %s338 = scalar_select %p337, %s28, 0
          %s339 = sadd.s32 %s338, %s336
          %s340 = smul.addr %s334, 2
          %s341 = sadd.s32 %s339, %s340
          %s342 = smul.addr %s341, 8
          %s343 = scalar_lea.vmem %s2, %s342
        $region52: #{_lambda_.6} parent=47 // pred_fallthru
          _
      $region48: #{_lambda_.6} parent=5 // pred_fallthru
        _
    $region6: #{_lambda_.6} parent=1 // loop_footer
      %s15 = sadd.s32 1, %s11
    $region7: #{_lambda_.6} parent=1 // loop_footer_branch
      %10 = sbr.rel target = $region3
    $region8: #{_lambda_.6} parent=1 // loop_exit
      _
    %344 = vsyncpa [#allocation4], 1
    %s345 = scalar_lea.sflag [#allocation4], 1
    %346 = vsyncpa %s345, 1

// kernel: _lambda_.4
$region0: #{_lambda_.4}
  #allocation0 [shape = 'u32[]', space=smem, size = 0x4, offset = 0x4, fixed_abs, tag = 'smem constant byte address 0x4 - core index']
  #allocation1 [shape = 'u32[72,128]{1,0:T(1,128)}', space=vmem, size = 0x9000, scoped, tag = 'internal scratch']
  #allocation2 [shape = 'f32[16,32]{1,0:T(8,128)}', space=vmem, size = 0x2000, scoped, tag = 'scratch operand']
  %s0 = inlined_call_operand.hbm [shape: f32[16,16], index: 0, kind: input, shape index: {}]
  %s1 = inlined_call_operand.hbm [shape: f32[4,16,32], index: 1, kind: input, shape index: {}]
  %s2 = inlined_call_operand.vmem [shape: f32[4,16,32], index: 2, kind: output, shape index: {}]
  %s3 = sld [smem:[#allocation0]]
  $region57: #{_lambda_.4} parent=0
    _
  %s5 = ssub.s32 1, %s3
  %s6 = scalar_select 0, %s5, %s3
  $region1: #{_lambda_.4} parent=0
    #allocation3 [shape = 'u8[8192]{0}', space=vmem, size = 0x2000, scoped, tag = 'input window, operand 0, single buffered']
    #allocation4 [shape = 's32[2]{0}', space=sflag, size = 0x8, scoped, tag = 'scoped memory for _lambda_.4']
    #allocation5 [shape = 'u8[16384]{0}', space=vmem, size = 0x4000, scoped, tag = 'input window, operand 1']
    #allocation6 [shape = 's32[2]{0}', space=sflag, size = 0x8, scoped, tag = 'scoped memory for _lambda_.4']
    %7 = vsyncpa [#allocation4], 0
    %8 = vsyncpa [#allocation6], 0
    %s9 = scalar_lea.sflag [#allocation6], 1
    %10 = vsyncpa %s9, 0
    loop: start=0, step=1, limit=6
    $region2: #{_lambda_.4} parent=1 // loop_pre_header
      _
    $region3: #{_lambda_.4} parent=1 // loop_header
      %s12 = sphi 0, %s16
      %p13 = scmp.ge.s32.totalorder %s12, 6
      %s19 = sphi 0, %s45
      %s20 = sphi 0, %s41
      %s21 = sphi 0, %s37
      %s22 = sphi 0, %s33
      %s23 = sphi 0, %s19
      %s24 = sphi 0, %s20
      %s25 = sphi 0, %s21
      %s26 = sphi 0, %s22
      %s27 = sphi 0, %s23
      %s28 = sphi 0, %s24
      %s29 = sphi 0, %s25
      %s30 = sphi 0, %s26
      %s50 = sphi 0, %s52
      %s53 = sphi 0, %s50
      %s54 = sphi 0, %s53
      %s70 = sphi 0, %s54
      %s80 = sphi 0, %s82
      %s83 = sphi 0, %s80
      %s84 = sphi 0, %s83
      %s100 = sphi 0, %s84
      %s110 = sphi 0, %s112
      %s113 = sphi 0, %s110
      %s114 = sphi 0, %s113
      %s130 = sphi 0, %s114
    $region4: #{_lambda_.4} parent=1 // loop_header_branch
      %15 = sbr.rel (%p13) target = $region8
    $region5: #{_lambda_.4} parent=1 // loop_body
      %s17 = ssub.s32 %s12, 1
      %s18 = ssub.s32 %s12, 2
      %s31 = sadd.s32 1, %s22
      %p32 = scmp.ge.s32.totalorder %s31, 1
      %s33 = scalar_select %p32, 0, %s31
      %s34 = sadd.s32 1, %s21
      %s35 = scalar_select %p32, %s34, %s21
      %p36 = scmp.ge.s32.totalorder %s35, 1
      %s37 = scalar_select %p36, 0, %s35
      %s38 = sadd.s32 1, %s20
      %s39 = scalar_select %p36, %s38, %s20
      %p40 = scmp.ge.s32.totalorder %s39, 1
      %s41 = scalar_select %p40, 0, %s39
      %s42 = sadd.s32 1, %s19
      %s43 = scalar_select %p40, %s42, %s19
      %p44 = scmp.ge.s32.totalorder %s43, 4
      %s45 = scalar_select %p44, 0, %s43
      %s46 = ssub.s32 %s20, %s41
      %s47 = ssub.s32 %s22, %s33
      %s48 = sor.u32 %s46, %s47
      %p49 = scmp.eq.s32.totalorder %s48, 0
      %s51 = sadd.s32 %s50, 1
      %s52 = scalar_select %p49, %s50, %s51
      %p55 = pneg %p49
      %p56 = scmp.eq.s32.totalorder %s12, 3
      %p57 = por %p55, %p56
      %p58 = scmp.ne.s32.totalorder %s50, %s53
      %p59 = scmp.eq.s32.totalorder %s12, 0
      %p60 = por %p58, %p59
      %p61 = scmp.ne.s32.totalorder %s50, %s53
      %p62 = scmp.eq.s32.totalorder %s17, 3
      %p63 = por %p61, %p62
      %p64 = scmp.ne.s32.totalorder %s53, %s54
      %p65 = scmp.eq.s32.totalorder %s17, 0
      %p66 = por %p64, %p65
      %p67 = scmp.ne.s32.totalorder %s53, %s54
      %p68 = scmp.eq.s32.totalorder %s18, 3
      %p69 = por %p67, %p68
      %p71 = scmp.ne.s32.totalorder %s54, %s70
      %p72 = scmp.eq.s32.totalorder %s18, 0
      %p73 = por %p71, %p72
      %s74 = ssub.s32 %s19, %s45
      %s75 = ssub.s32 %s22, %s33
      %s76 = sor.u32 %s74, %s75
      %s77 = ssub.s32 %s21, %s37
      %s78 = sor.u32 %s76, %s77
      %p79 = scmp.eq.s32.totalorder %s78, 0
      %s81 = sadd.s32 %s80, 1
      %s82 = scalar_select %p79, %s80, %s81
      %p85 = pneg %p79
      %p86 = scmp.eq.s32.totalorder %s12, 3
      %p87 = por %p85, %p86
      %p88 = scmp.ne.s32.totalorder %s80, %s83
      %p89 = scmp.eq.s32.totalorder %s12, 0
      %p90 = por %p88, %p89
      %p91 = scmp.ne.s32.totalorder %s80, %s83
      %p92 = scmp.eq.s32.totalorder %s17, 3
      %p93 = por %p91, %p92
      %p94 = scmp.ne.s32.totalorder %s83, %s84
      %p95 = scmp.eq.s32.totalorder %s17, 0
      %p96 = por %p94, %p95
      %p97 = scmp.ne.s32.totalorder %s83, %s84
      %p98 = scmp.eq.s32.totalorder %s18, 3
      %p99 = por %p97, %p98
      %p101 = scmp.ne.s32.totalorder %s84, %s100
      %p102 = scmp.eq.s32.totalorder %s18, 0
      %p103 = por %p101, %p102
      %s104 = ssub.s32 %s19, %s45
      %s105 = ssub.s32 %s20, %s41
      %s106 = sor.u32 %s104, %s105
      %s107 = ssub.s32 %s21, %s37
      %s108 = sor.u32 %s106, %s107
      %p109 = scmp.eq.s32.totalorder %s108, 0
      %s111 = sadd.s32 %s110, 1
      %s112 = scalar_select %p109, %s110, %s111
      %p115 = pneg %p109
      %p116 = scmp.eq.s32.totalorder %s12, 3
      %p117 = por %p115, %p116
      %p118 = scmp.ne.s32.totalorder %s110, %s113
      %p119 = scmp.eq.s32.totalorder %s12, 0
      %p120 = por %p118, %p119
      %p121 = scmp.ne.s32.totalorder %s110, %s113
      %p122 = scmp.eq.s32.totalorder %s17, 3
      %p123 = por %p121, %p122
      %p124 = scmp.ne.s32.totalorder %s113, %s114
      %p125 = scmp.eq.s32.totalorder %s17, 0
      %p126 = por %p124, %p125
      %p127 = scmp.ne.s32.totalorder %s113, %s114
      %p128 = scmp.eq.s32.totalorder %s18, 3
      %p129 = por %p127, %p128
      %p131 = scmp.ne.s32.totalorder %s114, %s130
      %p132 = scmp.eq.s32.totalorder %s18, 0
      %p133 = por %p131, %p132
      %p134 = scmp.le.s32.totalorder 1, %s12
      %p135 = scmp.lt.s32.totalorder %s12, 5
      %p136 = pnand %p134, %p135
      %p137 = pneg %p136
      // Predicated region
      $region9: #{_lambda_.4} parent=5 // pred_check
        _
      $region10: #{_lambda_.4} parent=5 // pred_check_branch
        %139 = sbr.rel (%p136) target = $region12
      $region11: #{_lambda_.4} parent=5 // pred_region
        %s140 = ssub.s32 %s12, 1
        // Predicated region
        $region13: #{_lambda_.4} parent=11 // pred_check
          %p141 = pneg %p66
        $region14: #{_lambda_.4} parent=11 // pred_check_branch
          %143 = sbr.rel (%p141) target = $region16
        $region15: #{_lambda_.4} parent=11 // pred_region
          %s144 = smul.u32 2, %s24
          %146 = vsyncadd [#allocation4], 0
          %s147 = sadd.s32 %s26, %s144
          %s148 = smul.addr %s147, 8
          %s149 = scalar_lea.hbm %s0, %s148
          %s150 = sshll.u32 %s149, 4
          %s151 = int_to_ptr.hbm [resolvable:$true] %s150
          %s152 = sshll.u32 [#allocation3], 4
          %s153 = int_to_ptr.vmem [resolvable:$true] %s152
          %158 = dma.hbm_to_vmem [thread:$0]  %s151, 256, %s153, [#allocation4], 128, 128, 8
        $region16: #{_lambda_.4} parent=11 // pred_fallthru
          _
      $region12: #{_lambda_.4} parent=5 // pred_fallthru
        _
      %p159 = scmp.lt.s32.totalorder %s12, 4
      // Predicated region
      $region17: #{_lambda_.4} parent=5 // pred_check
        %p160 = pneg %p159
      $region18: #{_lambda_.4} parent=5 // pred_check_branch
        %162 = sbr.rel (%p160) target = $region20
      $region19: #{_lambda_.4} parent=5 // pred_region
        // Predicated region
        $region21: #{_lambda_.4} parent=19 // pred_check
          %p163 = pneg %p90
        $region22: #{_lambda_.4} parent=19 // pred_check_branch
          %165 = sbr.rel (%p163) target = $region24
        $region23: #{_lambda_.4} parent=19 // pred_region
          %s166 = sand.u32 %s80, 1
          %s167 = scalar_lea.sflag [#allocation6], %s166
          %s168 = sand.u32 %s80, 1
          %s169 = smul.addr %s168, 16
          %s170 = scalar_lea.vmem [#allocation5], %s169
          %s171 = smul.u32 2, %s22
          %173 = vsyncadd %s167, 0
          %s174 = sadd.s32 %s21, %s171
          %s175 = smul.addr %s19, 2
          %s176 = sadd.s32 %s174, %s175
          %s177 = smul.addr %s176, 8
          %s178 = scalar_lea.hbm %s1, %s177
          %s179 = sshll.u32 %s178, 4
          %s180 = int_to_ptr.hbm [resolvable:$true] %s179
          %s181 = sshll.u32 %s170, 4
          %s182 = int_to_ptr.vmem [resolvable:$true] %s181
          %187 = dma.hbm_to_vmem [thread:$0]  %s180, 256, %s182, %s167, 128, 128, 8
        $region24: #{_lambda_.4} parent=19 // pred_fallthru
          _
      $region20: #{_lambda_.4} parent=5 // pred_fallthru
        _
      %p188 = scmp.le.s32.totalorder 1, %s12
      %p189 = scmp.lt.s32.totalorder %s12, 5
      %p190 = pnand %p188, %p189
      %p191 = pneg %p190
      // Predicated region
      $region25: #{_lambda_.4} parent=5 // pred_check
        _
      $region26: #{_lambda_.4} parent=5 // pred_check_branch
        %193 = sbr.rel (%p190) target = $region28
      $region27: #{_lambda_.4} parent=5 // pred_region
        %s194 = ssub.s32 %s12, 1
        // Predicated region
        $region29: #{_lambda_.4} parent=27 // pred_check
          %p195 = pneg %p66
        $region30: #{_lambda_.4} parent=27 // pred_check_branch
          %197 = sbr.rel (%p195) target = $region32
        $region31: #{_lambda_.4} parent=27 // pred_region
          %199 = dma.done [#allocation4], 256
        $region32: #{_lambda_.4} parent=27 // pred_fallthru
          _
        %s200 = sand.u32 %s83, 1
        %s201 = scalar_lea.sflag [#allocation6], %s200
        %s202 = sand.u32 %s83, 1
        %s203 = smul.addr %s202, 16
        %s204 = scalar_lea.vmem [#allocation5], %s203
        // Predicated region
        $region33: #{_lambda_.4} parent=27 // pred_check
          %p205 = pneg %p96
        $region34: #{_lambda_.4} parent=27 // pred_check_branch
          %207 = sbr.rel (%p205) target = $region36
        $region35: #{_lambda_.4} parent=27 // pred_region
          %209 = dma.done %s201, 256
        $region36: #{_lambda_.4} parent=27 // pred_fallthru
          _
        %p210 = pneg %p66
        %p211 = pneg %p63
        %s212 = sand.u32 %s83, 1
        %s213 = scalar_lea.sflag [#allocation6], %s212
        %s214 = sand.u32 %s83, 1
        %s215 = smul.addr %s214, 16
        %s216 = scalar_lea.vmem [#allocation5], %s215
        %p217 = pneg %p96
        %p218 = pneg %p93
        %p219 = pneg %p126
        %p220 = pneg %p123
        %s221 = smul.u32 2, %s24
        %p222 = scmp.lt.s32.totalorder %s23, 3
        %s223 = scalar_select %p222, %s23, 3
        %p224 = scmp.lt.s32.totalorder %s221, 1
        %s225 = scalar_select %p224, %s221, 1
        %p226 = scmp.lt.s32.totalorder %s25, 0
        %s227 = scalar_select %p226, %s25, 0
        %s228 = sadd.s32 %s227, %s225
        %s229 = smul.addr %s223, 2
        %s230 = sadd.s32 %s228, %s229
        %s231 = smul.addr %s230, 8
        %s232 = scalar_lea.vmem %s2, %s231
        %s233 = smul.u32 2, %s24
        %s234 = smul.u32 2, %s26
        %s235 = smul.u32 2, %s24
        %p236 = scmp.lt.s32.totalorder %s23, 3
        %s237 = scalar_select %p236, %s23, 3
        %p238 = scmp.lt.s32.totalorder %s235, 1
        %s239 = scalar_select %p238, %s235, 1
        %p240 = scmp.lt.s32.totalorder %s25, 0
        %s241 = scalar_select %p240, %s25, 0
        %s242 = sadd.s32 %s241, %s239
        %s243 = smul.addr %s237, 2
        %s244 = sadd.s32 %s242, %s243
        %s245 = smul.addr %s244, 8
        %s246 = scalar_lea.vmem %s2, %s245
        %s247 = smul.u32 2, %s24
        %p248 = scmp.eq.s32.totalorder %s26, 0
        // Predicated region
        $region37: #{_lambda_.4} parent=27 // pred_check
          %p249 = pneg %p248
        $region38: #{_lambda_.4} parent=27 // pred_check_branch
          %251 = sbr.rel (%p249) target = $region40
        $region39: #{_lambda_.4} parent=27 // pred_region
          %vm252 = vcmask 261120
          %253 = vst.msk [vmem:[#allocation2] sm:$0xff] %vm252, 0.0
          %254 = vst.msk [vmem:[#allocation2 + $0x8] sm:$0xff] %vm252, 0.0
        $region40: #{_lambda_.4} parent=27 // pred_fallthru
          _
        %v255 = vld [vmem:[#allocation2] sm:$0xff]
        %v256 = vld [vmem:[#allocation2 + $0x8] sm:$0xff]
        %v257 = vld [vmem:[#allocation3] sm:$0xff]
        %v258 = vld [vmem:[#allocation3 + $0x8] sm:$0xff]
        %v259 = vld [vmem:[%s204] sm:$0xff]
        %v260 = vld [vmem:[%s204 + $0x8] sm:$0xff]
        %vm261 = vcmask 130048
        %v263 = vsel %vm261, %v257, 0
        %v266 = vsel %vm261, %v258, 0
        %268 = vmatpush.msra.mxu0 0.0
        %269 = vmatpush.msra.mxu0 0.0
        %270 = vmatpush.msra.mxu0 0.0
        %271 = vmatpush.msra.mxu0 0.0
        %272 = vmatpush.msra.mxu0 0.0
        %273 = vmatpush.msra.mxu0 0.0
        %274 = vmatpush.msra.mxu0 0.0
        %275 = vmatpush.msra.mxu0 0.0
        %276 = vmatpush.msra.mxu0 0.0
        %277 = vmatpush.msra.mxu0 0.0
        %278 = vmatpush.msra.mxu0 0.0
        %279 = vmatpush.msra.mxu0 0.0
        %280 = vmatpush.msra.mxu0 0.0
        %281 = vmatpush.msra.mxu0 0.0
        %282 = vmatpush.msra.mxu0 %v260
        %283 = vmatpush.msra.mxu0 %v259
        %284 = vmatmul.f32.gmra.mxu0 %v263
        %v285 = vpop.f32.mrf.mxu0
        %v286 = vadd.f32 0.0, %v285
        %287 = vmatmul.f32.gmra.mxu0 %v266
        %v288 = vpop.f32.mrf.mxu0
        %v289 = vadd.f32 0.0, %v288
        %290 = vdwg.mxu0
        %v291 = vadd.f32 %v255, %v286
        %v292 = vadd.f32 %v256, %v289
        %vm293 = vcmask 261120
        %294 = vst.msk [vmem:[#allocation2] sm:$0xff] %vm293, %v291
        %295 = vst.msk [vmem:[#allocation2 + $0x8] sm:$0xff] %vm293, %v292
        // Predicated region
        $region41: #{_lambda_.4} parent=27 // pred_check
          %p296 = pneg %p248
        $region42: #{_lambda_.4} parent=27 // pred_check_branch
          %298 = sbr.rel (%p296) target = $region44
        $region43: #{_lambda_.4} parent=27 // pred_region
          %v299 = vld [vmem:[#allocation2] sm:$0xff]
          %v300 = vld [vmem:[#allocation2 + $0x8] sm:$0xff]
          %301 = vst.msk [vmem:[%s246] sm:$0xff] %vm293, %v299
          %302 = vst.msk [vmem:[%s246 + $0x8] sm:$0xff] %vm293, %v300
        $region44: #{_lambda_.4} parent=27 // pred_fallthru
          _
        %s303 = smul.u32 2, %s24
        %p304 = scmp.lt.s32.totalorder %s23, 3
        %s305 = scalar_select %p304, %s23, 3
        %p306 = scmp.lt.s32.totalorder %s303, 1
        %s307 = scalar_select %p306, %s303, 1
        %p308 = scmp.lt.s32.totalorder %s25, 0
        %s309 = scalar_select %p308, %s25, 0
        %s310 = sadd.s32 %s309, %s307
        %s311 = smul.addr %s305, 2
        %s312 = sadd.s32 %s310, %s311
        %s313 = smul.addr %s312, 8
        %s314 = scalar_lea.vmem %s2, %s313
        // Predicated region
        $region45: #{_lambda_.4} parent=27 // pred_check
          %p315 = pneg %p123
        $region46: #{_lambda_.4} parent=27 // pred_check_branch
          %317 = sbr.rel (%p315) target = $region48
        $region47: #{_lambda_.4} parent=27 // pred_region
          %s318 = smul.u32 2, %s24
        $region48: #{_lambda_.4} parent=27 // pred_fallthru
          _
      $region28: #{_lambda_.4} parent=5 // pred_fallthru
        _
      %p319 = scmp.le.s32.totalorder 2, %s12
      // Predicated region
      $region49: #{_lambda_.4} parent=5 // pred_check
        %p320 = pneg %p319
      $region50: #{_lambda_.4} parent=5 // pred_check_branch
        %322 = sbr.rel (%p320) target = $region52
      $region51: #{_lambda_.4} parent=5 // pred_region
        %s323 = ssub.s32 %s12, 2
        // Predicated region
        $region53: #{_lambda_.4} parent=51 // pred_check
          %p324 = pneg %p129
        $region54: #{_lambda_.4} parent=51 // pred_check_branch
          %326 = sbr.rel (%p324) target = $region56
        $region55: #{_lambda_.4} parent=51 // pred_region
          %s327 = smul.u32 2, %s28
          %p328 = scmp.lt.s32.totalorder %s27, 3
          %s329 = scalar_select %p328, %s27, 3
          %p330 = scmp.lt.s32.totalorder %s327, 1
          %s331 = scalar_select %p330, %s327, 1
          %p332 = scmp.lt.s32.totalorder %s29, 0
          %s333 = scalar_select %p332, %s29, 0
          %s334 = sadd.s32 %s333, %s331
          %s335 = smul.addr %s329, 2
          %s336 = sadd.s32 %s334, %s335
          %s337 = smul.addr %s336, 8
          %s338 = scalar_lea.vmem %s2, %s337
        $region56: #{_lambda_.4} parent=51 // pred_fallthru
          _
      $region52: #{_lambda_.4} parent=5 // pred_fallthru
        _
    $region6: #{_lambda_.4} parent=1 // loop_footer
      %s16 = sadd.s32 1, %s12
    $region7: #{_lambda_.4} parent=1 // loop_footer_branch
      %11 = sbr.rel target = $region3
    $region8: #{_lambda_.4} parent=1 // loop_exit
      _
    %339 = vsyncpa [#allocation4], 1
    %s340 = scalar_lea.sflag [#allocation4], 1
    %341 = vsyncpa %s340, 1
    %342 = vsyncpa [#allocation6], 1
    %s343 = scalar_lea.sflag [#allocation6], 1
    %344 = vsyncpa %s343, 1

// kernel: _lambda_.5
$region0: #{_lambda_.5}
  #allocation0 [shape = 'u32[]', space=smem, size = 0x4, offset = 0x4, fixed_abs, tag = 'smem constant byte address 0x4 - core index']
  #allocation1 [shape = 'u32[72,128]{1,0:T(1,128)}', space=vmem, size = 0x9000, scoped, tag = 'internal scratch']
  %s0 = inlined_call_operand.vmem [shape: f32[4,8,2,32], index: 0, kind: input, shape index: {}]
  %s1 = inlined_call_operand.vmem [shape: f32[2,32], index: 1, kind: input, shape index: {}]
  %s2 = inlined_call_operand.vmem [shape: f32[2,32], index: 2, kind: input, shape index: {}, may-alias: {2,3}]
  %s3 = inlined_call_operand.vmem [shape: f32[2,32], index: 3, kind: input, shape index: {}, may-alias: {2,3}]
  %s4 = inlined_call_operand.vmem [shape: f32[8,2,32], index: 4, kind: output, shape index: {0}]
  %s5 = inlined_call_operand.vmem [shape: f32[2,32], index: 5, kind: output, shape index: {1}]
  %6 = xla_tuple %s4, %s5
  %s7 = sld [smem:[#allocation0]]
  $region38: #{_lambda_.5} parent=0
    _
  %s9 = ssub.s32 1, %s7
  %s10 = scalar_select 0, %s9, %s7
  // Predicated region
  $region2: #{_lambda_.5} parent=0 // pred_check
    _
  $region3: #{_lambda_.5} parent=0 // pred_check_branch
    %12 = sbr.rel (0) target = $region5
  $region4: #{_lambda_.5} parent=0 // pred_region
    _
  $region5: #{_lambda_.5} parent=0 // pred_fallthru
    _
  // Predicated region
  $region6: #{_lambda_.5} parent=0 // pred_check
    _
  $region7: #{_lambda_.5} parent=0 // pred_check_branch
    %14 = sbr.rel (0) target = $region9
  $region8: #{_lambda_.5} parent=0 // pred_region
    _
  $region9: #{_lambda_.5} parent=0 // pred_fallthru
    _
  // Predicated region
  $region10: #{_lambda_.5} parent=0 // pred_check
    _
  $region11: #{_lambda_.5} parent=0 // pred_check_branch
    %16 = sbr.rel (0) target = $region13
  $region12: #{_lambda_.5} parent=0 // pred_region
    _
  $region13: #{_lambda_.5} parent=0 // pred_fallthru
    _
  // Predicated region
  $region14: #{_lambda_.5} parent=0 // pred_check
    _
  $region15: #{_lambda_.5} parent=0 // pred_check_branch
    %18 = sbr.rel (0) target = $region17
  $region16: #{_lambda_.5} parent=0 // pred_region
    _
  $region17: #{_lambda_.5} parent=0 // pred_fallthru
    _
  %p19 = scmp.eq.s32.totalorder 0, 0
  // Predicated region
  $region18: #{_lambda_.5} parent=0 // pred_check
    %p20 = pneg %p19
  $region19: #{_lambda_.5} parent=0 // pred_check_branch
    %22 = sbr.rel (%p20) target = $region21
  $region20: #{_lambda_.5} parent=0 // pred_region
    %v23 = vld [vmem:[%s3] sm:$0x3]
    %vm24 = vcmask 254976
    %25 = vst.msk [vmem:[%s5] sm:$0x3] %vm24, %v23
  $region21: #{_lambda_.5} parent=0 // pred_fallthru
    _
  %v26 = vld [vmem:[%s1] sm:$0x1]
  %v27 = vld [vmem:[%s1 + $0x1] sm:$0x1]
  %v28 = vld [vmem:[%s2] sm:$0x1]
  %v29 = vld [vmem:[%s2 + $0x1] sm:$0x1]
  %v30 = vld [vmem:[%s5] sm:$0x3]
  %v31 = vld [vmem:[%s0] sm:$0x3]
  %s32 = scalar_lea.vmem %s0, 16
  %v33 = vld [vmem:[%s32] sm:$0x3]
  %s34 = scalar_lea.vmem %s0, 32
  %v35 = vld [vmem:[%s34] sm:$0x3]
  %v36 = vperm.slane %v26, 0
  %v37 = vmul.f32 %v30, %v36
  %v38 = vadd.f32 %v33, %v37
  %v39 = vperm.slane %v28, 0
  %v40 = vadd.f32 %v38, %v39
  %v41 = vxor.u32 %v40, 2147483648
  %v42 = vmul.f32 %v41, 1.442695
  %v43 = vpow.pop %v42
  %v44 = vadd.f32 %v43, 1.0
  %v45 = vrcp.pop %v44
  %v46 = vmul.f32 %v44, %v45
  %v47 = vsub.f32 1.0, %v46
  %v48 = vmul.f32 %v45, %v47
  %v49 = vadd.f32 %v45, %v48
  %vm50 = vweird.f32 %v44
  %vm51 = vweird.f32 %v45
  %vm52 = vmor %vm50, %vm51
  %v53 = vsel %vm52, %v45, %v49
  %v54 = vand.u32 2147483647, %v44
  %vm55 = vcmp.eq.f32.partialorder %v54, 8.507059e+37
  %v56 = vand.u32 %v44, 2147483648
  %v57 = vor.u32 1.1754944e-38, %v56
  %v58 = vsel %vm55, %v57, %v53
  %v59 = vmul.f32 1.0, %v58
  %v60 = vperm.slane %v27, 0
  %v61 = vmul.f32 %v30, %v60
  %v62 = vadd.f32 %v35, %v61
  %v63 = vperm.slane %v29, 0
  %v64 = vadd.f32 %v62, %v63
  %v65 = vxor.u32 %v64, 2147483648
  %v66 = vmul.f32 %v65, 1.442695
  %v67 = vpow.pop %v66
  %v68 = vadd.f32 %v67, 1.0
  %v69 = vrcp.pop %v68
  %v70 = vmul.f32 %v68, %v69
  %v71 = vsub.f32 1.0, %v70
  %v72 = vmul.f32 %v69, %v71
  %v73 = vadd.f32 %v69, %v72
  %vm74 = vweird.f32 %v68
  %vm75 = vweird.f32 %v69
  %vm76 = vmor %vm74, %vm75
  %v77 = vsel %vm76, %v69, %v73
  %v78 = vand.u32 2147483647, %v68
  %vm79 = vcmp.eq.f32.partialorder %v78, 8.507059e+37
  %v80 = vand.u32 %v68, 2147483648
  %v81 = vor.u32 1.1754944e-38, %v80
  %v82 = vsel %vm79, %v81, %v77
  %v83 = vmul.f32 1.0, %v82
  %v84 = vsub.f32 %v30, %v31
  %v85 = vmul.f32 %v84, %v59
  %v86 = vadd.f32 %v31, %v85
  %s87 = scalar_lea.vmem %s0, 48
  %v88 = vld [vmem:[%s87] sm:$0x3]
  %v89 = vsub.f32 %v86, %v88
  %v90 = vmul.f32 %v89, %v83
  %v91 = vadd.f32 %v90, %v88
  %vm92 = vcmask 254976
  %93 = vst.msk [vmem:[%s4] sm:$0x3] %vm92, %v91
  %s94 = scalar_lea.vmem %s0, 2
  %v95 = vld [vmem:[%s94] sm:$0x3]
  %s96 = scalar_lea.vmem %s0, 18
  %v97 = vld [vmem:[%s96] sm:$0x3]
  %s98 = scalar_lea.vmem %s0, 34
  %v99 = vld [vmem:[%s98] sm:$0x3]
  %v100 = vmul.f32 %v86, %v36
  %v101 = vadd.f32 %v97, %v100
  %v102 = vadd.f32 %v101, %v39
  %v103 = vxor.u32 %v102, 2147483648
  %v104 = vmul.f32 %v103, 1.442695
  %v105 = vpow.pop %v104
  %v106 = vadd.f32 %v105, 1.0
  %v107 = vrcp.pop %v106
  %v108 = vmul.f32 %v106, %v107
  %v109 = vsub.f32 1.0, %v108
  %v110 = vmul.f32 %v107, %v109
  %v111 = vadd.f32 %v107, %v110
  %vm112 = vweird.f32 %v106
  %vm113 = vweird.f32 %v107
  %vm114 = vmor %vm112, %vm113
  %v115 = vsel %vm114, %v107, %v111
  %v116 = vand.u32 2147483647, %v106
  %vm117 = vcmp.eq.f32.partialorder %v116, 8.507059e+37
  %v118 = vand.u32 %v106, 2147483648
  %v119 = vor.u32 1.1754944e-38, %v118
  %v120 = vsel %vm117, %v119, %v115
  %v121 = vmul.f32 1.0, %v120
  %v122 = vmul.f32 %v86, %v60
  %v123 = vadd.f32 %v99, %v122
  %v124 = vadd.f32 %v123, %v63
  %v125 = vxor.u32 %v124, 2147483648
  %v126 = vmul.f32 %v125, 1.442695
  %v127 = vpow.pop %v126
  %v128 = vadd.f32 %v127, 1.0
  %v129 = vrcp.pop %v128
  %v130 = vmul.f32 %v128, %v129
  %v131 = vsub.f32 1.0, %v130
  %v132 = vmul.f32 %v129, %v131
  %v133 = vadd.f32 %v129, %v132
  %vm134 = vweird.f32 %v128
  %vm135 = vweird.f32 %v129
  %vm136 = vmor %vm134, %vm135
  %v137 = vsel %vm136, %v129, %v133
  %v138 = vand.u32 2147483647, %v128
  %vm139 = vcmp.eq.f32.partialorder %v138, 8.507059e+37
  %v140 = vand.u32 %v128, 2147483648
  %v141 = vor.u32 1.1754944e-38, %v140
  %v142 = vsel %vm139, %v141, %v137
  %v143 = vmul.f32 1.0, %v142
  %v144 = vsub.f32 %v86, %v95
  %v145 = vmul.f32 %v144, %v121
  %v146 = vadd.f32 %v95, %v145
  %s147 = scalar_lea.vmem %s0, 50
  %v148 = vld [vmem:[%s147] sm:$0x3]
  %v149 = vsub.f32 %v146, %v148
  %v150 = vmul.f32 %v149, %v143
  %v151 = vadd.f32 %v150, %v148
  %s152 = scalar_lea.vmem %s4, 2
  %153 = vst.msk [vmem:[%s152] sm:$0x3] %vm92, %v151
  %s154 = scalar_lea.vmem %s0, 4
  %v155 = vld [vmem:[%s154] sm:$0x3]
  %s156 = scalar_lea.vmem %s0, 20
  %v157 = vld [vmem:[%s156] sm:$0x3]
  %s158 = scalar_lea.vmem %s0, 36
  %v159 = vld [vmem:[%s158] sm:$0x3]
  %v160 = vmul.f32 %v146, %v36
  %v161 = vadd.f32 %v157, %v160
  %v162 = vadd.f32 %v161, %v39
  %v163 = vxor.u32 %v162, 2147483648
  %v164 = vmul.f32 %v163, 1.442695
  %v165 = vpow.pop %v164
  %v166 = vadd.f32 %v165, 1.0
  %v167 = vrcp.pop %v166
  %v168 = vmul.f32 %v166, %v167
  %v169 = vsub.f32 1.0, %v168
  %v170 = vmul.f32 %v167, %v169
  %v171 = vadd.f32 %v167, %v170
  %vm172 = vweird.f32 %v166
  %vm173 = vweird.f32 %v167
  %vm174 = vmor %vm172, %vm173
  %v175 = vsel %vm174, %v167, %v171
  %v176 = vand.u32 2147483647, %v166
  %vm177 = vcmp.eq.f32.partialorder %v176, 8.507059e+37
  %v178 = vand.u32 %v166, 2147483648
  %v179 = vor.u32 1.1754944e-38, %v178
  %v180 = vsel %vm177, %v179, %v175
  %v181 = vmul.f32 1.0, %v180
  %v182 = vmul.f32 %v146, %v60
  %v183 = vadd.f32 %v159, %v182
  %v184 = vadd.f32 %v183, %v63
  %v185 = vxor.u32 %v184, 2147483648
  %v186 = vmul.f32 %v185, 1.442695
  %v187 = vpow.pop %v186
  %v188 = vadd.f32 %v187, 1.0
  %v189 = vrcp.pop %v188
  %v190 = vmul.f32 %v188, %v189
  %v191 = vsub.f32 1.0, %v190
  %v192 = vmul.f32 %v189, %v191
  %v193 = vadd.f32 %v189, %v192
  %vm194 = vweird.f32 %v188
  %vm195 = vweird.f32 %v189
  %vm196 = vmor %vm194, %vm195
  %v197 = vsel %vm196, %v189, %v193
  %v198 = vand.u32 2147483647, %v188
  %vm199 = vcmp.eq.f32.partialorder %v198, 8.507059e+37
  %v200 = vand.u32 %v188, 2147483648
  %v201 = vor.u32 1.1754944e-38, %v200
  %v202 = vsel %vm199, %v201, %v197
  %v203 = vmul.f32 1.0, %v202
  %v204 = vsub.f32 %v146, %v155
  %v205 = vmul.f32 %v204, %v181
  %v206 = vadd.f32 %v155, %v205
  %s207 = scalar_lea.vmem %s0, 52
  %v208 = vld [vmem:[%s207] sm:$0x3]
  %v209 = vsub.f32 %v206, %v208
  %v210 = vmul.f32 %v209, %v203
  %v211 = vadd.f32 %v210, %v208
  %s212 = scalar_lea.vmem %s4, 4
  %213 = vst.msk [vmem:[%s212] sm:$0x3] %vm92, %v211
  %s214 = scalar_lea.vmem %s0, 6
  %v215 = vld [vmem:[%s214] sm:$0x3]
  %s216 = scalar_lea.vmem %s0, 22
  %v217 = vld [vmem:[%s216] sm:$0x3]
  %s218 = scalar_lea.vmem %s0, 38
  %v219 = vld [vmem:[%s218] sm:$0x3]
  %v220 = vmul.f32 %v206, %v36
  %v221 = vadd.f32 %v217, %v220
  %v222 = vadd.f32 %v221, %v39
  %v223 = vxor.u32 %v222, 2147483648
  %v224 = vmul.f32 %v223, 1.442695
  %v225 = vpow.pop %v224
  %v226 = vadd.f32 %v225, 1.0
  %v227 = vrcp.pop %v226
  %v228 = vmul.f32 %v226, %v227
  %v229 = vsub.f32 1.0, %v228
  %v230 = vmul.f32 %v227, %v229
  %v231 = vadd.f32 %v227, %v230
  %vm232 = vweird.f32 %v226
  %vm233 = vweird.f32 %v227
  %vm234 = vmor %vm232, %vm233
  %v235 = vsel %vm234, %v227, %v231
  %v236 = vand.u32 2147483647, %v226
  %vm237 = vcmp.eq.f32.partialorder %v236, 8.507059e+37
  %v238 = vand.u32 %v226, 2147483648
  %v239 = vor.u32 1.1754944e-38, %v238
  %v240 = vsel %vm237, %v239, %v235
  %v241 = vmul.f32 1.0, %v240
  %v242 = vmul.f32 %v206, %v60
  %v243 = vadd.f32 %v219, %v242
  %v244 = vadd.f32 %v243, %v63
  %v245 = vxor.u32 %v244, 2147483648
  %v246 = vmul.f32 %v245, 1.442695
  %v247 = vpow.pop %v246
  %v248 = vadd.f32 %v247, 1.0
  %v249 = vrcp.pop %v248
  %v250 = vmul.f32 %v248, %v249
  %v251 = vsub.f32 1.0, %v250
  %v252 = vmul.f32 %v249, %v251
  %v253 = vadd.f32 %v249, %v252
  %vm254 = vweird.f32 %v248
  %vm255 = vweird.f32 %v249
  %vm256 = vmor %vm254, %vm255
  %v257 = vsel %vm256, %v249, %v253
  %v258 = vand.u32 2147483647, %v248
  %vm259 = vcmp.eq.f32.partialorder %v258, 8.507059e+37
  %v260 = vand.u32 %v248, 2147483648
  %v261 = vor.u32 1.1754944e-38, %v260
  %v262 = vsel %vm259, %v261, %v257
  %v263 = vmul.f32 1.0, %v262
  %v264 = vsub.f32 %v206, %v215
  %v265 = vmul.f32 %v264, %v241
  %v266 = vadd.f32 %v215, %v265
  %s267 = scalar_lea.vmem %s0, 54
  %v268 = vld [vmem:[%s267] sm:$0x3]
  %v269 = vsub.f32 %v266, %v268
  %v270 = vmul.f32 %v269, %v263
  %v271 = vadd.f32 %v270, %v268
  %s272 = scalar_lea.vmem %s4, 6
  %273 = vst.msk [vmem:[%s272] sm:$0x3] %vm92, %v271
  %s274 = scalar_lea.vmem %s0, 8
  %v275 = vld [vmem:[%s274] sm:$0x3]
  %s276 = scalar_lea.vmem %s0, 24
  %v277 = vld [vmem:[%s276] sm:$0x3]
  %s278 = scalar_lea.vmem %s0, 40
  %v279 = vld [vmem:[%s278] sm:$0x3]
  %v280 = vmul.f32 %v266, %v36
  %v281 = vadd.f32 %v277, %v280
  %v282 = vadd.f32 %v281, %v39
  %v283 = vxor.u32 %v282, 2147483648
  %v284 = vmul.f32 %v283, 1.442695
  %v285 = vpow.pop %v284
  %v286 = vadd.f32 %v285, 1.0
  %v287 = vrcp.pop %v286
  %v288 = vmul.f32 %v286, %v287
  %v289 = vsub.f32 1.0, %v288
  %v290 = vmul.f32 %v287, %v289
  %v291 = vadd.f32 %v287, %v290
  %vm292 = vweird.f32 %v286
  %vm293 = vweird.f32 %v287
  %vm294 = vmor %vm292, %vm293
  %v295 = vsel %vm294, %v287, %v291
  %v296 = vand.u32 2147483647, %v286
  %vm297 = vcmp.eq.f32.partialorder %v296, 8.507059e+37
  %v298 = vand.u32 %v286, 2147483648
  %v299 = vor.u32 1.1754944e-38, %v298
  %v300 = vsel %vm297, %v299, %v295
  %v301 = vmul.f32 1.0, %v300
  %v302 = vmul.f32 %v266, %v60
  %v303 = vadd.f32 %v279, %v302
  %v304 = vadd.f32 %v303, %v63
  %v305 = vxor.u32 %v304, 2147483648
  %v306 = vmul.f32 %v305, 1.442695
  %v307 = vpow.pop %v306
  %v308 = vadd.f32 %v307, 1.0
  %v309 = vrcp.pop %v308
  %v310 = vmul.f32 %v308, %v309
  %v311 = vsub.f32 1.0, %v310
  %v312 = vmul.f32 %v309, %v311
  %v313 = vadd.f32 %v309, %v312
  %vm314 = vweird.f32 %v308
  %vm315 = vweird.f32 %v309
  %vm316 = vmor %vm314, %vm315
  %v317 = vsel %vm316, %v309, %v313
  %v318 = vand.u32 2147483647, %v308
  %vm319 = vcmp.eq.f32.partialorder %v318, 8.507059e+37
  %v320 = vand.u32 %v308, 2147483648
  %v321 = vor.u32 1.1754944e-38, %v320
  %v322 = vsel %vm319, %v321, %v317
  %v323 = vmul.f32 1.0, %v322
  %v324 = vsub.f32 %v266, %v275
  %v325 = vmul.f32 %v324, %v301
  %v326 = vadd.f32 %v275, %v325
  %s327 = scalar_lea.vmem %s0, 56
  %v328 = vld [vmem:[%s327] sm:$0x3]
  %v329 = vsub.f32 %v326, %v328
  %v330 = vmul.f32 %v329, %v323
  %v331 = vadd.f32 %v330, %v328
  %s332 = scalar_lea.vmem %s4, 8
  %333 = vst.msk [vmem:[%s332] sm:$0x3] %vm92, %v331
  %s334 = scalar_lea.vmem %s0, 10
  %v335 = vld [vmem:[%s334] sm:$0x3]
  %s336 = scalar_lea.vmem %s0, 26
  %v337 = vld [vmem:[%s336] sm:$0x3]
  %s338 = scalar_lea.vmem %s0, 42
  %v339 = vld [vmem:[%s338] sm:$0x3]
  %v340 = vmul.f32 %v326, %v36
  %v341 = vadd.f32 %v337, %v340
  %v342 = vadd.f32 %v341, %v39
  %v343 = vxor.u32 %v342, 2147483648
  %v344 = vmul.f32 %v343, 1.442695
  %v345 = vpow.pop %v344
  %v346 = vadd.f32 %v345, 1.0
  %v347 = vrcp.pop %v346
  %v348 = vmul.f32 %v346, %v347
  %v349 = vsub.f32 1.0, %v348
  %v350 = vmul.f32 %v347, %v349
  %v351 = vadd.f32 %v347, %v350
  %vm352 = vweird.f32 %v346
  %vm353 = vweird.f32 %v347
  %vm354 = vmor %vm352, %vm353
  %v355 = vsel %vm354, %v347, %v351
  %v356 = vand.u32 2147483647, %v346
  %vm357 = vcmp.eq.f32.partialorder %v356, 8.507059e+37
  %v358 = vand.u32 %v346, 2147483648
  %v359 = vor.u32 1.1754944e-38, %v358
  %v360 = vsel %vm357, %v359, %v355
  %v361 = vmul.f32 1.0, %v360
  %v362 = vmul.f32 %v326, %v60
  %v363 = vadd.f32 %v339, %v362
  %v364 = vadd.f32 %v363, %v63
  %v365 = vxor.u32 %v364, 2147483648
  %v366 = vmul.f32 %v365, 1.442695
  %v367 = vpow.pop %v366
  %v368 = vadd.f32 %v367, 1.0
  %v369 = vrcp.pop %v368
  %v370 = vmul.f32 %v368, %v369
  %v371 = vsub.f32 1.0, %v370
  %v372 = vmul.f32 %v369, %v371
  %v373 = vadd.f32 %v369, %v372
  %vm374 = vweird.f32 %v368
  %vm375 = vweird.f32 %v369
  %vm376 = vmor %vm374, %vm375
  %v377 = vsel %vm376, %v369, %v373
  %v378 = vand.u32 2147483647, %v368
  %vm379 = vcmp.eq.f32.partialorder %v378, 8.507059e+37
  %v380 = vand.u32 %v368, 2147483648
  %v381 = vor.u32 1.1754944e-38, %v380
  %v382 = vsel %vm379, %v381, %v377
  %v383 = vmul.f32 1.0, %v382
  %v384 = vsub.f32 %v326, %v335
  %v385 = vmul.f32 %v384, %v361
  %v386 = vadd.f32 %v335, %v385
  %s387 = scalar_lea.vmem %s0, 58
  %v388 = vld [vmem:[%s387] sm:$0x3]
  %v389 = vsub.f32 %v386, %v388
  %v390 = vmul.f32 %v389, %v383
  %v391 = vadd.f32 %v390, %v388
  %s392 = scalar_lea.vmem %s4, 10
  %393 = vst.msk [vmem:[%s392] sm:$0x3] %vm92, %v391
  %s394 = scalar_lea.vmem %s0, 12
  %v395 = vld [vmem:[%s394] sm:$0x3]
  %s396 = scalar_lea.vmem %s0, 28
  %v397 = vld [vmem:[%s396] sm:$0x3]
  %s398 = scalar_lea.vmem %s0, 44
  %v399 = vld [vmem:[%s398] sm:$0x3]
  %v400 = vmul.f32 %v386, %v36
  %v401 = vadd.f32 %v397, %v400
  %v402 = vadd.f32 %v401, %v39
  %v403 = vxor.u32 %v402, 2147483648
  %v404 = vmul.f32 %v403, 1.442695
  %v405 = vpow.pop %v404
  %v406 = vadd.f32 %v405, 1.0
  %v407 = vrcp.pop %v406
  %v408 = vmul.f32 %v406, %v407
  %v409 = vsub.f32 1.0, %v408
  %v410 = vmul.f32 %v407, %v409
  %v411 = vadd.f32 %v407, %v410
  %vm412 = vweird.f32 %v406
  %vm413 = vweird.f32 %v407
  %vm414 = vmor %vm412, %vm413
  %v415 = vsel %vm414, %v407, %v411
  %v416 = vand.u32 2147483647, %v406
  %vm417 = vcmp.eq.f32.partialorder %v416, 8.507059e+37
  %v418 = vand.u32 %v406, 2147483648
  %v419 = vor.u32 1.1754944e-38, %v418
  %v420 = vsel %vm417, %v419, %v415
  %v421 = vmul.f32 1.0, %v420
  %v422 = vmul.f32 %v386, %v60
  %v423 = vadd.f32 %v399, %v422
  %v424 = vadd.f32 %v423, %v63
  %v425 = vxor.u32 %v424, 2147483648
  %v426 = vmul.f32 %v425, 1.442695
  %v427 = vpow.pop %v426
  %v428 = vadd.f32 %v427, 1.0
  %v429 = vrcp.pop %v428
  %v430 = vmul.f32 %v428, %v429
  %v431 = vsub.f32 1.0, %v430
  %v432 = vmul.f32 %v429, %v431
  %v433 = vadd.f32 %v429, %v432
  %vm434 = vweird.f32 %v428
  %vm435 = vweird.f32 %v429
  %vm436 = vmor %vm434, %vm435
  %v437 = vsel %vm436, %v429, %v433
  %v438 = vand.u32 2147483647, %v428
  %vm439 = vcmp.eq.f32.partialorder %v438, 8.507059e+37
  %v440 = vand.u32 %v428, 2147483648
  %v441 = vor.u32 1.1754944e-38, %v440
  %v442 = vsel %vm439, %v441, %v437
  %v443 = vmul.f32 1.0, %v442
  %v444 = vsub.f32 %v386, %v395
  %v445 = vmul.f32 %v444, %v421
  %v446 = vadd.f32 %v395, %v445
  %s447 = scalar_lea.vmem %s0, 60
  %v448 = vld [vmem:[%s447] sm:$0x3]
  %v449 = vsub.f32 %v446, %v448
  %v450 = vmul.f32 %v449, %v443
  %v451 = vadd.f32 %v450, %v448
  %s452 = scalar_lea.vmem %s4, 12
  %453 = vst.msk [vmem:[%s452] sm:$0x3] %vm92, %v451
  %s454 = scalar_lea.vmem %s0, 14
  %v455 = vld [vmem:[%s454] sm:$0x3]
  %s456 = scalar_lea.vmem %s0, 30
  %v457 = vld [vmem:[%s456] sm:$0x3]
  %s458 = scalar_lea.vmem %s0, 46
  %v459 = vld [vmem:[%s458] sm:$0x3]
  %v460 = vmul.f32 %v446, %v36
  %v461 = vadd.f32 %v457, %v460
  %v462 = vadd.f32 %v461, %v39
  %v463 = vxor.u32 %v462, 2147483648
  %v464 = vmul.f32 %v463, 1.442695
  %v465 = vpow.pop %v464
  %v466 = vadd.f32 %v465, 1.0
  %v467 = vrcp.pop %v466
  %v468 = vmul.f32 %v466, %v467
  %v469 = vsub.f32 1.0, %v468
  %v470 = vmul.f32 %v467, %v469
  %v471 = vadd.f32 %v467, %v470
  %vm472 = vweird.f32 %v466
  %vm473 = vweird.f32 %v467
  %vm474 = vmor %vm472, %vm473
  %v475 = vsel %vm474, %v467, %v471
  %v476 = vand.u32 2147483647, %v466
  %vm477 = vcmp.eq.f32.partialorder %v476, 8.507059e+37
  %v478 = vand.u32 %v466, 2147483648
  %v479 = vor.u32 1.1754944e-38, %v478
  %v480 = vsel %vm477, %v479, %v475
  %v481 = vmul.f32 1.0, %v480
  %v482 = vmul.f32 %v446, %v60
  %v483 = vadd.f32 %v459, %v482
  %v484 = vadd.f32 %v483, %v63
  %v485 = vxor.u32 %v484, 2147483648
  %v486 = vmul.f32 %v485, 1.442695
  %v487 = vpow.pop %v486
  %v488 = vadd.f32 %v487, 1.0
  %v489 = vrcp.pop %v488
  %v490 = vmul.f32 %v488, %v489
  %v491 = vsub.f32 1.0, %v490
  %v492 = vmul.f32 %v489, %v491
  %v493 = vadd.f32 %v489, %v492
  %vm494 = vweird.f32 %v488
  %vm495 = vweird.f32 %v489
  %vm496 = vmor %vm494, %vm495
  %v497 = vsel %vm496, %v489, %v493
  %v498 = vand.u32 2147483647, %v488
  %vm499 = vcmp.eq.f32.partialorder %v498, 8.507059e+37
  %v500 = vand.u32 %v488, 2147483648
  %v501 = vor.u32 1.1754944e-38, %v500
  %v502 = vsel %vm499, %v501, %v497
  %v503 = vmul.f32 1.0, %v502
  %v504 = vsub.f32 %v446, %v455
  %v505 = vmul.f32 %v504, %v481
  %v506 = vadd.f32 %v455, %v505
  %s507 = scalar_lea.vmem %s0, 62
  %v508 = vld [vmem:[%s507] sm:$0x3]
  %v509 = vsub.f32 %v506, %v508
  %v510 = vmul.f32 %v509, %v503
  %v511 = vadd.f32 %v510, %v508
  %s512 = scalar_lea.vmem %s4, 14
  %513 = vst.msk [vmem:[%s512] sm:$0x3] %vm92, %v511
  %514 = vst.msk [vmem:[%s5] sm:$0x3] %vm92, %v506
  // Predicated region
  $region22: #{_lambda_.5} parent=0 // pred_check
    _
  $region23: #{_lambda_.5} parent=0 // pred_check_branch
    %516 = sbr.rel (0) target = $region25
  $region24: #{_lambda_.5} parent=0 // pred_region
    _
  $region25: #{_lambda_.5} parent=0 // pred_fallthru
    _
  // Predicated region
  $region26: #{_lambda_.5} parent=0 // pred_check
    _
  $region27: #{_lambda_.5} parent=0 // pred_check_branch
    %518 = sbr.rel (0) target = $region29
  $region28: #{_lambda_.5} parent=0 // pred_region
    _
  $region29: #{_lambda_.5} parent=0 // pred_fallthru
    _
  // Predicated region
  $region30: #{_lambda_.5} parent=0 // pred_check
    _
  $region31: #{_lambda_.5} parent=0 // pred_check_branch
    %520 = sbr.rel (0) target = $region33
  $region32: #{_lambda_.5} parent=0 // pred_region
    _
  $region33: #{_lambda_.5} parent=0 // pred_fallthru
    _
  // Predicated region
  $region34: #{_lambda_.5} parent=0 // pred_check
    _
  $region35: #{_lambda_.5} parent=0 // pred_check_branch
    %522 = sbr.rel (0) target = $region37
  $region36: #{_lambda_.5} parent=0 // pred_region
    _
  $region37: #{_lambda_.5} parent=0 // pred_fallthru
    _

// kernel: _lambda_.7
$region0: #{_lambda_.7}
  #allocation0 [shape = 'u32[]', space=smem, size = 0x4, offset = 0x4, fixed_abs, tag = 'smem constant byte address 0x4 - core index']
  #allocation1 [shape = 'u32[72,128]{1,0:T(1,128)}', space=vmem, size = 0x9000, scoped, tag = 'internal scratch']
  %s0 = inlined_call_operand.vmem [shape: f32[3,8,2,32], index: 0, kind: input, shape index: {}]
  %s1 = inlined_call_operand.vmem [shape: f32[2,32], index: 1, kind: input, shape index: {}]
  %s2 = inlined_call_operand.vmem [shape: f32[2,32], index: 2, kind: input, shape index: {}, may-alias: {2,3}]
  %s3 = inlined_call_operand.vmem [shape: f32[2,32], index: 3, kind: input, shape index: {}, may-alias: {2,3}]
  %s4 = inlined_call_operand.vmem [shape: f32[8,2,32], index: 4, kind: input, shape index: {}]
  %s5 = inlined_call_operand.hbm [shape: f32[8,2,32], index: 5, kind: output, shape index: {0}]
  %s6 = inlined_call_operand.vmem [shape: f32[2,32], index: 6, kind: output, shape index: {1}]
  %7 = xla_tuple %s5, %s6
  %s8 = sld [smem:[#allocation0]]
  $region42: #{_lambda_.7} parent=0
    _
  %s10 = ssub.s32 1, %s8
  %s11 = scalar_select 0, %s10, %s8
  $region1: #{_lambda_.7} parent=0
    #allocation2 [shape = 'u8[8192]{0}', space=vmem, size = 0x2000, scoped, tag = 'output window, operand 0, single buffered']
    #allocation3 [shape = 's32[1]{0}', space=sflag, size = 0x4, scoped, tag = 'scoped memory for _lambda_.7']
    %12 = vsyncpa [#allocation3], 0
    // Predicated region
    $region2: #{_lambda_.7} parent=1 // pred_check
      _
    $region3: #{_lambda_.7} parent=1 // pred_check_branch
      %14 = sbr.rel (0) target = $region5
    $region4: #{_lambda_.7} parent=1 // pred_region
      _
    $region5: #{_lambda_.7} parent=1 // pred_fallthru
      _
    // Predicated region
    $region6: #{_lambda_.7} parent=1 // pred_check
      _
    $region7: #{_lambda_.7} parent=1 // pred_check_branch
      %16 = sbr.rel (0) target = $region9
    $region8: #{_lambda_.7} parent=1 // pred_region
      _
    $region9: #{_lambda_.7} parent=1 // pred_fallthru
      _
    // Predicated region
    $region10: #{_lambda_.7} parent=1 // pred_check
      _
    $region11: #{_lambda_.7} parent=1 // pred_check_branch
      %18 = sbr.rel (0) target = $region13
    $region12: #{_lambda_.7} parent=1 // pred_region
      _
    $region13: #{_lambda_.7} parent=1 // pred_fallthru
      _
    // Predicated region
    $region14: #{_lambda_.7} parent=1 // pred_check
      _
    $region15: #{_lambda_.7} parent=1 // pred_check_branch
      %20 = sbr.rel (0) target = $region17
    $region16: #{_lambda_.7} parent=1 // pred_region
      _
    $region17: #{_lambda_.7} parent=1 // pred_fallthru
      _
    // Predicated region
    $region18: #{_lambda_.7} parent=1 // pred_check
      _
    $region19: #{_lambda_.7} parent=1 // pred_check_branch
      %22 = sbr.rel (0) target = $region21
    $region20: #{_lambda_.7} parent=1 // pred_region
      _
    $region21: #{_lambda_.7} parent=1 // pred_fallthru
      _
    %p23 = scmp.eq.s32.totalorder 0, 0
    // Predicated region
    $region22: #{_lambda_.7} parent=1 // pred_check
      %p24 = pneg %p23
    $region23: #{_lambda_.7} parent=1 // pred_check_branch
      %26 = sbr.rel (%p24) target = $region25
    $region24: #{_lambda_.7} parent=1 // pred_region
      %v27 = vld [vmem:[%s3] sm:$0x3]
      %vm28 = vcmask 254976
      %29 = vst.msk [vmem:[%s6] sm:$0x3] %vm28, %v27
    $region25: #{_lambda_.7} parent=1 // pred_fallthru
      _
    %v30 = vld [vmem:[%s1] sm:$0x1]
    %v31 = vld [vmem:[%s1 + $0x1] sm:$0x1]
    %v32 = vld [vmem:[%s2] sm:$0x1]
    %v33 = vld [vmem:[%s2 + $0x1] sm:$0x1]
    %v34 = vld [vmem:[%s6] sm:$0x3]
    %v35 = vld [vmem:[%s0] sm:$0x3]
    %s36 = scalar_lea.vmem %s0, 16
    %v37 = vld [vmem:[%s36] sm:$0x3]
    %s38 = scalar_lea.vmem %s0, 32
    %v39 = vld [vmem:[%s38] sm:$0x3]
    %v40 = vperm.slane %v30, 0
    %v41 = vmul.f32 %v34, %v40
    %v42 = vadd.f32 %v37, %v41
    %v43 = vperm.slane %v32, 0
    %v44 = vadd.f32 %v42, %v43
    %v45 = vxor.u32 %v44, 2147483648
    %v46 = vmul.f32 %v45, 1.442695
    %v47 = vpow.pop %v46
    %v48 = vadd.f32 %v47, 1.0
    %v49 = vrcp.pop %v48
    %v50 = vmul.f32 %v48, %v49
    %v51 = vsub.f32 1.0, %v50
    %v52 = vmul.f32 %v49, %v51
    %v53 = vadd.f32 %v49, %v52
    %vm54 = vweird.f32 %v48
    %vm55 = vweird.f32 %v49
    %vm56 = vmor %vm54, %vm55
    %v57 = vsel %vm56, %v49, %v53
    %v58 = vand.u32 2147483647, %v48
    %vm59 = vcmp.eq.f32.partialorder %v58, 8.507059e+37
    %v60 = vand.u32 %v48, 2147483648
    %v61 = vor.u32 1.1754944e-38, %v60
    %v62 = vsel %vm59, %v61, %v57
    %v63 = vmul.f32 1.0, %v62
    %v64 = vperm.slane %v31, 0
    %v65 = vmul.f32 %v34, %v64
    %v66 = vadd.f32 %v39, %v65
    %v67 = vperm.slane %v33, 0
    %v68 = vadd.f32 %v66, %v67
    %v69 = vxor.u32 %v68, 2147483648
    %v70 = vmul.f32 %v69, 1.442695
    %v71 = vpow.pop %v70
    %v72 = vadd.f32 %v71, 1.0
    %v73 = vrcp.pop %v72
    %v74 = vmul.f32 %v72, %v73
    %v75 = vsub.f32 1.0, %v74
    %v76 = vmul.f32 %v73, %v75
    %v77 = vadd.f32 %v73, %v76
    %vm78 = vweird.f32 %v72
    %vm79 = vweird.f32 %v73
    %vm80 = vmor %vm78, %vm79
    %v81 = vsel %vm80, %v73, %v77
    %v82 = vand.u32 2147483647, %v72
    %vm83 = vcmp.eq.f32.partialorder %v82, 8.507059e+37
    %v84 = vand.u32 %v72, 2147483648
    %v85 = vor.u32 1.1754944e-38, %v84
    %v86 = vsel %vm83, %v85, %v81
    %v87 = vmul.f32 1.0, %v86
    %v88 = vsub.f32 %v34, %v35
    %v89 = vmul.f32 %v88, %v63
    %v90 = vadd.f32 %v35, %v89
    %v91 = vld [vmem:[%s4] sm:$0x3]
    %v92 = vmul.f32 %v91, 1.7320508
    %v93 = vsub.f32 %v90, %v92
    %v94 = vmul.f32 %v93, %v87
    %v95 = vadd.f32 %v94, %v92
    %vm96 = vcmask 254976
    %97 = vst.msk [vmem:[#allocation2] sm:$0x3] %vm96, %v95
    %s98 = scalar_lea.vmem %s0, 2
    %v99 = vld [vmem:[%s98] sm:$0x3]
    %s100 = scalar_lea.vmem %s0, 18
    %v101 = vld [vmem:[%s100] sm:$0x3]
    %s102 = scalar_lea.vmem %s0, 34
    %v103 = vld [vmem:[%s102] sm:$0x3]
    %v104 = vmul.f32 %v90, %v40
    %v105 = vadd.f32 %v101, %v104
    %v106 = vadd.f32 %v105, %v43
    %v107 = vxor.u32 %v106, 2147483648
    %v108 = vmul.f32 %v107, 1.442695
    %v109 = vpow.pop %v108
    %v110 = vadd.f32 %v109, 1.0
    %v111 = vrcp.pop %v110
    %v112 = vmul.f32 %v110, %v111
    %v113 = vsub.f32 1.0, %v112
    %v114 = vmul.f32 %v111, %v113
    %v115 = vadd.f32 %v111, %v114
    %vm116 = vweird.f32 %v110
    %vm117 = vweird.f32 %v111
    %vm118 = vmor %vm116, %vm117
    %v119 = vsel %vm118, %v111, %v115
    %v120 = vand.u32 2147483647, %v110
    %vm121 = vcmp.eq.f32.partialorder %v120, 8.507059e+37
    %v122 = vand.u32 %v110, 2147483648
    %v123 = vor.u32 1.1754944e-38, %v122
    %v124 = vsel %vm121, %v123, %v119
    %v125 = vmul.f32 1.0, %v124
    %v126 = vmul.f32 %v90, %v64
    %v127 = vadd.f32 %v103, %v126
    %v128 = vadd.f32 %v127, %v67
    %v129 = vxor.u32 %v128, 2147483648
    %v130 = vmul.f32 %v129, 1.442695
    %v131 = vpow.pop %v130
    %v132 = vadd.f32 %v131, 1.0
    %v133 = vrcp.pop %v132
    %v134 = vmul.f32 %v132, %v133
    %v135 = vsub.f32 1.0, %v134
    %v136 = vmul.f32 %v133, %v135
    %v137 = vadd.f32 %v133, %v136
    %vm138 = vweird.f32 %v132
    %vm139 = vweird.f32 %v133
    %vm140 = vmor %vm138, %vm139
    %v141 = vsel %vm140, %v133, %v137
    %v142 = vand.u32 2147483647, %v132
    %vm143 = vcmp.eq.f32.partialorder %v142, 8.507059e+37
    %v144 = vand.u32 %v132, 2147483648
    %v145 = vor.u32 1.1754944e-38, %v144
    %v146 = vsel %vm143, %v145, %v141
    %v147 = vmul.f32 1.0, %v146
    %v148 = vsub.f32 %v90, %v99
    %v149 = vmul.f32 %v148, %v125
    %v150 = vadd.f32 %v99, %v149
    %s151 = scalar_lea.vmem %s4, 2
    %v152 = vld [vmem:[%s151] sm:$0x3]
    %v153 = vmul.f32 %v152, 1.7320508
    %v154 = vsub.f32 %v150, %v153
    %v155 = vmul.f32 %v154, %v147
    %v156 = vadd.f32 %v155, %v153
    %s157 = scalar_lea.vmem [#allocation2], 2
    %158 = vst.msk [vmem:[%s157] sm:$0x3] %vm96, %v156
    %s159 = scalar_lea.vmem %s0, 4
    %v160 = vld [vmem:[%s159] sm:$0x3]
    %s161 = scalar_lea.vmem %s0, 20
    %v162 = vld [vmem:[%s161] sm:$0x3]
    %s163 = scalar_lea.vmem %s0, 36
    %v164 = vld [vmem:[%s163] sm:$0x3]
    %v165 = vmul.f32 %v150, %v40
    %v166 = vadd.f32 %v162, %v165
    %v167 = vadd.f32 %v166, %v43
    %v168 = vxor.u32 %v167, 2147483648
    %v169 = vmul.f32 %v168, 1.442695
    %v170 = vpow.pop %v169
    %v171 = vadd.f32 %v170, 1.0
    %v172 = vrcp.pop %v171
    %v173 = vmul.f32 %v171, %v172
    %v174 = vsub.f32 1.0, %v173
    %v175 = vmul.f32 %v172, %v174
    %v176 = vadd.f32 %v172, %v175
    %vm177 = vweird.f32 %v171
    %vm178 = vweird.f32 %v172
    %vm179 = vmor %vm177, %vm178
    %v180 = vsel %vm179, %v172, %v176
    %v181 = vand.u32 2147483647, %v171
    %vm182 = vcmp.eq.f32.partialorder %v181, 8.507059e+37
    %v183 = vand.u32 %v171, 2147483648
    %v184 = vor.u32 1.1754944e-38, %v183
    %v185 = vsel %vm182, %v184, %v180
    %v186 = vmul.f32 1.0, %v185
    %v187 = vmul.f32 %v150, %v64
    %v188 = vadd.f32 %v164, %v187
    %v189 = vadd.f32 %v188, %v67
    %v190 = vxor.u32 %v189, 2147483648
    %v191 = vmul.f32 %v190, 1.442695
    %v192 = vpow.pop %v191
    %v193 = vadd.f32 %v192, 1.0
    %v194 = vrcp.pop %v193
    %v195 = vmul.f32 %v193, %v194
    %v196 = vsub.f32 1.0, %v195
    %v197 = vmul.f32 %v194, %v196
    %v198 = vadd.f32 %v194, %v197
    %vm199 = vweird.f32 %v193
    %vm200 = vweird.f32 %v194
    %vm201 = vmor %vm199, %vm200
    %v202 = vsel %vm201, %v194, %v198
    %v203 = vand.u32 2147483647, %v193
    %vm204 = vcmp.eq.f32.partialorder %v203, 8.507059e+37
    %v205 = vand.u32 %v193, 2147483648
    %v206 = vor.u32 1.1754944e-38, %v205
    %v207 = vsel %vm204, %v206, %v202
    %v208 = vmul.f32 1.0, %v207
    %v209 = vsub.f32 %v150, %v160
    %v210 = vmul.f32 %v209, %v186
    %v211 = vadd.f32 %v160, %v210
    %s212 = scalar_lea.vmem %s4, 4
    %v213 = vld [vmem:[%s212] sm:$0x3]
    %v214 = vmul.f32 %v213, 1.7320508
    %v215 = vsub.f32 %v211, %v214
    %v216 = vmul.f32 %v215, %v208
    %v217 = vadd.f32 %v216, %v214
    %s218 = scalar_lea.vmem [#allocation2], 4
    %219 = vst.msk [vmem:[%s218] sm:$0x3] %vm96, %v217
    %s220 = scalar_lea.vmem %s0, 6
    %v221 = vld [vmem:[%s220] sm:$0x3]
    %s222 = scalar_lea.vmem %s0, 22
    %v223 = vld [vmem:[%s222] sm:$0x3]
    %s224 = scalar_lea.vmem %s0, 38
    %v225 = vld [vmem:[%s224] sm:$0x3]
    %v226 = vmul.f32 %v211, %v40
    %v227 = vadd.f32 %v223, %v226
    %v228 = vadd.f32 %v227, %v43
    %v229 = vxor.u32 %v228, 2147483648
    %v230 = vmul.f32 %v229, 1.442695
    %v231 = vpow.pop %v230
    %v232 = vadd.f32 %v231, 1.0
    %v233 = vrcp.pop %v232
    %v234 = vmul.f32 %v232, %v233
    %v235 = vsub.f32 1.0, %v234
    %v236 = vmul.f32 %v233, %v235
    %v237 = vadd.f32 %v233, %v236
    %vm238 = vweird.f32 %v232
    %vm239 = vweird.f32 %v233
    %vm240 = vmor %vm238, %vm239
    %v241 = vsel %vm240, %v233, %v237
    %v242 = vand.u32 2147483647, %v232
    %vm243 = vcmp.eq.f32.partialorder %v242, 8.507059e+37
    %v244 = vand.u32 %v232, 2147483648
    %v245 = vor.u32 1.1754944e-38, %v244
    %v246 = vsel %vm243, %v245, %v241
    %v247 = vmul.f32 1.0, %v246
    %v248 = vmul.f32 %v211, %v64
    %v249 = vadd.f32 %v225, %v248
    %v250 = vadd.f32 %v249, %v67
    %v251 = vxor.u32 %v250, 2147483648
    %v252 = vmul.f32 %v251, 1.442695
    %v253 = vpow.pop %v252
    %v254 = vadd.f32 %v253, 1.0
    %v255 = vrcp.pop %v254
    %v256 = vmul.f32 %v254, %v255
    %v257 = vsub.f32 1.0, %v256
    %v258 = vmul.f32 %v255, %v257
    %v259 = vadd.f32 %v255, %v258
    %vm260 = vweird.f32 %v254
    %vm261 = vweird.f32 %v255
    %vm262 = vmor %vm260, %vm261
    %v263 = vsel %vm262, %v255, %v259
    %v264 = vand.u32 2147483647, %v254
    %vm265 = vcmp.eq.f32.partialorder %v264, 8.507059e+37
    %v266 = vand.u32 %v254, 2147483648
    %v267 = vor.u32 1.1754944e-38, %v266
    %v268 = vsel %vm265, %v267, %v263
    %v269 = vmul.f32 1.0, %v268
    %v270 = vsub.f32 %v211, %v221
    %v271 = vmul.f32 %v270, %v247
    %v272 = vadd.f32 %v221, %v271
    %s273 = scalar_lea.vmem %s4, 6
    %v274 = vld [vmem:[%s273] sm:$0x3]
    %v275 = vmul.f32 %v274, 1.7320508
    %v276 = vsub.f32 %v272, %v275
    %v277 = vmul.f32 %v276, %v269
    %v278 = vadd.f32 %v277, %v275
    %s279 = scalar_lea.vmem [#allocation2], 6
    %280 = vst.msk [vmem:[%s279] sm:$0x3] %vm96, %v278
    %s281 = scalar_lea.vmem %s0, 8
    %v282 = vld [vmem:[%s281] sm:$0x3]
    %s283 = scalar_lea.vmem %s0, 24
    %v284 = vld [vmem:[%s283] sm:$0x3]
    %s285 = scalar_lea.vmem %s0, 40
    %v286 = vld [vmem:[%s285] sm:$0x3]
    %v287 = vmul.f32 %v272, %v40
    %v288 = vadd.f32 %v284, %v287
    %v289 = vadd.f32 %v288, %v43
    %v290 = vxor.u32 %v289, 2147483648
    %v291 = vmul.f32 %v290, 1.442695
    %v292 = vpow.pop %v291
    %v293 = vadd.f32 %v292, 1.0
    %v294 = vrcp.pop %v293
    %v295 = vmul.f32 %v293, %v294
    %v296 = vsub.f32 1.0, %v295
    %v297 = vmul.f32 %v294, %v296
    %v298 = vadd.f32 %v294, %v297
    %vm299 = vweird.f32 %v293
    %vm300 = vweird.f32 %v294
    %vm301 = vmor %vm299, %vm300
    %v302 = vsel %vm301, %v294, %v298
    %v303 = vand.u32 2147483647, %v293
    %vm304 = vcmp.eq.f32.partialorder %v303, 8.507059e+37
    %v305 = vand.u32 %v293, 2147483648
    %v306 = vor.u32 1.1754944e-38, %v305
    %v307 = vsel %vm304, %v306, %v302
    %v308 = vmul.f32 1.0, %v307
    %v309 = vmul.f32 %v272, %v64
    %v310 = vadd.f32 %v286, %v309
    %v311 = vadd.f32 %v310, %v67
    %v312 = vxor.u32 %v311, 2147483648
    %v313 = vmul.f32 %v312, 1.442695
    %v314 = vpow.pop %v313
    %v315 = vadd.f32 %v314, 1.0
    %v316 = vrcp.pop %v315
    %v317 = vmul.f32 %v315, %v316
    %v318 = vsub.f32 1.0, %v317
    %v319 = vmul.f32 %v316, %v318
    %v320 = vadd.f32 %v316, %v319
    %vm321 = vweird.f32 %v315
    %vm322 = vweird.f32 %v316
    %vm323 = vmor %vm321, %vm322
    %v324 = vsel %vm323, %v316, %v320
    %v325 = vand.u32 2147483647, %v315
    %vm326 = vcmp.eq.f32.partialorder %v325, 8.507059e+37
    %v327 = vand.u32 %v315, 2147483648
    %v328 = vor.u32 1.1754944e-38, %v327
    %v329 = vsel %vm326, %v328, %v324
    %v330 = vmul.f32 1.0, %v329
    %v331 = vsub.f32 %v272, %v282
    %v332 = vmul.f32 %v331, %v308
    %v333 = vadd.f32 %v282, %v332
    %s334 = scalar_lea.vmem %s4, 8
    %v335 = vld [vmem:[%s334] sm:$0x3]
    %v336 = vmul.f32 %v335, 1.7320508
    %v337 = vsub.f32 %v333, %v336
    %v338 = vmul.f32 %v337, %v330
    %v339 = vadd.f32 %v338, %v336
    %s340 = scalar_lea.vmem [#allocation2], 8
    %341 = vst.msk [vmem:[%s340] sm:$0x3] %vm96, %v339
    %s342 = scalar_lea.vmem %s0, 10
    %v343 = vld [vmem:[%s342] sm:$0x3]
    %s344 = scalar_lea.vmem %s0, 26
    %v345 = vld [vmem:[%s344] sm:$0x3]
    %s346 = scalar_lea.vmem %s0, 42
    %v347 = vld [vmem:[%s346] sm:$0x3]
    %v348 = vmul.f32 %v333, %v40
    %v349 = vadd.f32 %v345, %v348
    %v350 = vadd.f32 %v349, %v43
    %v351 = vxor.u32 %v350, 2147483648
    %v352 = vmul.f32 %v351, 1.442695
    %v353 = vpow.pop %v352
    %v354 = vadd.f32 %v353, 1.0
    %v355 = vrcp.pop %v354
    %v356 = vmul.f32 %v354, %v355
    %v357 = vsub.f32 1.0, %v356
    %v358 = vmul.f32 %v355, %v357
    %v359 = vadd.f32 %v355, %v358
    %vm360 = vweird.f32 %v354
    %vm361 = vweird.f32 %v355
    %vm362 = vmor %vm360, %vm361
    %v363 = vsel %vm362, %v355, %v359
    %v364 = vand.u32 2147483647, %v354
    %vm365 = vcmp.eq.f32.partialorder %v364, 8.507059e+37
    %v366 = vand.u32 %v354, 2147483648
    %v367 = vor.u32 1.1754944e-38, %v366
    %v368 = vsel %vm365, %v367, %v363
    %v369 = vmul.f32 1.0, %v368
    %v370 = vmul.f32 %v333, %v64
    %v371 = vadd.f32 %v347, %v370
    %v372 = vadd.f32 %v371, %v67
    %v373 = vxor.u32 %v372, 2147483648
    %v374 = vmul.f32 %v373, 1.442695
    %v375 = vpow.pop %v374
    %v376 = vadd.f32 %v375, 1.0
    %v377 = vrcp.pop %v376
    %v378 = vmul.f32 %v376, %v377
    %v379 = vsub.f32 1.0, %v378
    %v380 = vmul.f32 %v377, %v379
    %v381 = vadd.f32 %v377, %v380
    %vm382 = vweird.f32 %v376
    %vm383 = vweird.f32 %v377
    %vm384 = vmor %vm382, %vm383
    %v385 = vsel %vm384, %v377, %v381
    %v386 = vand.u32 2147483647, %v376
    %vm387 = vcmp.eq.f32.partialorder %v386, 8.507059e+37
    %v388 = vand.u32 %v376, 2147483648
    %v389 = vor.u32 1.1754944e-38, %v388
    %v390 = vsel %vm387, %v389, %v385
    %v391 = vmul.f32 1.0, %v390
    %v392 = vsub.f32 %v333, %v343
    %v393 = vmul.f32 %v392, %v369
    %v394 = vadd.f32 %v343, %v393
    %s395 = scalar_lea.vmem %s4, 10
    %v396 = vld [vmem:[%s395] sm:$0x3]
    %v397 = vmul.f32 %v396, 1.7320508
    %v398 = vsub.f32 %v394, %v397
    %v399 = vmul.f32 %v398, %v391
    %v400 = vadd.f32 %v399, %v397
    %s401 = scalar_lea.vmem [#allocation2], 10
    %402 = vst.msk [vmem:[%s401] sm:$0x3] %vm96, %v400
    %s403 = scalar_lea.vmem %s0, 12
    %v404 = vld [vmem:[%s403] sm:$0x3]
    %s405 = scalar_lea.vmem %s0, 28
    %v406 = vld [vmem:[%s405] sm:$0x3]
    %s407 = scalar_lea.vmem %s0, 44
    %v408 = vld [vmem:[%s407] sm:$0x3]
    %v409 = vmul.f32 %v394, %v40
    %v410 = vadd.f32 %v406, %v409
    %v411 = vadd.f32 %v410, %v43
    %v412 = vxor.u32 %v411, 2147483648
    %v413 = vmul.f32 %v412, 1.442695
    %v414 = vpow.pop %v413
    %v415 = vadd.f32 %v414, 1.0
    %v416 = vrcp.pop %v415
    %v417 = vmul.f32 %v415, %v416
    %v418 = vsub.f32 1.0, %v417
    %v419 = vmul.f32 %v416, %v418
    %v420 = vadd.f32 %v416, %v419
    %vm421 = vweird.f32 %v415
    %vm422 = vweird.f32 %v416
    %vm423 = vmor %vm421, %vm422
    %v424 = vsel %vm423, %v416, %v420
    %v425 = vand.u32 2147483647, %v415
    %vm426 = vcmp.eq.f32.partialorder %v425, 8.507059e+37
    %v427 = vand.u32 %v415, 2147483648
    %v428 = vor.u32 1.1754944e-38, %v427
    %v429 = vsel %vm426, %v428, %v424
    %v430 = vmul.f32 1.0, %v429
    %v431 = vmul.f32 %v394, %v64
    %v432 = vadd.f32 %v408, %v431
    %v433 = vadd.f32 %v432, %v67
    %v434 = vxor.u32 %v433, 2147483648
    %v435 = vmul.f32 %v434, 1.442695
    %v436 = vpow.pop %v435
    %v437 = vadd.f32 %v436, 1.0
    %v438 = vrcp.pop %v437
    %v439 = vmul.f32 %v437, %v438
    %v440 = vsub.f32 1.0, %v439
    %v441 = vmul.f32 %v438, %v440
    %v442 = vadd.f32 %v438, %v441
    %vm443 = vweird.f32 %v437
    %vm444 = vweird.f32 %v438
    %vm445 = vmor %vm443, %vm444
    %v446 = vsel %vm445, %v438, %v442
    %v447 = vand.u32 2147483647, %v437
    %vm448 = vcmp.eq.f32.partialorder %v447, 8.507059e+37
    %v449 = vand.u32 %v437, 2147483648
    %v450 = vor.u32 1.1754944e-38, %v449
    %v451 = vsel %vm448, %v450, %v446
    %v452 = vmul.f32 1.0, %v451
    %v453 = vsub.f32 %v394, %v404
    %v454 = vmul.f32 %v453, %v430
    %v455 = vadd.f32 %v404, %v454
    %s456 = scalar_lea.vmem %s4, 12
    %v457 = vld [vmem:[%s456] sm:$0x3]
    %v458 = vmul.f32 %v457, 1.7320508
    %v459 = vsub.f32 %v455, %v458
    %v460 = vmul.f32 %v459, %v452
    %v461 = vadd.f32 %v460, %v458
    %s462 = scalar_lea.vmem [#allocation2], 12
    %463 = vst.msk [vmem:[%s462] sm:$0x3] %vm96, %v461
    %s464 = scalar_lea.vmem %s0, 14
    %v465 = vld [vmem:[%s464] sm:$0x3]
    %s466 = scalar_lea.vmem %s0, 30
    %v467 = vld [vmem:[%s466] sm:$0x3]
    %s468 = scalar_lea.vmem %s0, 46
    %v469 = vld [vmem:[%s468] sm:$0x3]
    %v470 = vmul.f32 %v455, %v40
    %v471 = vadd.f32 %v467, %v470
    %v472 = vadd.f32 %v471, %v43
    %v473 = vxor.u32 %v472, 2147483648
    %v474 = vmul.f32 %v473, 1.442695
    %v475 = vpow.pop %v474
    %v476 = vadd.f32 %v475, 1.0
    %v477 = vrcp.pop %v476
    %v478 = vmul.f32 %v476, %v477
    %v479 = vsub.f32 1.0, %v478
    %v480 = vmul.f32 %v477, %v479
    %v481 = vadd.f32 %v477, %v480
    %vm482 = vweird.f32 %v476
    %vm483 = vweird.f32 %v477
    %vm484 = vmor %vm482, %vm483
    %v485 = vsel %vm484, %v477, %v481
    %v486 = vand.u32 2147483647, %v476
    %vm487 = vcmp.eq.f32.partialorder %v486, 8.507059e+37
    %v488 = vand.u32 %v476, 2147483648
    %v489 = vor.u32 1.1754944e-38, %v488
    %v490 = vsel %vm487, %v489, %v485
    %v491 = vmul.f32 1.0, %v490
    %v492 = vmul.f32 %v455, %v64
    %v493 = vadd.f32 %v469, %v492
    %v494 = vadd.f32 %v493, %v67
    %v495 = vxor.u32 %v494, 2147483648
    %v496 = vmul.f32 %v495, 1.442695
    %v497 = vpow.pop %v496
    %v498 = vadd.f32 %v497, 1.0
    %v499 = vrcp.pop %v498
    %v500 = vmul.f32 %v498, %v499
    %v501 = vsub.f32 1.0, %v500
    %v502 = vmul.f32 %v499, %v501
    %v503 = vadd.f32 %v499, %v502
    %vm504 = vweird.f32 %v498
    %vm505 = vweird.f32 %v499
    %vm506 = vmor %vm504, %vm505
    %v507 = vsel %vm506, %v499, %v503
    %v508 = vand.u32 2147483647, %v498
    %vm509 = vcmp.eq.f32.partialorder %v508, 8.507059e+37
    %v510 = vand.u32 %v498, 2147483648
    %v511 = vor.u32 1.1754944e-38, %v510
    %v512 = vsel %vm509, %v511, %v507
    %v513 = vmul.f32 1.0, %v512
    %v514 = vsub.f32 %v455, %v465
    %v515 = vmul.f32 %v514, %v491
    %v516 = vadd.f32 %v465, %v515
    %s517 = scalar_lea.vmem %s4, 14
    %v518 = vld [vmem:[%s517] sm:$0x3]
    %v519 = vmul.f32 %v518, 1.7320508
    %v520 = vsub.f32 %v516, %v519
    %v521 = vmul.f32 %v520, %v513
    %v522 = vadd.f32 %v521, %v519
    %s523 = scalar_lea.vmem [#allocation2], 14
    %524 = vst.msk [vmem:[%s523] sm:$0x3] %vm96, %v522
    %525 = vst.msk [vmem:[%s6] sm:$0x3] %vm96, %v516
    // Predicated region
    $region26: #{_lambda_.7} parent=1 // pred_check
      _
    $region27: #{_lambda_.7} parent=1 // pred_check_branch
      %527 = sbr.rel (0) target = $region29
    $region28: #{_lambda_.7} parent=1 // pred_region
      %529 = vsyncadd [#allocation3], 0
      %s530 = sshll.u32 [#allocation2], 4
      %s531 = int_to_ptr.vmem [resolvable:$true] %s530
      %s532 = sshll.u32 %s5, 4
      %s533 = int_to_ptr.hbm [resolvable:$true] %s532
      %538 = dma.vmem_to_hbm [thread:$0]  %s531, 256, %s533, [#allocation3], 32, 32, 2
    $region29: #{_lambda_.7} parent=1 // pred_fallthru
      _
    // Predicated region
    $region30: #{_lambda_.7} parent=1 // pred_check
      _
    $region31: #{_lambda_.7} parent=1 // pred_check_branch
      %540 = sbr.rel (0) target = $region33
    $region32: #{_lambda_.7} parent=1 // pred_region
      _
    $region33: #{_lambda_.7} parent=1 // pred_fallthru
      _
    // Predicated region
    $region34: #{_lambda_.7} parent=1 // pred_check
      _
    $region35: #{_lambda_.7} parent=1 // pred_check_branch
      %542 = sbr.rel (0) target = $region37
    $region36: #{_lambda_.7} parent=1 // pred_region
      %544 = dma.done [#allocation3], 256
    $region37: #{_lambda_.7} parent=1 // pred_fallthru
      _
    // Predicated region
    $region38: #{_lambda_.7} parent=1 // pred_check
      _
    $region39: #{_lambda_.7} parent=1 // pred_check_branch
      %546 = sbr.rel (0) target = $region41
    $region40: #{_lambda_.7} parent=1 // pred_region
      _
    $region41: #{_lambda_.7} parent=1 // pred_fallthru
      _
    %547 = vsyncpa [#allocation3], 1

</llo_original>
